<compile_context>
chip_gen: v7x
topology: tpu7x:2x2x1
jax: 0.10.0
libtpu: 0.0.40
codegen_flags: <defaults>
</compile_context>

<pallas_src>
import functools

import jax
import jax.numpy as jnp
import numpy as np
from jax.experimental import pallas as pl
from jax.experimental.pallas import tpu as pltpu


def _round_up(v, m):
    return ((v + m - 1) // m) * m


def _vmem_capacity():
    try:
        cap = int(pltpu.get_tpu_info().vmem_capacity_bytes)
        if cap > 0:
            return cap
    except Exception:
        pass
    return 64 << 20  # conservative (v7x per-TensorCore VMEM)


@functools.lru_cache(maxsize=None)
def _dft_bases(N, modes, n_pad, stack_w):
    """Truncated real-DFT bases, zero-padded to lane-friendly shapes.

    fwd      (n_pad, stack_w)     cols  = [Re(M) | Im(M) | 0]
    fwd_wide (n_pad, 2*stack_w)   cols  = [Re Im 0 | Im Re 0]   (main + swapped halves)
    inv      (stack_w, n_pad)     rows  = [ar(M)  | ai(M) | 0]
    ar, ai   (modes, n_pad)       irDFT row bases (for folding weights into the MXU).
    """
    n = np.arange(N, dtype=np.float64)[:, None]
    k = np.arange(modes, dtype=np.float64)[None, :]
    ang = 2.0 * np.pi * n * k / N                      # (N, M)
    cosb = np.cos(ang)
    sinb = -np.sin(ang)                                # rfft imag part = -sum x sin

    fwd = np.zeros((n_pad, stack_w), np.float64)
    fwd[:N, :modes] = cosb
    fwd[:N, modes:2 * modes] = sinb

    fwd_wide = np.zeros((n_pad, 2 * stack_w), np.float64)
    fwd_wide[:, :stack_w] = fwd
    fwd_wide[:N, stack_w:stack_w + modes] = sinb       # swapped half -> [xi | xr]
    fwd_wide[:N, stack_w + modes:stack_w + 2 * modes] = cosb

    kk = np.arange(modes)
    coef = np.where((kk == 0) | ((N % 2 == 0) & (kk == N // 2)), 1.0, 2.0)
    ar_full = np.zeros((modes, n_pad), np.float64)
    ai_full = np.zeros((modes, n_pad), np.float64)
    ar_full[:, :N] = (coef[:, None] / N) * np.cos(ang.T)
    ai_full[:, :N] = -(coef[:, None] / N) * np.sin(ang.T)

    inv = np.zeros((stack_w, n_pad), np.float64)
    inv[:modes] = ar_full
    inv[modes:2 * modes] = ai_full
    return (fwd.astype(np.float32), fwd_wide.astype(np.float32), inv.astype(np.float32),
            ar_full.astype(np.float32), ai_full.astype(np.float32))


def _pick_batch_tile(B, c_in, c_out, n_pad, io_bytes, block_budget, max_batch_tile=None):
    """Largest legal batch tile that fits the budget, keeps >=2 (even, ideally >=8) grid
    steps for pipelining / 2-TC sharding and prefers MXU-row-aligned tiles."""
    cands = [t for t in range(1, B + 1)
             if B % t == 0
             and ((t * c_in) % 8 == 0 or t == B)
             and ((t * c_out) % 8 == 0 or t == B)]
    if max_batch_tile is not None:
        capped = [t for t in cands if t <= max_batch_tile]
        cands = capped or cands

    per_b = 2 * (c_in + c_out) * n_pad * io_bytes      # double-buffered x + out blocks
    fitting = [t for t in cands if t * per_b <= block_budget]
    pool = fitting if fitting else [min(cands)]        # degrade gracefully, never overflow

    def key(t):
        g = B // t
        depth = 2 if g >= 8 else (1 if g >= 2 else 0)  # keep the DMA pipeline fed
        even = 1 if (g % 2 == 0 or g >= 8) else 0      # v7x: shardable across 2 TensorCores
        mxu = 1 if ((t * c_in) % 128 == 0 and (t * c_out) % 128 == 0) else 0
        return (depth, even, mxu, t)

    return max(pool, key=key)


def _const_spec(shape, single_buffer):
    """Resident (constant index-map) operand; single-buffered when supported."""
    zeros = (0,) * len(shape)
    index_map = lambda g, _z=zeros: _z
    if single_buffer:
        try:
            return pl.BlockSpec(shape, index_map, pipeline_mode=pl.Buffered(1))
        except TypeError:
            pass
    return pl.BlockSpec(shape, index_map)


def _make_folded_kernel(tb, c_in, c_out, stack_w, n_pad):
    """Mode mix + irDFT folded into per-input-channel MXU weights (all-MXU path)."""

    def kernel(x_ref, fwd_ref, g_ref, o_ref, acc_ref):
        # forward truncated rDFT for the whole (tb*Cin) row block: ONE MXU matmul
        s = jnp.dot(x_ref[...], fwd_ref[...],
                    preferred_element_type=jnp.float32)          # (tb*Cin, SW) = [xr | xi | 0]
        s3 = s.reshape(tb, c_in, stack_w).astype(g_ref.dtype)
        # fold: out = sum_i  s_i @ G_i   (f32 accumulation in VMEM scratch)
        acc_ref[...] = jnp.dot(s3[:, 0, :], g_ref[0],
                               preferred_element_type=jnp.float32)
        for i in range(1, c_in):
            acc_ref[...] += jnp.dot(s3[:, i, :], g_ref[i],
                                    preferred_element_type=jnp.float32)
        o_ref[0] = acc_ref[...].astype(o_ref.dtype)              # lane-dense (tb, Cout*Np)

    return kernel


def _make_loop_kernel(tb, c_in, c_out, stack_w, n_pad):
    """Scalable fallback: widened forward basis emits [xr|xi] and [xi|xr] in one matmul,
    f32 per-output-channel VPU mix into a VMEM scratch, then one irDFT MXU matmul."""

    def kernel(x_ref, fwdw_ref, inv_ref, wa_ref, wb_ref, o_ref, y_ref):
        sw = jnp.dot(x_ref[...], fwdw_ref[...],
                     preferred_element_type=jnp.float32)         # (tb*Cin, 2*SW)
        xc = sw[:, :stack_w].reshape(tb, c_in, stack_w)          # [xr | xi | 0]
        xs = sw[:, stack_w:].reshape(tb, c_in, stack_w)          # [xi | xr | 0]
        for o in range(c_out):
            wa_o = wa_ref[o * c_in:(o + 1) * c_in, :]            # (Cin, SW) f32 [ wr | wr | 0]
            wb_o = wb_ref[o * c_in:(o + 1) * c_in, :]            # (Cin, SW) f32 [-wi | wi | 0]
            y_ref[:, o, :] = jnp.sum(xc * wa_o[None] + xs * wb_o[None], axis=1)
        y = y_ref[...].reshape(tb * c_out, stack_w).astype(inv_ref.dtype)
        o_ref[...] = jnp.dot(y, inv_ref[...],
                             preferred_element_type=jnp.float32).astype(o_ref.dtype)

    return kernel


def fourier_layer(x, w_real, w_imag, *, io_dtype=jnp.bfloat16, mix_on_mxu=None,
                  max_batch_tile=None):
    """Pallas TPU FourierLayer.forward.

    x:               (B, Cin, N)    float
    w_real, w_imag:  (Cin, Cout, M) float (real / imag parts of complex weights1)
    returns          (B, Cout, N), dtype of x ==
        irfft( pad_half_spectrum( einsum('bix,iox->box', rfft(x)[..., :M], W) ), n=N )

    io_dtype:   dtype streamed through HBM (default bfloat16; accumulation stays f32).
    mix_on_mxu: force (True) / forbid (False) the folded all-MXU mix; default = auto by size.
    """
    B, c_in, N = x.shape
    _, c_out, modes = w_real.shape
    assert modes <= N // 2 + 1
    orig_dtype = x.dtype
    io_dtype = np.dtype(io_dtype)
    io_bytes = io_dtype.itemsize

    n_pad = _round_up(N, 128)                     # lane-dense spatial axis
    stack_w = _round_up(2 * modes, 128)           # lane-dense stacked [Re | Im] axis

    cap = _vmem_capacity()
    block_budget = max(4 << 20, min(48 << 20, int(cap * 0.35)))
    tb = _pick_batch_tile(B, c_in, c_out, n_pad, io_bytes, block_budget, max_batch_tile)
    grid = B // tb

    fwd_np, fwd_wide_np, inv_np, ar_np, ai_np = _dft_bases(N, modes, n_pad, stack_w)

    # pick the mix strategy: all-MXU folded weights when they fit comfortably in VMEM
    g_bytes = c_in * stack_w * c_out * n_pad * io_bytes
    g_budget = max(4 << 20, min(16 << 20, cap // 6))
    use_fold = bool(mix_on_mxu) if mix_on_mxu is not None else (g_bytes <= g_budget)

    # stream x in io_dtype; zero rows in the bases make the spatial padding exact
    x2 = x.astype(io_dtype).reshape(B * c_in, N)
    if n_pad != N:
        x2 = jnp.pad(x2, ((0, 0), (0, n_pad - N)))

    wr = w_real.astype(jnp.float32)
    wi = w_imag.astype(jnp.float32)

    block_bytes = 2 * tb * (c_in + c_out) * n_pad * io_bytes
    x_spec = pl.BlockSpec((tb * c_in, n_pad), lambda g: (g, 0))
    dim_sem = pltpu.CompilerParams  # alias only for line length below

    if use_fold:
        # Fold complex mode mix + irDFT into per-input-channel MXU matrices G_i.
        ar = jnp.asarray(ar_np)
        ai = jnp.asarray(ai_np)
        g_re = jnp.einsum('iom,mn->imon', wr, ar) + jnp.einsum('iom,mn->imon', wi, ai)
        g_im = jnp.einsum('iom,mn->imon', wr, ai) - jnp.einsum('iom,mn->imon', wi, ar)
        g_full = jnp.zeros((c_in, stack_w, c_out, n_pad), jnp.float32)
        g_full = g_full.at[:, :modes].set(g_re).at[:, modes:2 * modes].set(g_im)
        g_full = g_full.reshape(c_in, stack_w, c_out * n_pad).astype(io_dtype)
        fwd = jnp.asarray(fwd_np).astype(io_dtype)

        const_bytes = (fwd.size + g_full.size) * io_bytes
        scratch_bytes = tb * c_out * n_pad * 4
        vmem_limit = int(min(cap * 0.82,
                             max(32 << 20,
                                 block_bytes + 2 * const_bytes + scratch_bytes + (8 << 20))))
        flops = 2 * B * c_in * n_pad * stack_w + 2 * B * c_in * stack_w * c_out * n_pad
        bytes_acc = x2.size * io_bytes + B * c_out * n_pad * io_bytes + const_bytes
        kernel = _make_folded_kernel(tb, c_in, c_out, stack_w, n_pad)

        def _run(single_buffer):
            return pl.pallas_call(
                kernel,
                out_shape=jax.ShapeDtypeStruct((grid, tb, c_out * n_pad), io_dtype),
                grid_spec=pltpu.PrefetchScalarGridSpec(
                    num_scalar_prefetch=0,
                    grid=(grid,),
                    in_specs=[
                        x_spec,
                        _const_spec((n_pad, stack_w), single_buffer),
                        _const_spec((c_in, stack_w, c_out * n_pad), single_buffer),
                    ],
                    out_specs=pl.BlockSpec((1, tb, c_out * n_pad), lambda g: (g, 0, 0)),
                    scratch_shapes=[pltpu.VMEM((tb, c_out * n_pad), jnp.float32)],
                ),
                compiler_params=pltpu.CompilerParams(
                    dimension_semantics=("parallel",),
                    vmem_limit_bytes=vmem_limit),
                cost_estimate=pl.CostEstimate(flops=int(flops), transcendentals=0,
                                              bytes_accessed=int(bytes_acc)),
            )(x2, fwd, g_full)

        try:
            out_raw = _run(True)
        except Exception:            # safe fallback if single-buffered constants are rejected
            out_raw = _run(False)
        out = out_raw.reshape(B, c_out, n_pad)

    else:
        # Scalable path: widened forward basis + bounded f32 VPU mix in a VMEM scratch.
        fwd_wide = jnp.asarray(fwd_wide_np).astype(io_dtype)
        inv = jnp.asarray(inv_np).astype(io_dtype)
        wr_t = jnp.transpose(wr, (1, 0, 2))      # (Cout, Cin, M)
        wi_t = jnp.transpose(wi, (1, 0, 2))
        wa = jnp.zeros((c_out, c_in, stack_w), jnp.float32)
        wa = wa.at[..., :modes].set(wr_t).at[..., modes:2 * modes].set(wr_t)
        wb = jnp.zeros((c_out, c_in, stack_w), jnp.float32)
        wb = wb.at[..., :modes].set(-wi_t).at[..., modes:2 * modes].set(wi_t)
        wa2 = wa.reshape(c_out * c_in, stack_w)  # flat 2-D: no per-Cout sublane padding
        wb2 = wb.reshape(c_out * c_in, stack_w)

        const_bytes = (fwd_wide.size + inv.size) * io_bytes + (wa2.size + wb2.size) * 4
        scratch_bytes = tb * c_out * stack_w * 4
        vmem_limit = int(min(cap * 0.82,
                             max(32 << 20,
                                 block_bytes + 2 * const_bytes + scratch_bytes + (8 << 20))))
        flops = (2 * B * c_in * n_pad * 2 * stack_w
                 + 3 * B * c_in * c_out * stack_w
                 + 2 * B * c_out * stack_w * n_pad)
        bytes_acc = x2.size * io_bytes + B * c_out * n_pad * io_bytes + const_bytes
        kernel = _make_loop_kernel(tb, c_in, c_out, stack_w, n_pad)

        def _run(single_buffer):
            return pl.pallas_call(
                kernel,
                out_shape=jax.ShapeDtypeStruct((B * c_out, n_pad), io_dtype),
                grid_spec=pltpu.PrefetchScalarGridSpec(
                    num_scalar_prefetch=0,
                    grid=(grid,),
                    in_specs=[
                        x_spec,
                        _const_spec((n_pad, 2 * stack_w), single_buffer),
                        _const_spec((stack_w, n_pad), single_buffer),
                        _const_spec((c_out * c_in, stack_w), single_buffer),
                        _const_spec((c_out * c_in, stack_w), single_buffer),
                    ],
                    out_specs=pl.BlockSpec((tb * c_out, n_pad), lambda g: (g, 0)),
                    scratch_shapes=[pltpu.VMEM((tb, c_out, stack_w), jnp.float32)],
                ),
                compiler_params=pltpu.CompilerParams(
                    dimension_semantics=("parallel",),
                    vmem_limit_bytes=vmem_limit),
                cost_estimate=pl.CostEstimate(flops=int(flops), transcendentals=0,
                                              bytes_accessed=int(bytes_acc)),
            )(x2, fwd_wide, inv, wa2, wb2)

        try:
            out_raw = _run(True)
        except Exception:
            out_raw = _run(False)
        out = out_raw.reshape(B, c_out, n_pad)

    if n_pad != N:
        out = out[..., :N]
    return out.astype(orig_dtype)


def _reference(x, w_real, w_imag):
    """Pure-JAX reference mirroring the PyTorch forward (rfft -> mode mixing -> irfft)."""
    B, c_in, N = x.shape
    _, c_out, modes = w_real.shape
    w = w_real.astype(jnp.complex64) + 1j * w_imag.astype(jnp.complex64)
    x_ft = jnp.fft.rfft(x, axis=-1)
    out_ft = jnp.zeros((B, c_out, N // 2 + 1), dtype=jnp.complex64)
    out_ft = out_ft.at[:, :, :modes].set(
        jnp.einsum("bix,iox->box", x_ft[:, :, :modes], w))
    return jnp.fft.irfft(out_ft, n=N, axis=-1)


if __name__ == "__main__":
    B, Cin, Cout, N, M = 4, 4, 4, 16, 6   # batch, in_channels, out_channels, spatial, modes1

    key = jax.random.PRNGKey(0)
    kx, kr, ki = jax.random.split(key, 3)
    x = jax.random.normal(kx, (B, Cin, N), dtype=jnp.float32)

    # Deterministic kaiming_normal-like init of the complex weights1 (fan_in = Cout*M).
    std = float(np.sqrt(2.0 / (Cout * M)))
    w_real = (std / np.sqrt(2.0)) * jax.random.normal(kr, (Cin, Cout, M), dtype=jnp.float32)
    w_imag = (std / np.sqrt(2.0)) * jax.random.normal(ki, (Cin, Cout, M), dtype=jnp.float32)

    ref = np.asarray(_reference(x, w_real, w_imag))

    # 1) f32 I/O, folded all-MXU mix path (tight tolerance)
    out_fold = jax.block_until_ready(
        fourier_layer(x, w_real, w_imag, io_dtype=jnp.float32, mix_on_mxu=True))
    assert out_fold.shape == (B, Cout, N) and out_fold.dtype == jnp.float32
    np.testing.assert_allclose(np.asarray(out_fold), ref, rtol=1e-3, atol=1e-4)

    # 2) f32 I/O, scalable per-output-channel fallback path (tight tolerance)
    out_loop = jax.block_until_ready(
        fourier_layer(x, w_real, w_imag, io_dtype=jnp.float32, mix_on_mxu=False))
    np.testing.assert_allclose(np.asarray(out_loop), ref, rtol=1e-3, atol=1e-4)

    # 3) default bf16-streamed path (halves HBM traffic); relative-L2 check
    out_bf16 = jax.block_until_ready(fourier_layer(x, w_real, w_imag))
    rel_err = np.linalg.norm(np.asarray(out_bf16) - ref) / np.linalg.norm(ref)
    assert rel_err < 2e-2, rel_err

    print("KERNEL_OK")
</pallas_src>

<mosaic_0001>
module attributes {stable_mosaic.version = 11 : i64} {
  func.func @kernel(%arg0: i32, %arg1: memref<8x128xf32, #tpu.memory_space<vmem>>, %arg2: memref<128x128xf32, #tpu.memory_space<vmem>>, %arg3: memref<4x128x512xf32, #tpu.memory_space<vmem>>, %arg4: memref<1x2x512xf32, #tpu.memory_space<vmem>>, %arg5: memref<2x512xf32, #tpu.memory_space<vmem>>) attributes {dimension_semantics = [#tpu.dimension_semantics<parallel>], iteration_bounds = array<i64: 2>, scalar_prefetch = 0 : i64, scratch_operands = 1 : i64, tpu.core_type = #tpu.core_type<tc>, window_params = [{transform_indices = @transform_0, window_bounds = array<i64: 8, 128>}, {pipeline_mode = #tpu.pipeline_mode<synchronous>, transform_indices = @transform_1, window_bounds = array<i64: 128, 128>}, {pipeline_mode = #tpu.pipeline_mode<synchronous>, transform_indices = @transform_2, window_bounds = array<i64: 4, 128, 512>}, {transform_indices = @transform_3, window_bounds = array<i64: 1, 2, 512>}]} {
    %c0 = arith.constant 0 : index
    %c0_0 = arith.constant 0 : index
    %0 = vector.load %arg1[%c0, %c0_0] : memref<8x128xf32, #tpu.memory_space<vmem>>, vector<8x128xf32>
    %c0_1 = arith.constant 0 : index
    %c0_2 = arith.constant 0 : index
    %1 = vector.load %arg2[%c0_1, %c0_2] : memref<128x128xf32, #tpu.memory_space<vmem>>, vector<128x128xf32>
    %cst = arith.constant dense<0.000000e+00> : vector<8x128xf32>
    %2 = tpu.matmul %0, %1, %cst {dimension_numbers = #tpu.dot_dimension_numbers<[1], [0], [0], [1], [0, 0, 1, 1], [], []>} : vector<8x128xf32>, vector<128x128xf32>, vector<8x128xf32> -> vector<8x128xf32>
    %3 = vector.shape_cast %2 : vector<8x128xf32> to vector<2x4x128xf32>
    %4 = vector.extract_strided_slice %3 {offsets = [0, 0, 0], sizes = [2, 1, 128], strides = [1, 1, 1]} : vector<2x4x128xf32> to vector<2x1x128xf32>
    %5 = vector.shape_cast %4 : vector<2x1x128xf32> to vector<2x128xf32>
    %c0_3 = arith.constant 0 : index
    %c0_4 = arith.constant 0 : index
    %c0_5 = arith.constant 0 : index
    %6 = vector.load %arg3[%c0_3, %c0_4, %c0_5] : memref<4x128x512xf32, #tpu.memory_space<vmem>>, vector<1x128x512xf32>
    %7 = vector.shape_cast %6 : vector<1x128x512xf32> to vector<128x512xf32>
    %cst_6 = arith.constant dense<0.000000e+00> : vector<2x512xf32>
    %8 = tpu.matmul %5, %7, %cst_6 {dimension_numbers = #tpu.dot_dimension_numbers<[1], [0], [0], [1], [0, 0, 1, 1], [], []>} : vector<2x128xf32>, vector<128x512xf32>, vector<2x512xf32> -> vector<2x512xf32>
    %c0_7 = arith.constant 0 : index
    %c0_8 = arith.constant 0 : index
    %9 = vector.load %arg5[%c0_7, %c0_8] : memref<2x512xf32, #tpu.memory_space<vmem>>, vector<2x512xf32>
    tpu.vector_store %arg5[%c0_7, %c0_8], %8 {strides = array<i32>} : memref<2x512xf32, #tpu.memory_space<vmem>>, vector<2x512xf32>,
    %c0_9 = arith.constant 0 : index
    %c0_10 = arith.constant 0 : index
    %10 = vector.load %arg5[%c0_9, %c0_10] : memref<2x512xf32, #tpu.memory_space<vmem>>, vector<2x512xf32>
    %11 = vector.extract_strided_slice %3 {offsets = [0, 1, 0], sizes = [2, 1, 128], strides = [1, 1, 1]} : vector<2x4x128xf32> to vector<2x1x128xf32>
    %12 = vector.shape_cast %11 : vector<2x1x128xf32> to vector<2x128xf32>
    %c1 = arith.constant 1 : index
    %c0_11 = arith.constant 0 : index
    %c0_12 = arith.constant 0 : index
    %13 = vector.load %arg3[%c1, %c0_11, %c0_12] : memref<4x128x512xf32, #tpu.memory_space<vmem>>, vector<1x128x512xf32>
    %14 = vector.shape_cast %13 : vector<1x128x512xf32> to vector<128x512xf32>
    %cst_13 = arith.constant dense<0.000000e+00> : vector<2x512xf32>
    %15 = tpu.matmul %12, %14, %cst_13 {dimension_numbers = #tpu.dot_dimension_numbers<[1], [0], [0], [1], [0, 0, 1, 1], [], []>} : vector<2x128xf32>, vector<128x512xf32>, vector<2x512xf32> -> vector<2x512xf32>
    %16 = arith.addf %10, %15 : vector<2x512xf32>
    %c0_14 = arith.constant 0 : index
    %c0_15 = arith.constant 0 : index
    %17 = vector.load %arg5[%c0_14, %c0_15] : memref<2x512xf32, #tpu.memory_space<vmem>>, vector<2x512xf32>
    tpu.vector_store %arg5[%c0_14, %c0_15], %16 {strides = array<i32>} : memref<2x512xf32, #tpu.memory_space<vmem>>, vector<2x512xf32>,
    %c0_16 = arith.constant 0 : index
    %c0_17 = arith.constant 0 : index
    %18 = vector.load %arg5[%c0_16, %c0_17] : memref<2x512xf32, #tpu.memory_space<vmem>>, vector<2x512xf32>
    %19 = vector.extract_strided_slice %3 {offsets = [0, 2, 0], sizes = [2, 1, 128], strides = [1, 1, 1]} : vector<2x4x128xf32> to vector<2x1x128xf32>
    %20 = vector.shape_cast %19 : vector<2x1x128xf32> to vector<2x128xf32>
    %c2 = arith.constant 2 : index
    %c0_18 = arith.constant 0 : index
    %c0_19 = arith.constant 0 : index
    %21 = vector.load %arg3[%c2, %c0_18, %c0_19] : memref<4x128x512xf32, #tpu.memory_space<vmem>>, vector<1x128x512xf32>
    %22 = vector.shape_cast %21 : vector<1x128x512xf32> to vector<128x512xf32>
    %cst_20 = arith.constant dense<0.000000e+00> : vector<2x512xf32>
    %23 = tpu.matmul %20, %22, %cst_20 {dimension_numbers = #tpu.dot_dimension_numbers<[1], [0], [0], [1], [0, 0, 1, 1], [], []>} : vector<2x128xf32>, vector<128x512xf32>, vector<2x512xf32> -> vector<2x512xf32>
    %24 = arith.addf %18, %23 : vector<2x512xf32>
    %c0_21 = arith.constant 0 : index
    %c0_22 = arith.constant 0 : index
    %25 = vector.load %arg5[%c0_21, %c0_22] : memref<2x512xf32, #tpu.memory_space<vmem>>, vector<2x512xf32>
    tpu.vector_store %arg5[%c0_21, %c0_22], %24 {strides = array<i32>} : memref<2x512xf32, #tpu.memory_space<vmem>>, vector<2x512xf32>,
    %c0_23 = arith.constant 0 : index
    %c0_24 = arith.constant 0 : index
    %26 = vector.load %arg5[%c0_23, %c0_24] : memref<2x512xf32, #tpu.memory_space<vmem>>, vector<2x512xf32>
    %27 = vector.extract_strided_slice %3 {offsets = [0, 3, 0], sizes = [2, 1, 128], strides = [1, 1, 1]} : vector<2x4x128xf32> to vector<2x1x128xf32>
    %28 = vector.shape_cast %27 : vector<2x1x128xf32> to vector<2x128xf32>
    %c3 = arith.constant 3 : index
    %c0_25 = arith.constant 0 : index
    %c0_26 = arith.constant 0 : index
    %29 = vector.load %arg3[%c3, %c0_25, %c0_26] : memref<4x128x512xf32, #tpu.memory_space<vmem>>, vector<1x128x512xf32>
    %30 = vector.shape_cast %29 : vector<1x128x512xf32> to vector<128x512xf32>
    %cst_27 = arith.constant dense<0.000000e+00> : vector<2x512xf32>
    %31 = tpu.matmul %28, %30, %cst_27 {dimension_numbers = #tpu.dot_dimension_numbers<[1], [0], [0], [1], [0, 0, 1, 1], [], []>} : vector<2x128xf32>, vector<128x512xf32>, vector<2x512xf32> -> vector<2x512xf32>
    %32 = arith.addf %26, %31 : vector<2x512xf32>
    %c0_28 = arith.constant 0 : index
    %c0_29 = arith.constant 0 : index
    %33 = vector.load %arg5[%c0_28, %c0_29] : memref<2x512xf32, #tpu.memory_space<vmem>>, vector<2x512xf32>
    tpu.vector_store %arg5[%c0_28, %c0_29], %32 {strides = array<i32>} : memref<2x512xf32, #tpu.memory_space<vmem>>, vector<2x512xf32>,
    %c0_30 = arith.constant 0 : index
    %c0_31 = arith.constant 0 : index
    %34 = vector.load %arg5[%c0_30, %c0_31] : memref<2x512xf32, #tpu.memory_space<vmem>>, vector<2x512xf32>
    %c0_32 = arith.constant 0 : index
    %c0_33 = arith.constant 0 : index
    %c0_34 = arith.constant 0 : index
    %35 = vector.load %arg4[%c0_32, %c0_33, %c0_34] : memref<1x2x512xf32, #tpu.memory_space<vmem>>, vector<1x2x512xf32>
    %36 = vector.shape_cast %35 : vector<1x2x512xf32> to vector<2x512xf32>
    %37 = vector.shape_cast %34 : vector<2x512xf32> to vector<1x2x512xf32>
    tpu.vector_store %arg4[%c0_32, %c0_33, %c0_34], %37 {strides = array<i32>} : memref<1x2x512xf32, #tpu.memory_space<vmem>>, vector<1x2x512xf32>,
    return
  }
  func.func @transform_0(%arg0: i32) -> (i32, i32) {
    %c0_i32 = arith.constant 0 : i32
    %c0_i32_0 = arith.constant 0 : i32
    return %arg0, %c0_i32 : i32, i32
  }
  func.func @transform_1(%arg0: i32) -> (i32, i32) {
    %c0_i32 = arith.constant 0 : i32
    %c0_i32_0 = arith.constant 0 : i32
    %c0_i32_1 = arith.constant 0 : i32
    return %c0_i32, %c0_i32_0 : i32, i32
  }
  func.func @transform_2(%arg0: i32) -> (i32, i32, i32) {
    %c0_i32 = arith.constant 0 : i32
    %c0_i32_0 = arith.constant 0 : i32
    %c0_i32_1 = arith.constant 0 : i32
    %c0_i32_2 = arith.constant 0 : i32
    return %c0_i32, %c0_i32_0, %c0_i32_1 : i32, i32, i32
  }
  func.func @transform_3(%arg0: i32) -> (i32, i32, i32) {
    %c0_i32 = arith.constant 0 : i32
    %c0_i32_0 = arith.constant 0 : i32
    %c0_i32_1 = arith.constant 0 : i32
    return %arg0, %c0_i32, %c0_i32_0 : i32, i32, i32
  }
}

module attributes {stable_mosaic.version = 11 : i64} {
  func.func @kernel(%arg0: i32, %arg1: memref<8x128xf32, #tpu.memory_space<vmem>>, %arg2: memref<128x128xf32, #tpu.memory_space<vmem>>, %arg3: memref<4x128x512xf32, #tpu.memory_space<vmem>>, %arg4: memref<1x2x512xf32, #tpu.memory_space<vmem>>, %arg5: memref<2x512xf32, #tpu.memory_space<vmem>>) attributes {dimension_semantics = [#tpu.dimension_semantics<parallel>], iteration_bounds = array<i64: 2>, scalar_prefetch = 0 : i64, scratch_operands = 1 : i64, tpu.core_type = #tpu.core_type<tc>, window_params = [{transform_indices = @transform_0, window_bounds = array<i64: 8, 128>}, {pipeline_mode = #tpu.pipeline_mode<synchronous>, transform_indices = @transform_1, window_bounds = array<i64: 128, 128>}, {pipeline_mode = #tpu.pipeline_mode<synchronous>, transform_indices = @transform_2, window_bounds = array<i64: 4, 128, 512>}, {transform_indices = @transform_3, window_bounds = array<i64: 1, 2, 512>}]} {
    %c0 = arith.constant 0 : index
    %c0_0 = arith.constant 0 : index
    %0 = vector.load %arg1[%c0, %c0_0] : memref<8x128xf32, #tpu.memory_space<vmem>>, vector<8x128xf32>
    %c0_1 = arith.constant 0 : index
    %c0_2 = arith.constant 0 : index
    %1 = vector.load %arg2[%c0_1, %c0_2] : memref<128x128xf32, #tpu.memory_space<vmem>>, vector<128x128xf32>
    %cst = arith.constant dense<0.000000e+00> : vector<8x128xf32>
    %2 = tpu.matmul %0, %1, %cst {dimension_numbers = #tpu.dot_dimension_numbers<[1], [0], [0], [1], [0, 0, 1, 1], [], []>} : vector<8x128xf32>, vector<128x128xf32>, vector<8x128xf32> -> vector<8x128xf32>
    %3 = vector.shape_cast %2 : vector<8x128xf32> to vector<2x4x128xf32>
    %4 = vector.extract_strided_slice %3 {offsets = [0, 0, 0], sizes = [2, 1, 128], strides = [1, 1, 1]} : vector<2x4x128xf32> to vector<2x1x128xf32>
    %5 = vector.shape_cast %4 : vector<2x1x128xf32> to vector<2x128xf32>
    %c0_3 = arith.constant 0 : index
    %c0_4 = arith.constant 0 : index
    %c0_5 = arith.constant 0 : index
    %6 = vector.load %arg3[%c0_3, %c0_4, %c0_5] : memref<4x128x512xf32, #tpu.memory_space<vmem>>, vector<1x128x512xf32>
    %7 = vector.shape_cast %6 : vector<1x128x512xf32> to vector<128x512xf32>
    %cst_6 = arith.constant dense<0.000000e+00> : vector<2x512xf32>
    %8 = tpu.matmul %5, %7, %cst_6 {dimension_numbers = #tpu.dot_dimension_numbers<[1], [0], [0], [1], [0, 0, 1, 1], [], []>} : vector<2x128xf32>, vector<128x512xf32>, vector<2x512xf32> -> vector<2x512xf32>
    %c0_7 = arith.constant 0 : index
    %c0_8 = arith.constant 0 : index
    %9 = vector.load %arg5[%c0_7, %c0_8] : memref<2x512xf32, #tpu.memory_space<vmem>>, vector<2x512xf32>
    tpu.vector_store %arg5[%c0_7, %c0_8], %8 {strides = array<i32>} : memref<2x512xf32, #tpu.memory_space<vmem>>, vector<2x512xf32>,
    %c0_9 = arith.constant 0 : index
    %c0_10 = arith.constant 0 : index
    %10 = vector.load %arg5[%c0_9, %c0_10] : memref<2x512xf32, #tpu.memory_space<vmem>>, vector<2x512xf32>
    %11 = vector.extract_strided_slice %3 {offsets = [0, 1, 0], sizes = [2, 1, 128], strides = [1, 1, 1]} : vector<2x4x128xf32> to vector<2x1x128xf32>
    %12 = vector.shape_cast %11 : vector<2x1x128xf32> to vector<2x128xf32>
    %c1 = arith.constant 1 : index
    %c0_11 = arith.constant 0 : index
    %c0_12 = arith.constant 0 : index
    %13 = vector.load %arg3[%c1, %c0_11, %c0_12] : memref<4x128x512xf32, #tpu.memory_space<vmem>>, vector<1x128x512xf32>
    %14 = vector.shape_cast %13 : vector<1x128x512xf32> to vector<128x512xf32>
    %cst_13 = arith.constant dense<0.000000e+00> : vector<2x512xf32>
    %15 = tpu.matmul %12, %14, %cst_13 {dimension_numbers = #tpu.dot_dimension_numbers<[1], [0], [0], [1], [0, 0, 1, 1], [], []>} : vector<2x128xf32>, vector<128x512xf32>, vector<2x512xf32> -> vector<2x512xf32>
    %16 = arith.addf %10, %15 : vector<2x512xf32>
    %c0_14 = arith.constant 0 : index
    %c0_15 = arith.constant 0 : index
    %17 = vector.load %arg5[%c0_14, %c0_15] : memref<2x512xf32, #tpu.memory_space<vmem>>, vector<2x512xf32>
    tpu.vector_store %arg5[%c0_14, %c0_15], %16 {strides = array<i32>} : memref<2x512xf32, #tpu.memory_space<vmem>>, vector<2x512xf32>,
    %c0_16 = arith.constant 0 : index
    %c0_17 = arith.constant 0 : index
    %18 = vector.load %arg5[%c0_16, %c0_17] : memref<2x512xf32, #tpu.memory_space<vmem>>, vector<2x512xf32>
    %19 = vector.extract_strided_slice %3 {offsets = [0, 2, 0], sizes = [2, 1, 128], strides = [1, 1, 1]} : vector<2x4x128xf32> to vector<2x1x128xf32>
    %20 = vector.shape_cast %19 : vector<2x1x128xf32> to vector<2x128xf32>
    %c2 = arith.constant 2 : index
    %c0_18 = arith.constant 0 : index
    %c0_19 = arith.constant 0 : index
    %21 = vector.load %arg3[%c2, %c0_18, %c0_19] : memref<4x128x512xf32, #tpu.memory_space<vmem>>, vector<1x128x512xf32>
    %22 = vector.shape_cast %21 : vector<1x128x512xf32> to vector<128x512xf32>
    %cst_20 = arith.constant dense<0.000000e+00> : vector<2x512xf32>
    %23 = tpu.matmul %20, %22, %cst_20 {dimension_numbers = #tpu.dot_dimension_numbers<[1], [0], [0], [1], [0, 0, 1, 1], [], []>} : vector<2x128xf32>, vector<128x512xf32>, vector<2x512xf32> -> vector<2x512xf32>
    %24 = arith.addf %18, %23 : vector<2x512xf32>
    %c0_21 = arith.constant 0 : index
    %c0_22 = arith.constant 0 : index
    %25 = vector.load %arg5[%c0_21, %c0_22] : memref<2x512xf32, #tpu.memory_space<vmem>>, vector<2x512xf32>
    tpu.vector_store %arg5[%c0_21, %c0_22], %24 {strides = array<i32>} : memref<2x512xf32, #tpu.memory_space<vmem>>, vector<2x512xf32>,
    %c0_23 = arith.constant 0 : index
    %c0_24 = arith.constant 0 : index
    %26 = vector.load %arg5[%c0_23, %c0_24] : memref<2x512xf32, #tpu.memory_space<vmem>>, vector<2x512xf32>
    %27 = vector.extract_strided_slice %3 {offsets = [0, 3, 0], sizes = [2, 1, 128], strides = [1, 1, 1]} : vector<2x4x128xf32> to vector<2x1x128xf32>
    %28 = vector.shape_cast %27 : vector<2x1x128xf32> to vector<2x128xf32>
    %c3 = arith.constant 3 : index
    %c0_25 = arith.constant 0 : index
    %c0_26 = arith.constant 0 : index
    %29 = vector.load %arg3[%c3, %c0_25, %c0_26] : memref<4x128x512xf32, #tpu.memory_space<vmem>>, vector<1x128x512xf32>
    %30 = vector.shape_cast %29 : vector<1x128x512xf32> to vector<128x512xf32>
    %cst_27 = arith.constant dense<0.000000e+00> : vector<2x512xf32>
    %31 = tpu.matmul %28, %30, %cst_27 {dimension_numbers = #tpu.dot_dimension_numbers<[1], [0], [0], [1], [0, 0, 1, 1], [], []>} : vector<2x128xf32>, vector<128x512xf32>, vector<2x512xf32> -> vector<2x512xf32>
    %32 = arith.addf %26, %31 : vector<2x512xf32>
    %c0_28 = arith.constant 0 : index
    %c0_29 = arith.constant 0 : index
    %33 = vector.load %arg5[%c0_28, %c0_29] : memref<2x512xf32, #tpu.memory_space<vmem>>, vector<2x512xf32>
    tpu.vector_store %arg5[%c0_28, %c0_29], %32 {strides = array<i32>} : memref<2x512xf32, #tpu.memory_space<vmem>>, vector<2x512xf32>,
    %c0_30 = arith.constant 0 : index
    %c0_31 = arith.constant 0 : index
    %34 = vector.load %arg5[%c0_30, %c0_31] : memref<2x512xf32, #tpu.memory_space<vmem>>, vector<2x512xf32>
    %c0_32 = arith.constant 0 : index
    %c0_33 = arith.constant 0 : index
    %c0_34 = arith.constant 0 : index
    %35 = vector.load %arg4[%c0_32, %c0_33, %c0_34] : memref<1x2x512xf32, #tpu.memory_space<vmem>>, vector<1x2x512xf32>
    %36 = vector.shape_cast %35 : vector<1x2x512xf32> to vector<2x512xf32>
    %37 = vector.shape_cast %34 : vector<2x512xf32> to vector<1x2x512xf32>
    tpu.vector_store %arg4[%c0_32, %c0_33, %c0_34], %37 {strides = array<i32>} : memref<1x2x512xf32, #tpu.memory_space<vmem>>, vector<1x2x512xf32>,
    return
  }
  func.func @transform_0(%arg0: i32) -> (i32, i32) {
    %c0_i32 = arith.constant 0 : i32
    %c0_i32_0 = arith.constant 0 : i32
    return %arg0, %c0_i32 : i32, i32
  }
  func.func @transform_1(%arg0: i32) -> (i32, i32) {
    %c0_i32 = arith.constant 0 : i32
    %c0_i32_0 = arith.constant 0 : i32
    %c0_i32_1 = arith.constant 0 : i32
    return %c0_i32, %c0_i32_0 : i32, i32
  }
  func.func @transform_2(%arg0: i32) -> (i32, i32, i32) {
    %c0_i32 = arith.constant 0 : i32
    %c0_i32_0 = arith.constant 0 : i32
    %c0_i32_1 = arith.constant 0 : i32
    %c0_i32_2 = arith.constant 0 : i32
    return %c0_i32, %c0_i32_0, %c0_i32_1 : i32, i32, i32
  }
  func.func @transform_3(%arg0: i32) -> (i32, i32, i32) {
    %c0_i32 = arith.constant 0 : i32
    %c0_i32_0 = arith.constant 0 : i32
    %c0_i32_1 = arith.constant 0 : i32
    return %arg0, %c0_i32, %c0_i32_0 : i32, i32, i32
  }
}

</mosaic_0001>

<llo_original>
// kernel: tpu_custom_call.1
$region0: #{tpu_custom_call.1}
  #allocation0 [shape = 'u32[]', space=smem, size = 0x4, offset = 0x4, fixed_abs, tag = 'smem constant byte address 0x4 - core index']
  #allocation1 [shape = 'u32[144,128]{1,0:T(1,128)}', space=vmem, size = 0x12000, scoped, tag = 'internal scratch']
  #allocation2 [shape = 'f32[2,512]{1,0:T(2,128)}', space=vmem, size = 0x1000, scoped, tag = 'scratch operand']
  %s0 = inlined_call_operand.hbm [shape: f32[16,128], index: 0, kind: input, shape index: {}]
  %s1 = inlined_call_operand.hbm [shape: f32[128,128], index: 1, kind: input, shape index: {}]
  %s2 = inlined_call_operand.hbm [shape: f32[4,128,512], index: 2, kind: input, shape index: {}]
  %s3 = inlined_call_operand.hbm [shape: f32[2,2,512], index: 3, kind: output, shape index: {}]
  %s4 = sld [smem:[#allocation0]]
  $region57: #{tpu_custom_call.1} parent=0
    _
  %s6 = ssub.s32 1, %s4
  %s7 = scalar_select 0, %s6, %s4
  $region1: #{tpu_custom_call.1} parent=0
    #allocation3 [shape = 'u8[8192]{0}', space=vmem, size = 0x2000, scoped, tag = 'input window, operand 0']
    #allocation4 [shape = 's32[2]{0}', space=sflag, size = 0x8, scoped, tag = 'scoped memory for tpu_custom_call.1']
    #allocation5 [shape = 's32[2]{0}', space=sflag, size = 0x8, scoped, tag = 'scoped memory for tpu_custom_call.1']
    #allocation6 [shape = 'u8[65536]{0}', space=vmem, size = 0x10000, scoped, tag = 'input window, operand 1, single buffered']
    #allocation7 [shape = 's32[1]{0}', space=sflag, size = 0x4, scoped, tag = 'scoped memory for tpu_custom_call.1']
    #allocation8 [shape = 'u8[1048576]{0}', space=vmem, size = 0x100000, scoped, tag = 'input window, operand 2, single buffered']
    #allocation9 [shape = 'u8[8192]{0}', space=vmem, size = 0x2000, scoped, tag = 'output window, operand 0']
    %8 = vsyncpa [#allocation4], 0
    %s9 = scalar_lea.sflag [#allocation4], 1
    %10 = vsyncpa %s9, 0
    %11 = vsyncpa [#allocation7], 0
    %12 = vsyncpa [#allocation5], 0
    %s13 = scalar_lea.sflag [#allocation5], 1
    %14 = vsyncpa %s13, 0
    loop: start=0, step=1, limit=4
    $region2: #{tpu_custom_call.1} parent=1 // loop_pre_header
      _
    $region3: #{tpu_custom_call.1} parent=1 // loop_header
      %s16 = sphi 0, %s20
      %p17 = scmp.ge.s32.totalorder %s16, 4
      %s26 = sphi 0, %s28
      %s29 = sphi 0, %s26
      %s30 = sphi 0, %s29
      %s46 = sphi 0, %s30
      %s50 = sphi 0, %s50
      %s52 = sphi 0, %s50
      %s53 = sphi 0, %s52
      %s67 = sphi 0, %s53
      %s71 = sphi 0, %s71
      %s73 = sphi 0, %s71
      %s74 = sphi 0, %s73
      %s88 = sphi 0, %s74
      %s94 = sphi 0, %s96
      %s97 = sphi 0, %s94
      %s98 = sphi 0, %s97
      %s114 = sphi 0, %s98
    $region4: #{tpu_custom_call.1} parent=1 // loop_header_branch
      %19 = sbr.rel (%p17) target = $region8
    $region5: #{tpu_custom_call.1} parent=1 // loop_body
      %s21 = ssub.s32 %s16, 1
      %s22 = ssub.s32 %s16, 2
      %s23 = sadd.s32 %s16, 1
      %s24 = ssub.s32 %s16, %s23
      %p25 = scmp.eq.s32.totalorder %s24, 0
      %s27 = sadd.s32 %s26, 1
      %s28 = scalar_select %p25, %s26, %s27
      %p31 = pneg %p25
      %p32 = scmp.eq.s32.totalorder %s16, 1
      %p33 = por %p31, %p32
      %p34 = scmp.ne.s32.totalorder %s26, %s29
      %p35 = scmp.eq.s32.totalorder %s16, 0
      %p36 = por %p34, %p35
      %p37 = scmp.ne.s32.totalorder %s26, %s29
      %p38 = scmp.eq.s32.totalorder %s21, 1
      %p39 = por %p37, %p38
      %p40 = scmp.ne.s32.totalorder %s29, %s30
      %p41 = scmp.eq.s32.totalorder %s21, 0
      %p42 = por %p40, %p41
      %p43 = scmp.ne.s32.totalorder %s29, %s30
      %p44 = scmp.eq.s32.totalorder %s22, 1
      %p45 = por %p43, %p44
      %p47 = scmp.ne.s32.totalorder %s30, %s46
      %p48 = scmp.eq.s32.totalorder %s22, 0
      %p49 = por %p47, %p48
      %s51 = sadd.s32 %s50, 1
      %p54 = scmp.eq.s32.totalorder %s16, 1
      %p55 = scmp.ne.s32.totalorder %s50, %s52
      %p56 = scmp.eq.s32.totalorder %s16, 0
      %p57 = por %p55, %p56
      %p58 = scmp.ne.s32.totalorder %s50, %s52
      %p59 = scmp.eq.s32.totalorder %s21, 1
      %p60 = por %p58, %p59
      %p61 = scmp.ne.s32.totalorder %s52, %s53
      %p62 = scmp.eq.s32.totalorder %s21, 0
      %p63 = por %p61, %p62
      %p64 = scmp.ne.s32.totalorder %s52, %s53
      %p65 = scmp.eq.s32.totalorder %s22, 1
      %p66 = por %p64, %p65
      %p68 = scmp.ne.s32.totalorder %s53, %s67
      %p69 = scmp.eq.s32.totalorder %s22, 0
      %p70 = por %p68, %p69
      %s72 = sadd.s32 %s71, 1
      %p75 = scmp.eq.s32.totalorder %s16, 1
      %p76 = scmp.ne.s32.totalorder %s71, %s73
      %p77 = scmp.eq.s32.totalorder %s16, 0
      %p78 = por %p76, %p77
      %p79 = scmp.ne.s32.totalorder %s71, %s73
      %p80 = scmp.eq.s32.totalorder %s21, 1
      %p81 = por %p79, %p80
      %p82 = scmp.ne.s32.totalorder %s73, %s74
      %p83 = scmp.eq.s32.totalorder %s21, 0
      %p84 = por %p82, %p83
      %p85 = scmp.ne.s32.totalorder %s73, %s74
      %p86 = scmp.eq.s32.totalorder %s22, 1
      %p87 = por %p85, %p86
      %p89 = scmp.ne.s32.totalorder %s74, %s88
      %p90 = scmp.eq.s32.totalorder %s22, 0
      %p91 = por %p89, %p90
      %s92 = ssub.s32 %s16, %s23
      %p93 = scmp.eq.s32.totalorder %s92, 0
      %s95 = sadd.s32 %s94, 1
      %s96 = scalar_select %p93, %s94, %s95
      %p99 = pneg %p93
      %p100 = scmp.eq.s32.totalorder %s16, 1
      %p101 = por %p99, %p100
      %p102 = scmp.ne.s32.totalorder %s94, %s97
      %p103 = scmp.eq.s32.totalorder %s16, 0
      %p104 = por %p102, %p103
      %p105 = scmp.ne.s32.totalorder %s94, %s97
      %p106 = scmp.eq.s32.totalorder %s21, 1
      %p107 = por %p105, %p106
      %p108 = scmp.ne.s32.totalorder %s97, %s98
      %p109 = scmp.eq.s32.totalorder %s21, 0
      %p110 = por %p108, %p109
      %p111 = scmp.ne.s32.totalorder %s97, %s98
      %p112 = scmp.eq.s32.totalorder %s22, 1
      %p113 = por %p111, %p112
      %p115 = scmp.ne.s32.totalorder %s98, %s114
      %p116 = scmp.eq.s32.totalorder %s22, 0
      %p117 = por %p115, %p116
      %p118 = scmp.le.s32.totalorder 1, %s16
      %p119 = scmp.lt.s32.totalorder %s16, 3
      %p120 = pnand %p118, %p119
      %p121 = pneg %p120
      // Predicated region
      $region9: #{tpu_custom_call.1} parent=5 // pred_check
        _
      $region10: #{tpu_custom_call.1} parent=5 // pred_check_branch
        %123 = sbr.rel (%p120) target = $region12
      $region11: #{tpu_custom_call.1} parent=5 // pred_region
        %s124 = ssub.s32 %s16, 1
        // Predicated region
        $region13: #{tpu_custom_call.1} parent=11 // pred_check
          %p125 = pneg %p63
        $region14: #{tpu_custom_call.1} parent=11 // pred_check_branch
          %127 = sbr.rel (%p125) target = $region16
        $region15: #{tpu_custom_call.1} parent=11 // pred_region
          %s129 = ssub.s32 2048, 2048
          %130 = vsyncadd [#allocation7], %s129
          %s131 = sshll.u32 [#allocation6], 4
          %s132 = int_to_ptr.vmem [resolvable:$true] %s131
          %137 = dma.hbm_to_vmem [thread:$0]  %s1, 2048, %s132, [#allocation7], 128, 128, 8
        $region16: #{tpu_custom_call.1} parent=11 // pred_fallthru
          _
        // Predicated region
        $region17: #{tpu_custom_call.1} parent=11 // pred_check
          %p138 = pneg %p84
        $region18: #{tpu_custom_call.1} parent=11 // pred_check_branch
          %140 = sbr.rel (%p138) target = $region20
        $region19: #{tpu_custom_call.1} parent=11 // pred_region
          %s142 = ssub.s32 32768, 32768
          %143 = vsyncadd [#allocation7], %s142
          %s144 = sshll.u32 [#allocation8], 4
          %s145 = int_to_ptr.vmem [resolvable:$true] %s144
          %150 = dma.hbm_to_vmem [thread:$0]  %s2, 32768, %s145, [#allocation7], 512, 512, 32
        $region20: #{tpu_custom_call.1} parent=11 // pred_fallthru
          _
      $region12: #{tpu_custom_call.1} parent=5 // pred_fallthru
        _
      %p151 = scmp.lt.s32.totalorder %s16, 2
      // Predicated region
      $region21: #{tpu_custom_call.1} parent=5 // pred_check
        %p152 = pneg %p151
      $region22: #{tpu_custom_call.1} parent=5 // pred_check_branch
        %154 = sbr.rel (%p152) target = $region24
      $region23: #{tpu_custom_call.1} parent=5 // pred_region
        // Predicated region
        $region25: #{tpu_custom_call.1} parent=23 // pred_check
          %p155 = pneg %p36
        $region26: #{tpu_custom_call.1} parent=23 // pred_check_branch
          %157 = sbr.rel (%p155) target = $region28
        $region27: #{tpu_custom_call.1} parent=23 // pred_region
          %s158 = sand.u32 %s26, 1
          %s159 = scalar_lea.sflag [#allocation4], %s158
          %s160 = sand.u32 %s26, 1
          %s161 = smul.addr %s160, 8
          %s162 = scalar_lea.vmem [#allocation3], %s161
          %s164 = ssub.s32 128, 128
          %165 = vsyncadd %s159, %s164
          %s166 = smul.addr %s16, 128
          %s167 = scalar_lea.hbm %s0, %s166
          %s169 = sshll.u32 %s162, 4
          %s170 = int_to_ptr.vmem [resolvable:$true] %s169
          %172 = dma.hbm_to_vmem [thread:$0]  %s167, 128, %s170, %s159
        $region28: #{tpu_custom_call.1} parent=23 // pred_fallthru
          _
      $region24: #{tpu_custom_call.1} parent=5 // pred_fallthru
        _
      %p173 = scmp.le.s32.totalorder 1, %s16
      %p174 = scmp.lt.s32.totalorder %s16, 3
      %p175 = pnand %p173, %p174
      %p176 = pneg %p175
      // Predicated region
      $region29: #{tpu_custom_call.1} parent=5 // pred_check
        _
      $region30: #{tpu_custom_call.1} parent=5 // pred_check_branch
        %178 = sbr.rel (%p175) target = $region32
      $region31: #{tpu_custom_call.1} parent=5 // pred_region
        %s179 = ssub.s32 %s16, 1
        %s180 = sand.u32 %s29, 1
        %s181 = scalar_lea.sflag [#allocation4], %s180
        %s182 = sand.u32 %s29, 1
        %s183 = smul.addr %s182, 8
        %s184 = scalar_lea.vmem [#allocation3], %s183
        // Predicated region
        $region33: #{tpu_custom_call.1} parent=31 // pred_check
          %p185 = pneg %p42
        $region34: #{tpu_custom_call.1} parent=31 // pred_check_branch
          %187 = sbr.rel (%p185) target = $region36
        $region35: #{tpu_custom_call.1} parent=31 // pred_region
          %188 = dma.done %s181, 128
        $region36: #{tpu_custom_call.1} parent=31 // pred_fallthru
          _
        // Predicated region
        $region37: #{tpu_custom_call.1} parent=31 // pred_check
          %p189 = pneg %p63
        $region38: #{tpu_custom_call.1} parent=31 // pred_check_branch
          %191 = sbr.rel (%p189) target = $region40
        $region39: #{tpu_custom_call.1} parent=31 // pred_region
          %192 = dma.done [#allocation7], 2048
        $region40: #{tpu_custom_call.1} parent=31 // pred_fallthru
          _
        // Predicated region
        $region41: #{tpu_custom_call.1} parent=31 // pred_check
          %p193 = pneg %p84
        $region42: #{tpu_custom_call.1} parent=31 // pred_check_branch
          %195 = sbr.rel (%p193) target = $region44
        $region43: #{tpu_custom_call.1} parent=31 // pred_region
          %196 = dma.done [#allocation7], 32768
        $region44: #{tpu_custom_call.1} parent=31 // pred_fallthru
          _
        %s197 = sand.u32 %s29, 1
        %s198 = scalar_lea.sflag [#allocation4], %s197
        %s199 = sand.u32 %s29, 1
        %s200 = smul.addr %s199, 8
        %s201 = scalar_lea.vmem [#allocation3], %s200
        %p202 = pneg %p42
        %p203 = pneg %p39
        %p204 = pneg %p63
        %p205 = pneg %p60
        %p206 = pneg %p84
        %p207 = pneg %p81
        %p208 = pneg %p110
        %p209 = pneg %p107
        %s210 = sand.u32 %s97, 1
        %s211 = scalar_lea.sflag [#allocation5], %s210
        %s212 = sand.u32 %s97, 1
        %s213 = smul.addr %s212, 8
        %s214 = scalar_lea.vmem [#allocation9], %s213
        %v215 = vld [vmem:[%s184] sm:$0xff]
        %v216 = vld [vmem:[#allocation6] sm:$0xff]
        %v217 = vld [vmem:[#allocation6 + $0x8] sm:$0xff]
        %v218 = vld [vmem:[#allocation6 + $0x10] sm:$0xff]
        %v219 = vld [vmem:[#allocation6 + $0x18] sm:$0xff]
        %v220 = vld [vmem:[#allocation6 + $0x20] sm:$0xff]
        %v221 = vld [vmem:[#allocation6 + $0x28] sm:$0xff]
        %v222 = vld [vmem:[#allocation6 + $0x30] sm:$0xff]
        %v223 = vld [vmem:[#allocation6 + $0x38] sm:$0xff]
        %v224 = vld [vmem:[#allocation6 + $0x40] sm:$0xff]
        %v225 = vld [vmem:[#allocation6 + $0x48] sm:$0xff]
        %v226 = vld [vmem:[#allocation6 + $0x50] sm:$0xff]
        %v227 = vld [vmem:[#allocation6 + $0x58] sm:$0xff]
        %v228 = vld [vmem:[#allocation6 + $0x60] sm:$0xff]
        %v229 = vld [vmem:[#allocation6 + $0x68] sm:$0xff]
        %v230 = vld [vmem:[#allocation6 + $0x70] sm:$0xff]
        %v231 = vld [vmem:[#allocation6 + $0x78] sm:$0xff]
        %232 = vmatprep.subr.mxu0 0.0
        %233 = vmatpush1.msra.mxu0 %v216
        %234 = vmatprep.subr.mxu0 0.0
        %235 = vmatpush1.msra.mxu0 %v217
        %236 = vmatprep.subr.mxu0 0.0
        %237 = vmatpush1.msra.mxu0 %v218
        %238 = vmatprep.subr.mxu0 0.0
        %239 = vmatpush1.msra.mxu0 %v219
        %240 = vmatprep.subr.mxu0 0.0
        %241 = vmatpush1.msra.mxu0 %v220
        %242 = vmatprep.subr.mxu0 0.0
        %243 = vmatpush1.msra.mxu0 %v221
        %244 = vmatprep.subr.mxu0 0.0
        %245 = vmatpush1.msra.mxu0 %v222
        %246 = vmatprep.subr.mxu0 0.0
        %247 = vmatpush1.msra.mxu0 %v223
        %248 = vmatprep.subr.mxu0 0.0
        %249 = vmatpush1.msra.mxu0 %v224
        %250 = vmatprep.subr.mxu0 0.0
        %251 = vmatpush1.msra.mxu0 %v225
        %252 = vmatprep.subr.mxu0 0.0
        %253 = vmatpush1.msra.mxu0 %v226
        %254 = vmatprep.subr.mxu0 0.0
        %255 = vmatpush1.msra.mxu0 %v227
        %256 = vmatprep.subr.mxu0 0.0
        %257 = vmatpush1.msra.mxu0 %v228
        %258 = vmatprep.subr.mxu0 0.0
        %259 = vmatpush1.msra.mxu0 %v229
        %260 = vmatprep.subr.mxu0 0.0
        %261 = vmatpush1.msra.mxu0 %v230
        %262 = vmatprep.subr.mxu0 0.0
        %263 = vmatpush1.msra.mxu0 %v231
        %264 = vmatprep.subr.mxu0 0.0
        %265 = vmatpush1.msra.mxu0 0.0
        %266 = vmatprep.subr.mxu0 0.0
        %267 = vmatpush1.msra.mxu0 0.0
        %268 = vmatprep.subr.mxu0 0.0
        %269 = vmatpush1.msra.mxu0 0.0
        %270 = vmatprep.subr.mxu0 0.0
        %271 = vmatpush1.msra.mxu0 0.0
        %272 = vmatprep.subr.mxu0 0.0
        %273 = vmatpush1.msra.mxu0 0.0
        %274 = vmatprep.subr.mxu0 0.0
        %275 = vmatpush1.msra.mxu0 0.0
        %276 = vmatprep.subr.mxu0 0.0
        %277 = vmatpush1.msra.mxu0 0.0
        %278 = vmatprep.subr.mxu0 0.0
        %279 = vmatpush1.msra.mxu0 0.0
        %280 = vmatprep.subr.mxu0 0.0
        %281 = vmatpush1.msra.mxu0 0.0
        %282 = vmatprep.subr.mxu0 0.0
        %283 = vmatpush1.msra.mxu0 0.0
        %284 = vmatprep.subr.mxu0 0.0
        %285 = vmatpush1.msra.mxu0 0.0
        %286 = vmatprep.subr.mxu0 0.0
        %287 = vmatpush1.msra.mxu0 0.0
        %288 = vmatprep.subr.mxu0 0.0
        %289 = vmatpush1.msra.mxu0 0.0
        %290 = vmatprep.subr.mxu0 0.0
        %291 = vmatpush1.msra.mxu0 0.0
        %292 = vmatprep.subr.mxu0 0.0
        %293 = vmatpush1.msra.mxu0 0.0
        %294 = vmatprep.subr.mxu0 0.0
        %295 = vmatpush1.msra.mxu0 0.0
        %296 = vmatprep.mubr.f32.mxu0 0.0
        %297 = vmatmul.mubr.f32.gmra.mrb[0].mxu0 %v215
        %v298 = vpop.f32.mrb[0].mxu0
        %v299 = vadd.f32 0.0, %v298
        %v300 = vpop.f32.mrb[0].mxu0
        %301 = vdwg.mxu0
        %v303 = vcombine.high %v299, %v299
        %v304 = vld [vmem:[#allocation8] sm:$0xff]
        %v305 = vld [vmem:[#allocation8 + $0x8] sm:$0xff]
        %v306 = vld [vmem:[#allocation8 + $0x10] sm:$0xff]
        %v307 = vld [vmem:[#allocation8 + $0x18] sm:$0xff]
        %v308 = vld [vmem:[#allocation8 + $0x20] sm:$0xff]
        %v309 = vld [vmem:[#allocation8 + $0x28] sm:$0xff]
        %v310 = vld [vmem:[#allocation8 + $0x30] sm:$0xff]
        %v311 = vld [vmem:[#allocation8 + $0x38] sm:$0xff]
        %v312 = vld [vmem:[#allocation8 + $0x40] sm:$0xff]
        %v313 = vld [vmem:[#allocation8 + $0x48] sm:$0xff]
        %v314 = vld [vmem:[#allocation8 + $0x50] sm:$0xff]
        %v315 = vld [vmem:[#allocation8 + $0x58] sm:$0xff]
        %v316 = vld [vmem:[#allocation8 + $0x60] sm:$0xff]
        %v317 = vld [vmem:[#allocation8 + $0x68] sm:$0xff]
        %v318 = vld [vmem:[#allocation8 + $0x70] sm:$0xff]
        %v319 = vld [vmem:[#allocation8 + $0x78] sm:$0xff]
        %v320 = vld [vmem:[#allocation8 + $0x80] sm:$0xff]
        %v321 = vld [vmem:[#allocation8 + $0x88] sm:$0xff]
        %v322 = vld [vmem:[#allocation8 + $0x90] sm:$0xff]
        %v323 = vld [vmem:[#allocation8 + $0x98] sm:$0xff]
        %v324 = vld [vmem:[#allocation8 + $0xa0] sm:$0xff]
        %v325 = vld [vmem:[#allocation8 + $0xa8] sm:$0xff]
        %v326 = vld [vmem:[#allocation8 + $0xb0] sm:$0xff]
        %v327 = vld [vmem:[#allocation8 + $0xb8] sm:$0xff]
        %v328 = vld [vmem:[#allocation8 + $0xc0] sm:$0xff]
        %v329 = vld [vmem:[#allocation8 + $0xc8] sm:$0xff]
        %v330 = vld [vmem:[#allocation8 + $0xd0] sm:$0xff]
        %v331 = vld [vmem:[#allocation8 + $0xd8] sm:$0xff]
        %v332 = vld [vmem:[#allocation8 + $0xe0] sm:$0xff]
        %v333 = vld [vmem:[#allocation8 + $0xe8] sm:$0xff]
        %v334 = vld [vmem:[#allocation8 + $0xf0] sm:$0xff]
        %v335 = vld [vmem:[#allocation8 + $0xf8] sm:$0xff]
        %v336 = vld [vmem:[#allocation8 + $0x100] sm:$0xff]
        %v337 = vld [vmem:[#allocation8 + $0x108] sm:$0xff]
        %v338 = vld [vmem:[#allocation8 + $0x110] sm:$0xff]
        %v339 = vld [vmem:[#allocation8 + $0x118] sm:$0xff]
        %v340 = vld [vmem:[#allocation8 + $0x120] sm:$0xff]
        %v341 = vld [vmem:[#allocation8 + $0x128] sm:$0xff]
        %v342 = vld [vmem:[#allocation8 + $0x130] sm:$0xff]
        %v343 = vld [vmem:[#allocation8 + $0x138] sm:$0xff]
        %v344 = vld [vmem:[#allocation8 + $0x140] sm:$0xff]
        %v345 = vld [vmem:[#allocation8 + $0x148] sm:$0xff]
        %v346 = vld [vmem:[#allocation8 + $0x150] sm:$0xff]
        %v347 = vld [vmem:[#allocation8 + $0x158] sm:$0xff]
        %v348 = vld [vmem:[#allocation8 + $0x160] sm:$0xff]
        %v349 = vld [vmem:[#allocation8 + $0x168] sm:$0xff]
        %v350 = vld [vmem:[#allocation8 + $0x170] sm:$0xff]
        %v351 = vld [vmem:[#allocation8 + $0x178] sm:$0xff]
        %v352 = vld [vmem:[#allocation8 + $0x180] sm:$0xff]
        %v353 = vld [vmem:[#allocation8 + $0x188] sm:$0xff]
        %v354 = vld [vmem:[#allocation8 + $0x190] sm:$0xff]
        %v355 = vld [vmem:[#allocation8 + $0x198] sm:$0xff]
        %v356 = vld [vmem:[#allocation8 + $0x1a0] sm:$0xff]
        %v357 = vld [vmem:[#allocation8 + $0x1a8] sm:$0xff]
        %v358 = vld [vmem:[#allocation8 + $0x1b0] sm:$0xff]
        %v359 = vld [vmem:[#allocation8 + $0x1b8] sm:$0xff]
        %v360 = vld [vmem:[#allocation8 + $0x1c0] sm:$0xff]
        %v361 = vld [vmem:[#allocation8 + $0x1c8] sm:$0xff]
        %v362 = vld [vmem:[#allocation8 + $0x1d0] sm:$0xff]
        %v363 = vld [vmem:[#allocation8 + $0x1d8] sm:$0xff]
        %v364 = vld [vmem:[#allocation8 + $0x1e0] sm:$0xff]
        %v365 = vld [vmem:[#allocation8 + $0x1e8] sm:$0xff]
        %v366 = vld [vmem:[#allocation8 + $0x1f0] sm:$0xff]
        %v367 = vld [vmem:[#allocation8 + $0x1f8] sm:$0xff]
        %v368 = vlaneseq
        %v369 = vshrl.u32 %v368, 7
        %v370 = vsub.s32 0, %v369
        %v371 = vrot.slane %v299, %v370
        %v372 = vlaneseq
        %v373 = vshrl.u32 %v372, 7
        %v374 = vsub.s32 0, %v373
        %v375 = vrot.slane %v303, %v374
        %vm376 = vcmask 1041409
        %v377 = vsel %vm376, %v375, %v371
        %379 = vmatprep.subr.mxu0 %v305
        %380 = vmatpush1.msra.mxu0 %v304
        %381 = vmatprep.subr.mxu0 %v309
        %382 = vmatpush1.msra.mxu0 %v308
        %383 = vmatprep.subr.mxu0 %v313
        %384 = vmatpush1.msra.mxu0 %v312
        %385 = vmatprep.subr.mxu0 %v317
        %386 = vmatpush1.msra.mxu0 %v316
        %387 = vmatprep.subr.mxu0 %v321
        %388 = vmatpush1.msra.mxu0 %v320
        %389 = vmatprep.subr.mxu0 %v325
        %390 = vmatpush1.msra.mxu0 %v324
        %391 = vmatprep.subr.mxu0 %v329
        %392 = vmatpush1.msra.mxu0 %v328
        %393 = vmatprep.subr.mxu0 %v333
        %394 = vmatpush1.msra.mxu0 %v332
        %395 = vmatprep.subr.mxu0 %v337
        %396 = vmatpush1.msra.mxu0 %v336
        %397 = vmatprep.subr.mxu0 %v341
        %398 = vmatpush1.msra.mxu0 %v340
        %399 = vmatprep.subr.mxu0 %v345
        %400 = vmatpush1.msra.mxu0 %v344
        %401 = vmatprep.subr.mxu0 %v349
        %402 = vmatpush1.msra.mxu0 %v348
        %403 = vmatprep.subr.mxu0 %v353
        %404 = vmatpush1.msra.mxu0 %v352
        %405 = vmatprep.subr.mxu0 %v357
        %406 = vmatpush1.msra.mxu0 %v356
        %407 = vmatprep.subr.mxu0 %v361
        %408 = vmatpush1.msra.mxu0 %v360
        %409 = vmatprep.subr.mxu0 %v365
        %410 = vmatpush1.msra.mxu0 %v364
        %411 = vmatprep.subr.mxu0 0.0
        %412 = vmatpush1.msra.mxu0 0.0
        %413 = vmatprep.subr.mxu0 0.0
        %414 = vmatpush1.msra.mxu0 0.0
        %415 = vmatprep.subr.mxu0 0.0
        %416 = vmatpush1.msra.mxu0 0.0
        %417 = vmatprep.subr.mxu0 0.0
        %418 = vmatpush1.msra.mxu0 0.0
        %419 = vmatprep.subr.mxu0 0.0
        %420 = vmatpush1.msra.mxu0 0.0
        %421 = vmatprep.subr.mxu0 0.0
        %422 = vmatpush1.msra.mxu0 0.0
        %423 = vmatprep.subr.mxu0 0.0
        %424 = vmatpush1.msra.mxu0 0.0
        %425 = vmatprep.subr.mxu0 0.0
        %426 = vmatpush1.msra.mxu0 0.0
        %427 = vmatprep.subr.mxu0 0.0
        %428 = vmatpush1.msra.mxu0 0.0
        %429 = vmatprep.subr.mxu0 0.0
        %430 = vmatpush1.msra.mxu0 0.0
        %431 = vmatprep.subr.mxu0 0.0
        %432 = vmatpush1.msra.mxu0 0.0
        %433 = vmatprep.subr.mxu0 0.0
        %434 = vmatpush1.msra.mxu0 0.0
        %435 = vmatprep.subr.mxu0 0.0
        %436 = vmatpush1.msra.mxu0 0.0
        %437 = vmatprep.subr.mxu0 0.0
        %438 = vmatpush1.msra.mxu0 0.0
        %439 = vmatprep.subr.mxu0 0.0
        %440 = vmatpush1.msra.mxu0 0.0
        %441 = vmatprep.subr.mxu0 0.0
        %442 = vmatpush1.msra.mxu0 0.0
        %443 = vmatprep.mubr.f32.mxu0 0.0
        %444 = vmatmul.mubr.f32.gmra.mrb[0].mxu0 %v377
        %v445 = vpop.f32.mrb[0].mxu0
        %v446 = vadd.f32 0.0, %v445
        %v447 = vpop.f32.mrb[0].mxu0
        %v448 = vadd.f32 0.0, %v447
        %449 = vdwg.mxu0
        %450 = vmatprep.subr.mxu0 %v307
        %451 = vmatpush1.msra.mxu0 %v306
        %452 = vmatprep.subr.mxu0 %v311
        %453 = vmatpush1.msra.mxu0 %v310
        %454 = vmatprep.subr.mxu0 %v315
        %455 = vmatpush1.msra.mxu0 %v314
        %456 = vmatprep.subr.mxu0 %v319
        %457 = vmatpush1.msra.mxu0 %v318
        %458 = vmatprep.subr.mxu0 %v323
        %459 = vmatpush1.msra.mxu0 %v322
        %460 = vmatprep.subr.mxu0 %v327
        %461 = vmatpush1.msra.mxu0 %v326
        %462 = vmatprep.subr.mxu0 %v331
        %463 = vmatpush1.msra.mxu0 %v330
        %464 = vmatprep.subr.mxu0 %v335
        %465 = vmatpush1.msra.mxu0 %v334
        %466 = vmatprep.subr.mxu0 %v339
        %467 = vmatpush1.msra.mxu0 %v338
        %468 = vmatprep.subr.mxu0 %v343
        %469 = vmatpush1.msra.mxu0 %v342
        %470 = vmatprep.subr.mxu0 %v347
        %471 = vmatpush1.msra.mxu0 %v346
        %472 = vmatprep.subr.mxu0 %v351
        %473 = vmatpush1.msra.mxu0 %v350
        %474 = vmatprep.subr.mxu0 %v355
        %475 = vmatpush1.msra.mxu0 %v354
        %476 = vmatprep.subr.mxu0 %v359
        %477 = vmatpush1.msra.mxu0 %v358
        %478 = vmatprep.subr.mxu0 %v363
        %479 = vmatpush1.msra.mxu0 %v362
        %480 = vmatprep.subr.mxu0 %v367
        %481 = vmatpush1.msra.mxu0 %v366
        %482 = vmatprep.subr.mxu0 0.0
        %483 = vmatpush1.msra.mxu0 0.0
        %484 = vmatprep.subr.mxu0 0.0
        %485 = vmatpush1.msra.mxu0 0.0
        %486 = vmatprep.subr.mxu0 0.0
        %487 = vmatpush1.msra.mxu0 0.0
        %488 = vmatprep.subr.mxu0 0.0
        %489 = vmatpush1.msra.mxu0 0.0
        %490 = vmatprep.subr.mxu0 0.0
        %491 = vmatpush1.msra.mxu0 0.0
        %492 = vmatprep.subr.mxu0 0.0
        %493 = vmatpush1.msra.mxu0 0.0
        %494 = vmatprep.subr.mxu0 0.0
        %495 = vmatpush1.msra.mxu0 0.0
        %496 = vmatprep.subr.mxu0 0.0
        %497 = vmatpush1.msra.mxu0 0.0
        %498 = vmatprep.subr.mxu0 0.0
        %499 = vmatpush1.msra.mxu0 0.0
        %500 = vmatprep.subr.mxu0 0.0
        %501 = vmatpush1.msra.mxu0 0.0
        %502 = vmatprep.subr.mxu0 0.0
        %503 = vmatpush1.msra.mxu0 0.0
        %504 = vmatprep.subr.mxu0 0.0
        %505 = vmatpush1.msra.mxu0 0.0
        %506 = vmatprep.subr.mxu0 0.0
        %507 = vmatpush1.msra.mxu0 0.0
        %508 = vmatprep.subr.mxu0 0.0
        %509 = vmatpush1.msra.mxu0 0.0
        %510 = vmatprep.subr.mxu0 0.0
        %511 = vmatpush1.msra.mxu0 0.0
        %512 = vmatprep.subr.mxu0 0.0
        %513 = vmatpush1.msra.mxu0 0.0
        %514 = vmatprep.mubr.f32.mxu0 0.0
        %515 = vmatmul.mubr.f32.gmra.mrb[0].mxu0 %v377
        %v516 = vpop.f32.mrb[0].mxu0
        %v517 = vadd.f32 0.0, %v516
        %v518 = vpop.f32.mrb[0].mxu0
        %v519 = vadd.f32 0.0, %v518
        %520 = vdwg.mxu0
        %v525 = vcombine.low %v446, %v448
        %v526 = vcombine.low %v517, %v519
        %v528 = vunpack.c.l.s4 1983009808
        %v529 = vunpack.c.0.s8 %v528
        %v530 = vlaneseq
        %v531 = vshrl.u32 %v530, 7
        %v532 = vsub.s32 %v529, %v531
        %v533 = vrot.slane %v525, %v532
        %v535 = vunpack.c.l.s4 1983009808
        %v536 = vunpack.c.0.s8 %v535
        %v537 = vlaneseq
        %v538 = vshrl.u32 %v537, 7
        %v539 = vsub.s32 %v536, %v538
        %v540 = vrot.slane %v526, %v539
        %v541 = vcombine.low %v533, %v540
        %543 = vst [vmem:[#allocation2] sm:$0xff] %v541
        %v544 = vld [vmem:[#allocation2] sm:$0xff]
        %s545 = scalar_lea.vmem [#allocation8], 512
        %v546 = vld [vmem:[%s545] sm:$0xff]
        %v547 = vld [vmem:[%s545 + $0x8] sm:$0xff]
        %v548 = vld [vmem:[%s545 + $0x10] sm:$0xff]
        %v549 = vld [vmem:[%s545 + $0x18] sm:$0xff]
        %v550 = vld [vmem:[%s545 + $0x20] sm:$0xff]
        %v551 = vld [vmem:[%s545 + $0x28] sm:$0xff]
        %v552 = vld [vmem:[%s545 + $0x30] sm:$0xff]
        %v553 = vld [vmem:[%s545 + $0x38] sm:$0xff]
        %v554 = vld [vmem:[%s545 + $0x40] sm:$0xff]
        %v555 = vld [vmem:[%s545 + $0x48] sm:$0xff]
        %v556 = vld [vmem:[%s545 + $0x50] sm:$0xff]
        %v557 = vld [vmem:[%s545 + $0x58] sm:$0xff]
        %v558 = vld [vmem:[%s545 + $0x60] sm:$0xff]
        %v559 = vld [vmem:[%s545 + $0x68] sm:$0xff]
        %v560 = vld [vmem:[%s545 + $0x70] sm:$0xff]
        %v561 = vld [vmem:[%s545 + $0x78] sm:$0xff]
        %v562 = vld [vmem:[%s545 + $0x80] sm:$0xff]
        %v563 = vld [vmem:[%s545 + $0x88] sm:$0xff]
        %v564 = vld [vmem:[%s545 + $0x90] sm:$0xff]
        %v565 = vld [vmem:[%s545 + $0x98] sm:$0xff]
        %v566 = vld [vmem:[%s545 + $0xa0] sm:$0xff]
        %v567 = vld [vmem:[%s545 + $0xa8] sm:$0xff]
        %v568 = vld [vmem:[%s545 + $0xb0] sm:$0xff]
        %v569 = vld [vmem:[%s545 + $0xb8] sm:$0xff]
        %v570 = vld [vmem:[%s545 + $0xc0] sm:$0xff]
        %v571 = vld [vmem:[%s545 + $0xc8] sm:$0xff]
        %v572 = vld [vmem:[%s545 + $0xd0] sm:$0xff]
        %v573 = vld [vmem:[%s545 + $0xd8] sm:$0xff]
        %v574 = vld [vmem:[%s545 + $0xe0] sm:$0xff]
        %v575 = vld [vmem:[%s545 + $0xe8] sm:$0xff]
        %v576 = vld [vmem:[%s545 + $0xf0] sm:$0xff]
        %v577 = vld [vmem:[%s545 + $0xf8] sm:$0xff]
        %v578 = vld [vmem:[%s545 + $0x100] sm:$0xff]
        %v579 = vld [vmem:[%s545 + $0x108] sm:$0xff]
        %v580 = vld [vmem:[%s545 + $0x110] sm:$0xff]
        %v581 = vld [vmem:[%s545 + $0x118] sm:$0xff]
        %v582 = vld [vmem:[%s545 + $0x120] sm:$0xff]
        %v583 = vld [vmem:[%s545 + $0x128] sm:$0xff]
        %v584 = vld [vmem:[%s545 + $0x130] sm:$0xff]
        %v585 = vld [vmem:[%s545 + $0x138] sm:$0xff]
        %v586 = vld [vmem:[%s545 + $0x140] sm:$0xff]
        %v587 = vld [vmem:[%s545 + $0x148] sm:$0xff]
        %v588 = vld [vmem:[%s545 + $0x150] sm:$0xff]
        %v589 = vld [vmem:[%s545 + $0x158] sm:$0xff]
        %v590 = vld [vmem:[%s545 + $0x160] sm:$0xff]
        %v591 = vld [vmem:[%s545 + $0x168] sm:$0xff]
        %v592 = vld [vmem:[%s545 + $0x170] sm:$0xff]
        %v593 = vld [vmem:[%s545 + $0x178] sm:$0xff]
        %v594 = vld [vmem:[%s545 + $0x180] sm:$0xff]
        %v595 = vld [vmem:[%s545 + $0x188] sm:$0xff]
        %v596 = vld [vmem:[%s545 + $0x190] sm:$0xff]
        %v597 = vld [vmem:[%s545 + $0x198] sm:$0xff]
        %v598 = vld [vmem:[%s545 + $0x1a0] sm:$0xff]
        %v599 = vld [vmem:[%s545 + $0x1a8] sm:$0xff]
        %v600 = vld [vmem:[%s545 + $0x1b0] sm:$0xff]
        %v601 = vld [vmem:[%s545 + $0x1b8] sm:$0xff]
        %v602 = vld [vmem:[%s545 + $0x1c0] sm:$0xff]
        %v603 = vld [vmem:[%s545 + $0x1c8] sm:$0xff]
        %v604 = vld [vmem:[%s545 + $0x1d0] sm:$0xff]
        %v605 = vld [vmem:[%s545 + $0x1d8] sm:$0xff]
        %v606 = vld [vmem:[%s545 + $0x1e0] sm:$0xff]
        %v607 = vld [vmem:[%s545 + $0x1e8] sm:$0xff]
        %v608 = vld [vmem:[%s545 + $0x1f0] sm:$0xff]
        %v609 = vld [vmem:[%s545 + $0x1f8] sm:$0xff]
        %v610 = vlaneseq
        %v611 = vshrl.u32 %v610, 7
        %v612 = vsub.s32 1, %v611
        %v613 = vrot.slane %v299, %v612
        %v614 = vlaneseq
        %v615 = vshrl.u32 %v614, 7
        %v616 = vsub.s32 1, %v615
        %v617 = vrot.slane %v303, %v616
        %v618 = vsel %vm376, %v617, %v613
        %620 = vmatprep.subr.mxu0 %v547
        %621 = vmatpush1.msra.mxu0 %v546
        %622 = vmatprep.subr.mxu0 %v551
        %623 = vmatpush1.msra.mxu0 %v550
        %624 = vmatprep.subr.mxu0 %v555
        %625 = vmatpush1.msra.mxu0 %v554
        %626 = vmatprep.subr.mxu0 %v559
        %627 = vmatpush1.msra.mxu0 %v558
        %628 = vmatprep.subr.mxu0 %v563
        %629 = vmatpush1.msra.mxu0 %v562
        %630 = vmatprep.subr.mxu0 %v567
        %631 = vmatpush1.msra.mxu0 %v566
        %632 = vmatprep.subr.mxu0 %v571
        %633 = vmatpush1.msra.mxu0 %v570
        %634 = vmatprep.subr.mxu0 %v575
        %635 = vmatpush1.msra.mxu0 %v574
        %636 = vmatprep.subr.mxu0 %v579
        %637 = vmatpush1.msra.mxu0 %v578
        %638 = vmatprep.subr.mxu0 %v583
        %639 = vmatpush1.msra.mxu0 %v582
        %640 = vmatprep.subr.mxu0 %v587
        %641 = vmatpush1.msra.mxu0 %v586
        %642 = vmatprep.subr.mxu0 %v591
        %643 = vmatpush1.msra.mxu0 %v590
        %644 = vmatprep.subr.mxu0 %v595
        %645 = vmatpush1.msra.mxu0 %v594
        %646 = vmatprep.subr.mxu0 %v599
        %647 = vmatpush1.msra.mxu0 %v598
        %648 = vmatprep.subr.mxu0 %v603
        %649 = vmatpush1.msra.mxu0 %v602
        %650 = vmatprep.subr.mxu0 %v607
        %651 = vmatpush1.msra.mxu0 %v606
        %652 = vmatprep.subr.mxu0 0.0
        %653 = vmatpush1.msra.mxu0 0.0
        %654 = vmatprep.subr.mxu0 0.0
        %655 = vmatpush1.msra.mxu0 0.0
        %656 = vmatprep.subr.mxu0 0.0
        %657 = vmatpush1.msra.mxu0 0.0
        %658 = vmatprep.subr.mxu0 0.0
        %659 = vmatpush1.msra.mxu0 0.0
        %660 = vmatprep.subr.mxu0 0.0
        %661 = vmatpush1.msra.mxu0 0.0
        %662 = vmatprep.subr.mxu0 0.0
        %663 = vmatpush1.msra.mxu0 0.0
        %664 = vmatprep.subr.mxu0 0.0
        %665 = vmatpush1.msra.mxu0 0.0
        %666 = vmatprep.subr.mxu0 0.0
        %667 = vmatpush1.msra.mxu0 0.0
        %668 = vmatprep.subr.mxu0 0.0
        %669 = vmatpush1.msra.mxu0 0.0
        %670 = vmatprep.subr.mxu0 0.0
        %671 = vmatpush1.msra.mxu0 0.0
        %672 = vmatprep.subr.mxu0 0.0
        %673 = vmatpush1.msra.mxu0 0.0
        %674 = vmatprep.subr.mxu0 0.0
        %675 = vmatpush1.msra.mxu0 0.0
        %676 = vmatprep.subr.mxu0 0.0
        %677 = vmatpush1.msra.mxu0 0.0
        %678 = vmatprep.subr.mxu0 0.0
        %679 = vmatpush1.msra.mxu0 0.0
        %680 = vmatprep.subr.mxu0 0.0
        %681 = vmatpush1.msra.mxu0 0.0
        %682 = vmatprep.subr.mxu0 0.0
        %683 = vmatpush1.msra.mxu0 0.0
        %684 = vmatprep.mubr.f32.mxu0 0.0
        %685 = vmatmul.mubr.f32.gmra.mrb[0].mxu0 %v618
        %v686 = vpop.f32.mrb[0].mxu0
        %v687 = vadd.f32 0.0, %v686
        %v688 = vpop.f32.mrb[0].mxu0
        %v689 = vadd.f32 0.0, %v688
        %690 = vdwg.mxu0
        %691 = vmatprep.subr.mxu0 %v549
        %692 = vmatpush1.msra.mxu0 %v548
        %693 = vmatprep.subr.mxu0 %v553
        %694 = vmatpush1.msra.mxu0 %v552
        %695 = vmatprep.subr.mxu0 %v557
        %696 = vmatpush1.msra.mxu0 %v556
        %697 = vmatprep.subr.mxu0 %v561
        %698 = vmatpush1.msra.mxu0 %v560
        %699 = vmatprep.subr.mxu0 %v565
        %700 = vmatpush1.msra.mxu0 %v564
        %701 = vmatprep.subr.mxu0 %v569
        %702 = vmatpush1.msra.mxu0 %v568
        %703 = vmatprep.subr.mxu0 %v573
        %704 = vmatpush1.msra.mxu0 %v572
        %705 = vmatprep.subr.mxu0 %v577
        %706 = vmatpush1.msra.mxu0 %v576
        %707 = vmatprep.subr.mxu0 %v581
        %708 = vmatpush1.msra.mxu0 %v580
        %709 = vmatprep.subr.mxu0 %v585
        %710 = vmatpush1.msra.mxu0 %v584
        %711 = vmatprep.subr.mxu0 %v589
        %712 = vmatpush1.msra.mxu0 %v588
        %713 = vmatprep.subr.mxu0 %v593
        %714 = vmatpush1.msra.mxu0 %v592
        %715 = vmatprep.subr.mxu0 %v597
        %716 = vmatpush1.msra.mxu0 %v596
        %717 = vmatprep.subr.mxu0 %v601
        %718 = vmatpush1.msra.mxu0 %v600
        %719 = vmatprep.subr.mxu0 %v605
        %720 = vmatpush1.msra.mxu0 %v604
        %721 = vmatprep.subr.mxu0 %v609
        %722 = vmatpush1.msra.mxu0 %v608
        %723 = vmatprep.subr.mxu0 0.0
        %724 = vmatpush1.msra.mxu0 0.0
        %725 = vmatprep.subr.mxu0 0.0
        %726 = vmatpush1.msra.mxu0 0.0
        %727 = vmatprep.subr.mxu0 0.0
        %728 = vmatpush1.msra.mxu0 0.0
        %729 = vmatprep.subr.mxu0 0.0
        %730 = vmatpush1.msra.mxu0 0.0
        %731 = vmatprep.subr.mxu0 0.0
        %732 = vmatpush1.msra.mxu0 0.0
        %733 = vmatprep.subr.mxu0 0.0
        %734 = vmatpush1.msra.mxu0 0.0
        %735 = vmatprep.subr.mxu0 0.0
        %736 = vmatpush1.msra.mxu0 0.0
        %737 = vmatprep.subr.mxu0 0.0
        %738 = vmatpush1.msra.mxu0 0.0
        %739 = vmatprep.subr.mxu0 0.0
        %740 = vmatpush1.msra.mxu0 0.0
        %741 = vmatprep.subr.mxu0 0.0
        %742 = vmatpush1.msra.mxu0 0.0
        %743 = vmatprep.subr.mxu0 0.0
        %744 = vmatpush1.msra.mxu0 0.0
        %745 = vmatprep.subr.mxu0 0.0
        %746 = vmatpush1.msra.mxu0 0.0
        %747 = vmatprep.subr.mxu0 0.0
        %748 = vmatpush1.msra.mxu0 0.0
        %749 = vmatprep.subr.mxu0 0.0
        %750 = vmatpush1.msra.mxu0 0.0
        %751 = vmatprep.subr.mxu0 0.0
        %752 = vmatpush1.msra.mxu0 0.0
        %753 = vmatprep.subr.mxu0 0.0
        %754 = vmatpush1.msra.mxu0 0.0
        %755 = vmatprep.mubr.f32.mxu0 0.0
        %756 = vmatmul.mubr.f32.gmra.mrb[0].mxu0 %v618
        %v757 = vpop.f32.mrb[0].mxu0
        %v758 = vadd.f32 0.0, %v757
        %v759 = vpop.f32.mrb[0].mxu0
        %v760 = vadd.f32 0.0, %v759
        %761 = vdwg.mxu0
        %v766 = vcombine.low %v687, %v689
        %v767 = vcombine.low %v758, %v760
        %v769 = vunpack.c.l.s4 1983009808
        %v770 = vunpack.c.0.s8 %v769
        %v771 = vlaneseq
        %v772 = vshrl.u32 %v771, 7
        %v773 = vsub.s32 %v770, %v772
        %v774 = vrot.slane %v766, %v773
        %v776 = vunpack.c.l.s4 1983009808
        %v777 = vunpack.c.0.s8 %v776
        %v778 = vlaneseq
        %v779 = vshrl.u32 %v778, 7
        %v780 = vsub.s32 %v777, %v779
        %v781 = vrot.slane %v767, %v780
        %v782 = vcombine.low %v774, %v781
        %v784 = vadd.f32 %v544, %v782
        %785 = vst [vmem:[#allocation2] sm:$0xff] %v784
        %v786 = vld [vmem:[#allocation2] sm:$0xff]
        %s787 = scalar_lea.vmem [#allocation8], 1024
        %v788 = vld [vmem:[%s787] sm:$0xff]
        %v789 = vld [vmem:[%s787 + $0x8] sm:$0xff]
        %v790 = vld [vmem:[%s787 + $0x10] sm:$0xff]
        %v791 = vld [vmem:[%s787 + $0x18] sm:$0xff]
        %v792 = vld [vmem:[%s787 + $0x20] sm:$0xff]
        %v793 = vld [vmem:[%s787 + $0x28] sm:$0xff]
        %v794 = vld [vmem:[%s787 + $0x30] sm:$0xff]
        %v795 = vld [vmem:[%s787 + $0x38] sm:$0xff]
        %v796 = vld [vmem:[%s787 + $0x40] sm:$0xff]
        %v797 = vld [vmem:[%s787 + $0x48] sm:$0xff]
        %v798 = vld [vmem:[%s787 + $0x50] sm:$0xff]
        %v799 = vld [vmem:[%s787 + $0x58] sm:$0xff]
        %v800 = vld [vmem:[%s787 + $0x60] sm:$0xff]
        %v801 = vld [vmem:[%s787 + $0x68] sm:$0xff]
        %v802 = vld [vmem:[%s787 + $0x70] sm:$0xff]
        %v803 = vld [vmem:[%s787 + $0x78] sm:$0xff]
        %v804 = vld [vmem:[%s787 + $0x80] sm:$0xff]
        %v805 = vld [vmem:[%s787 + $0x88] sm:$0xff]
        %v806 = vld [vmem:[%s787 + $0x90] sm:$0xff]
        %v807 = vld [vmem:[%s787 + $0x98] sm:$0xff]
        %v808 = vld [vmem:[%s787 + $0xa0] sm:$0xff]
        %v809 = vld [vmem:[%s787 + $0xa8] sm:$0xff]
        %v810 = vld [vmem:[%s787 + $0xb0] sm:$0xff]
        %v811 = vld [vmem:[%s787 + $0xb8] sm:$0xff]
        %v812 = vld [vmem:[%s787 + $0xc0] sm:$0xff]
        %v813 = vld [vmem:[%s787 + $0xc8] sm:$0xff]
        %v814 = vld [vmem:[%s787 + $0xd0] sm:$0xff]
        %v815 = vld [vmem:[%s787 + $0xd8] sm:$0xff]
        %v816 = vld [vmem:[%s787 + $0xe0] sm:$0xff]
        %v817 = vld [vmem:[%s787 + $0xe8] sm:$0xff]
        %v818 = vld [vmem:[%s787 + $0xf0] sm:$0xff]
        %v819 = vld [vmem:[%s787 + $0xf8] sm:$0xff]
        %v820 = vld [vmem:[%s787 + $0x100] sm:$0xff]
        %v821 = vld [vmem:[%s787 + $0x108] sm:$0xff]
        %v822 = vld [vmem:[%s787 + $0x110] sm:$0xff]
        %v823 = vld [vmem:[%s787 + $0x118] sm:$0xff]
        %v824 = vld [vmem:[%s787 + $0x120] sm:$0xff]
        %v825 = vld [vmem:[%s787 + $0x128] sm:$0xff]
        %v826 = vld [vmem:[%s787 + $0x130] sm:$0xff]
        %v827 = vld [vmem:[%s787 + $0x138] sm:$0xff]
        %v828 = vld [vmem:[%s787 + $0x140] sm:$0xff]
        %v829 = vld [vmem:[%s787 + $0x148] sm:$0xff]
        %v830 = vld [vmem:[%s787 + $0x150] sm:$0xff]
        %v831 = vld [vmem:[%s787 + $0x158] sm:$0xff]
        %v832 = vld [vmem:[%s787 + $0x160] sm:$0xff]
        %v833 = vld [vmem:[%s787 + $0x168] sm:$0xff]
        %v834 = vld [vmem:[%s787 + $0x170] sm:$0xff]
        %v835 = vld [vmem:[%s787 + $0x178] sm:$0xff]
        %v836 = vld [vmem:[%s787 + $0x180] sm:$0xff]
        %v837 = vld [vmem:[%s787 + $0x188] sm:$0xff]
        %v838 = vld [vmem:[%s787 + $0x190] sm:$0xff]
        %v839 = vld [vmem:[%s787 + $0x198] sm:$0xff]
        %v840 = vld [vmem:[%s787 + $0x1a0] sm:$0xff]
        %v841 = vld [vmem:[%s787 + $0x1a8] sm:$0xff]
        %v842 = vld [vmem:[%s787 + $0x1b0] sm:$0xff]
        %v843 = vld [vmem:[%s787 + $0x1b8] sm:$0xff]
        %v844 = vld [vmem:[%s787 + $0x1c0] sm:$0xff]
        %v845 = vld [vmem:[%s787 + $0x1c8] sm:$0xff]
        %v846 = vld [vmem:[%s787 + $0x1d0] sm:$0xff]
        %v847 = vld [vmem:[%s787 + $0x1d8] sm:$0xff]
        %v848 = vld [vmem:[%s787 + $0x1e0] sm:$0xff]
        %v849 = vld [vmem:[%s787 + $0x1e8] sm:$0xff]
        %v850 = vld [vmem:[%s787 + $0x1f0] sm:$0xff]
        %v851 = vld [vmem:[%s787 + $0x1f8] sm:$0xff]
        %v852 = vlaneseq
        %v853 = vshrl.u32 %v852, 7
        %v854 = vsub.s32 2, %v853
        %v855 = vrot.slane %v299, %v854
        %v856 = vlaneseq
        %v857 = vshrl.u32 %v856, 7
        %v858 = vsub.s32 2, %v857
        %v859 = vrot.slane %v303, %v858
        %v860 = vsel %vm376, %v859, %v855
        %862 = vmatprep.subr.mxu0 %v789
        %863 = vmatpush1.msra.mxu0 %v788
        %864 = vmatprep.subr.mxu0 %v793
        %865 = vmatpush1.msra.mxu0 %v792
        %866 = vmatprep.subr.mxu0 %v797
        %867 = vmatpush1.msra.mxu0 %v796
        %868 = vmatprep.subr.mxu0 %v801
        %869 = vmatpush1.msra.mxu0 %v800
        %870 = vmatprep.subr.mxu0 %v805
        %871 = vmatpush1.msra.mxu0 %v804
        %872 = vmatprep.subr.mxu0 %v809
        %873 = vmatpush1.msra.mxu0 %v808
        %874 = vmatprep.subr.mxu0 %v813
        %875 = vmatpush1.msra.mxu0 %v812
        %876 = vmatprep.subr.mxu0 %v817
        %877 = vmatpush1.msra.mxu0 %v816
        %878 = vmatprep.subr.mxu0 %v821
        %879 = vmatpush1.msra.mxu0 %v820
        %880 = vmatprep.subr.mxu0 %v825
        %881 = vmatpush1.msra.mxu0 %v824
        %882 = vmatprep.subr.mxu0 %v829
        %883 = vmatpush1.msra.mxu0 %v828
        %884 = vmatprep.subr.mxu0 %v833
        %885 = vmatpush1.msra.mxu0 %v832
        %886 = vmatprep.subr.mxu0 %v837
        %887 = vmatpush1.msra.mxu0 %v836
        %888 = vmatprep.subr.mxu0 %v841
        %889 = vmatpush1.msra.mxu0 %v840
        %890 = vmatprep.subr.mxu0 %v845
        %891 = vmatpush1.msra.mxu0 %v844
        %892 = vmatprep.subr.mxu0 %v849
        %893 = vmatpush1.msra.mxu0 %v848
        %894 = vmatprep.subr.mxu0 0.0
        %895 = vmatpush1.msra.mxu0 0.0
        %896 = vmatprep.subr.mxu0 0.0
        %897 = vmatpush1.msra.mxu0 0.0
        %898 = vmatprep.subr.mxu0 0.0
        %899 = vmatpush1.msra.mxu0 0.0
        %900 = vmatprep.subr.mxu0 0.0
        %901 = vmatpush1.msra.mxu0 0.0
        %902 = vmatprep.subr.mxu0 0.0
        %903 = vmatpush1.msra.mxu0 0.0
        %904 = vmatprep.subr.mxu0 0.0
        %905 = vmatpush1.msra.mxu0 0.0
        %906 = vmatprep.subr.mxu0 0.0
        %907 = vmatpush1.msra.mxu0 0.0
        %908 = vmatprep.subr.mxu0 0.0
        %909 = vmatpush1.msra.mxu0 0.0
        %910 = vmatprep.subr.mxu0 0.0
        %911 = vmatpush1.msra.mxu0 0.0
        %912 = vmatprep.subr.mxu0 0.0
        %913 = vmatpush1.msra.mxu0 0.0
        %914 = vmatprep.subr.mxu0 0.0
        %915 = vmatpush1.msra.mxu0 0.0
        %916 = vmatprep.subr.mxu0 0.0
        %917 = vmatpush1.msra.mxu0 0.0
        %918 = vmatprep.subr.mxu0 0.0
        %919 = vmatpush1.msra.mxu0 0.0
        %920 = vmatprep.subr.mxu0 0.0
        %921 = vmatpush1.msra.mxu0 0.0
        %922 = vmatprep.subr.mxu0 0.0
        %923 = vmatpush1.msra.mxu0 0.0
        %924 = vmatprep.subr.mxu0 0.0
        %925 = vmatpush1.msra.mxu0 0.0
        %926 = vmatprep.mubr.f32.mxu0 0.0
        %927 = vmatmul.mubr.f32.gmra.mrb[0].mxu0 %v860
        %v928 = vpop.f32.mrb[0].mxu0
        %v929 = vadd.f32 0.0, %v928
        %v930 = vpop.f32.mrb[0].mxu0
        %v931 = vadd.f32 0.0, %v930
        %932 = vdwg.mxu0
        %933 = vmatprep.subr.mxu0 %v791
        %934 = vmatpush1.msra.mxu0 %v790
        %935 = vmatprep.subr.mxu0 %v795
        %936 = vmatpush1.msra.mxu0 %v794
        %937 = vmatprep.subr.mxu0 %v799
        %938 = vmatpush1.msra.mxu0 %v798
        %939 = vmatprep.subr.mxu0 %v803
        %940 = vmatpush1.msra.mxu0 %v802
        %941 = vmatprep.subr.mxu0 %v807
        %942 = vmatpush1.msra.mxu0 %v806
        %943 = vmatprep.subr.mxu0 %v811
        %944 = vmatpush1.msra.mxu0 %v810
        %945 = vmatprep.subr.mxu0 %v815
        %946 = vmatpush1.msra.mxu0 %v814
        %947 = vmatprep.subr.mxu0 %v819
        %948 = vmatpush1.msra.mxu0 %v818
        %949 = vmatprep.subr.mxu0 %v823
        %950 = vmatpush1.msra.mxu0 %v822
        %951 = vmatprep.subr.mxu0 %v827
        %952 = vmatpush1.msra.mxu0 %v826
        %953 = vmatprep.subr.mxu0 %v831
        %954 = vmatpush1.msra.mxu0 %v830
        %955 = vmatprep.subr.mxu0 %v835
        %956 = vmatpush1.msra.mxu0 %v834
        %957 = vmatprep.subr.mxu0 %v839
        %958 = vmatpush1.msra.mxu0 %v838
        %959 = vmatprep.subr.mxu0 %v843
        %960 = vmatpush1.msra.mxu0 %v842
        %961 = vmatprep.subr.mxu0 %v847
        %962 = vmatpush1.msra.mxu0 %v846
        %963 = vmatprep.subr.mxu0 %v851
        %964 = vmatpush1.msra.mxu0 %v850
        %965 = vmatprep.subr.mxu0 0.0
        %966 = vmatpush1.msra.mxu0 0.0
        %967 = vmatprep.subr.mxu0 0.0
        %968 = vmatpush1.msra.mxu0 0.0
        %969 = vmatprep.subr.mxu0 0.0
        %970 = vmatpush1.msra.mxu0 0.0
        %971 = vmatprep.subr.mxu0 0.0
        %972 = vmatpush1.msra.mxu0 0.0
        %973 = vmatprep.subr.mxu0 0.0
        %974 = vmatpush1.msra.mxu0 0.0
        %975 = vmatprep.subr.mxu0 0.0
        %976 = vmatpush1.msra.mxu0 0.0
        %977 = vmatprep.subr.mxu0 0.0
        %978 = vmatpush1.msra.mxu0 0.0
        %979 = vmatprep.subr.mxu0 0.0
        %980 = vmatpush1.msra.mxu0 0.0
        %981 = vmatprep.subr.mxu0 0.0
        %982 = vmatpush1.msra.mxu0 0.0
        %983 = vmatprep.subr.mxu0 0.0
        %984 = vmatpush1.msra.mxu0 0.0
        %985 = vmatprep.subr.mxu0 0.0
        %986 = vmatpush1.msra.mxu0 0.0
        %987 = vmatprep.subr.mxu0 0.0
        %988 = vmatpush1.msra.mxu0 0.0
        %989 = vmatprep.subr.mxu0 0.0
        %990 = vmatpush1.msra.mxu0 0.0
        %991 = vmatprep.subr.mxu0 0.0
        %992 = vmatpush1.msra.mxu0 0.0
        %993 = vmatprep.subr.mxu0 0.0
        %994 = vmatpush1.msra.mxu0 0.0
        %995 = vmatprep.subr.mxu0 0.0
        %996 = vmatpush1.msra.mxu0 0.0
        %997 = vmatprep.mubr.f32.mxu0 0.0
        %998 = vmatmul.mubr.f32.gmra.mrb[0].mxu0 %v860
        %v999 = vpop.f32.mrb[0].mxu0
        %v1000 = vadd.f32 0.0, %v999
        %v1001 = vpop.f32.mrb[0].mxu0
        %v1002 = vadd.f32 0.0, %v1001
        %1003 = vdwg.mxu0
        %v1008 = vcombine.low %v929, %v931
        %v1009 = vcombine.low %v1000, %v1002
        %v1011 = vunpack.c.l.s4 1983009808
        %v1012 = vunpack.c.0.s8 %v1011
        %v1013 = vlaneseq
        %v1014 = vshrl.u32 %v1013, 7
        %v1015 = vsub.s32 %v1012, %v1014
        %v1016 = vrot.slane %v1008, %v1015
        %v1018 = vunpack.c.l.s4 1983009808
        %v1019 = vunpack.c.0.s8 %v1018
        %v1020 = vlaneseq
        %v1021 = vshrl.u32 %v1020, 7
        %v1022 = vsub.s32 %v1019, %v1021
        %v1023 = vrot.slane %v1009, %v1022
        %v1024 = vcombine.low %v1016, %v1023
        %v1026 = vadd.f32 %v786, %v1024
        %1027 = vst [vmem:[#allocation2] sm:$0xff] %v1026
        %v1028 = vld [vmem:[#allocation2] sm:$0xff]
        %s1029 = scalar_lea.vmem [#allocation8], 1536
        %v1030 = vld [vmem:[%s1029] sm:$0xff]
        %v1031 = vld [vmem:[%s1029 + $0x8] sm:$0xff]
        %v1032 = vld [vmem:[%s1029 + $0x10] sm:$0xff]
        %v1033 = vld [vmem:[%s1029 + $0x18] sm:$0xff]
        %v1034 = vld [vmem:[%s1029 + $0x20] sm:$0xff]
        %v1035 = vld [vmem:[%s1029 + $0x28] sm:$0xff]
        %v1036 = vld [vmem:[%s1029 + $0x30] sm:$0xff]
        %v1037 = vld [vmem:[%s1029 + $0x38] sm:$0xff]
        %v1038 = vld [vmem:[%s1029 + $0x40] sm:$0xff]
        %v1039 = vld [vmem:[%s1029 + $0x48] sm:$0xff]
        %v1040 = vld [vmem:[%s1029 + $0x50] sm:$0xff]
        %v1041 = vld [vmem:[%s1029 + $0x58] sm:$0xff]
        %v1042 = vld [vmem:[%s1029 + $0x60] sm:$0xff]
        %v1043 = vld [vmem:[%s1029 + $0x68] sm:$0xff]
        %v1044 = vld [vmem:[%s1029 + $0x70] sm:$0xff]
        %v1045 = vld [vmem:[%s1029 + $0x78] sm:$0xff]
        %v1046 = vld [vmem:[%s1029 + $0x80] sm:$0xff]
        %v1047 = vld [vmem:[%s1029 + $0x88] sm:$0xff]
        %v1048 = vld [vmem:[%s1029 + $0x90] sm:$0xff]
        %v1049 = vld [vmem:[%s1029 + $0x98] sm:$0xff]
        %v1050 = vld [vmem:[%s1029 + $0xa0] sm:$0xff]
        %v1051 = vld [vmem:[%s1029 + $0xa8] sm:$0xff]
        %v1052 = vld [vmem:[%s1029 + $0xb0] sm:$0xff]
        %v1053 = vld [vmem:[%s1029 + $0xb8] sm:$0xff]
        %v1054 = vld [vmem:[%s1029 + $0xc0] sm:$0xff]
        %v1055 = vld [vmem:[%s1029 + $0xc8] sm:$0xff]
        %v1056 = vld [vmem:[%s1029 + $0xd0] sm:$0xff]
        %v1057 = vld [vmem:[%s1029 + $0xd8] sm:$0xff]
        %v1058 = vld [vmem:[%s1029 + $0xe0] sm:$0xff]
        %v1059 = vld [vmem:[%s1029 + $0xe8] sm:$0xff]
        %v1060 = vld [vmem:[%s1029 + $0xf0] sm:$0xff]
        %v1061 = vld [vmem:[%s1029 + $0xf8] sm:$0xff]
        %v1062 = vld [vmem:[%s1029 + $0x100] sm:$0xff]
        %v1063 = vld [vmem:[%s1029 + $0x108] sm:$0xff]
        %v1064 = vld [vmem:[%s1029 + $0x110] sm:$0xff]
        %v1065 = vld [vmem:[%s1029 + $0x118] sm:$0xff]
        %v1066 = vld [vmem:[%s1029 + $0x120] sm:$0xff]
        %v1067 = vld [vmem:[%s1029 + $0x128] sm:$0xff]
        %v1068 = vld [vmem:[%s1029 + $0x130] sm:$0xff]
        %v1069 = vld [vmem:[%s1029 + $0x138] sm:$0xff]
        %v1070 = vld [vmem:[%s1029 + $0x140] sm:$0xff]
        %v1071 = vld [vmem:[%s1029 + $0x148] sm:$0xff]
        %v1072 = vld [vmem:[%s1029 + $0x150] sm:$0xff]
        %v1073 = vld [vmem:[%s1029 + $0x158] sm:$0xff]
        %v1074 = vld [vmem:[%s1029 + $0x160] sm:$0xff]
        %v1075 = vld [vmem:[%s1029 + $0x168] sm:$0xff]
        %v1076 = vld [vmem:[%s1029 + $0x170] sm:$0xff]
        %v1077 = vld [vmem:[%s1029 + $0x178] sm:$0xff]
        %v1078 = vld [vmem:[%s1029 + $0x180] sm:$0xff]
        %v1079 = vld [vmem:[%s1029 + $0x188] sm:$0xff]
        %v1080 = vld [vmem:[%s1029 + $0x190] sm:$0xff]
        %v1081 = vld [vmem:[%s1029 + $0x198] sm:$0xff]
        %v1082 = vld [vmem:[%s1029 + $0x1a0] sm:$0xff]
        %v1083 = vld [vmem:[%s1029 + $0x1a8] sm:$0xff]
        %v1084 = vld [vmem:[%s1029 + $0x1b0] sm:$0xff]
        %v1085 = vld [vmem:[%s1029 + $0x1b8] sm:$0xff]
        %v1086 = vld [vmem:[%s1029 + $0x1c0] sm:$0xff]
        %v1087 = vld [vmem:[%s1029 + $0x1c8] sm:$0xff]
        %v1088 = vld [vmem:[%s1029 + $0x1d0] sm:$0xff]
        %v1089 = vld [vmem:[%s1029 + $0x1d8] sm:$0xff]
        %v1090 = vld [vmem:[%s1029 + $0x1e0] sm:$0xff]
        %v1091 = vld [vmem:[%s1029 + $0x1e8] sm:$0xff]
        %v1092 = vld [vmem:[%s1029 + $0x1f0] sm:$0xff]
        %v1093 = vld [vmem:[%s1029 + $0x1f8] sm:$0xff]
        %v1094 = vlaneseq
        %v1095 = vshrl.u32 %v1094, 7
        %v1096 = vsub.s32 3, %v1095
        %v1097 = vrot.slane %v299, %v1096
        %v1098 = vlaneseq
        %v1099 = vshrl.u32 %v1098, 7
        %v1100 = vsub.s32 3, %v1099
        %v1101 = vrot.slane %v303, %v1100
        %v1102 = vsel %vm376, %v1101, %v1097
        %1104 = vmatprep.subr.mxu0 %v1031
        %1105 = vmatpush1.msra.mxu0 %v1030
        %1106 = vmatprep.subr.mxu0 %v1035
        %1107 = vmatpush1.msra.mxu0 %v1034
        %1108 = vmatprep.subr.mxu0 %v1039
        %1109 = vmatpush1.msra.mxu0 %v1038
        %1110 = vmatprep.subr.mxu0 %v1043
        %1111 = vmatpush1.msra.mxu0 %v1042
        %1112 = vmatprep.subr.mxu0 %v1047
        %1113 = vmatpush1.msra.mxu0 %v1046
        %1114 = vmatprep.subr.mxu0 %v1051
        %1115 = vmatpush1.msra.mxu0 %v1050
        %1116 = vmatprep.subr.mxu0 %v1055
        %1117 = vmatpush1.msra.mxu0 %v1054
        %1118 = vmatprep.subr.mxu0 %v1059
        %1119 = vmatpush1.msra.mxu0 %v1058
        %1120 = vmatprep.subr.mxu0 %v1063
        %1121 = vmatpush1.msra.mxu0 %v1062
        %1122 = vmatprep.subr.mxu0 %v1067
        %1123 = vmatpush1.msra.mxu0 %v1066
        %1124 = vmatprep.subr.mxu0 %v1071
        %1125 = vmatpush1.msra.mxu0 %v1070
        %1126 = vmatprep.subr.mxu0 %v1075
        %1127 = vmatpush1.msra.mxu0 %v1074
        %1128 = vmatprep.subr.mxu0 %v1079
        %1129 = vmatpush1.msra.mxu0 %v1078
        %1130 = vmatprep.subr.mxu0 %v1083
        %1131 = vmatpush1.msra.mxu0 %v1082
        %1132 = vmatprep.subr.mxu0 %v1087
        %1133 = vmatpush1.msra.mxu0 %v1086
        %1134 = vmatprep.subr.mxu0 %v1091
        %1135 = vmatpush1.msra.mxu0 %v1090
        %1136 = vmatprep.subr.mxu0 0.0
        %1137 = vmatpush1.msra.mxu0 0.0
        %1138 = vmatprep.subr.mxu0 0.0
        %1139 = vmatpush1.msra.mxu0 0.0
        %1140 = vmatprep.subr.mxu0 0.0
        %1141 = vmatpush1.msra.mxu0 0.0
        %1142 = vmatprep.subr.mxu0 0.0
        %1143 = vmatpush1.msra.mxu0 0.0
        %1144 = vmatprep.subr.mxu0 0.0
        %1145 = vmatpush1.msra.mxu0 0.0
        %1146 = vmatprep.subr.mxu0 0.0
        %1147 = vmatpush1.msra.mxu0 0.0
        %1148 = vmatprep.subr.mxu0 0.0
        %1149 = vmatpush1.msra.mxu0 0.0
        %1150 = vmatprep.subr.mxu0 0.0
        %1151 = vmatpush1.msra.mxu0 0.0
        %1152 = vmatprep.subr.mxu0 0.0
        %1153 = vmatpush1.msra.mxu0 0.0
        %1154 = vmatprep.subr.mxu0 0.0
        %1155 = vmatpush1.msra.mxu0 0.0
        %1156 = vmatprep.subr.mxu0 0.0
        %1157 = vmatpush1.msra.mxu0 0.0
        %1158 = vmatprep.subr.mxu0 0.0
        %1159 = vmatpush1.msra.mxu0 0.0
        %1160 = vmatprep.subr.mxu0 0.0
        %1161 = vmatpush1.msra.mxu0 0.0
        %1162 = vmatprep.subr.mxu0 0.0
        %1163 = vmatpush1.msra.mxu0 0.0
        %1164 = vmatprep.subr.mxu0 0.0
        %1165 = vmatpush1.msra.mxu0 0.0
        %1166 = vmatprep.subr.mxu0 0.0
        %1167 = vmatpush1.msra.mxu0 0.0
        %1168 = vmatprep.mubr.f32.mxu0 0.0
        %1169 = vmatmul.mubr.f32.gmra.mrb[0].mxu0 %v1102
        %v1170 = vpop.f32.mrb[0].mxu0
        %v1171 = vadd.f32 0.0, %v1170
        %v1172 = vpop.f32.mrb[0].mxu0
        %v1173 = vadd.f32 0.0, %v1172
        %1174 = vdwg.mxu0
        %1175 = vmatprep.subr.mxu0 %v1033
        %1176 = vmatpush1.msra.mxu0 %v1032
        %1177 = vmatprep.subr.mxu0 %v1037
        %1178 = vmatpush1.msra.mxu0 %v1036
        %1179 = vmatprep.subr.mxu0 %v1041
        %1180 = vmatpush1.msra.mxu0 %v1040
        %1181 = vmatprep.subr.mxu0 %v1045
        %1182 = vmatpush1.msra.mxu0 %v1044
        %1183 = vmatprep.subr.mxu0 %v1049
        %1184 = vmatpush1.msra.mxu0 %v1048
        %1185 = vmatprep.subr.mxu0 %v1053
        %1186 = vmatpush1.msra.mxu0 %v1052
        %1187 = vmatprep.subr.mxu0 %v1057
        %1188 = vmatpush1.msra.mxu0 %v1056
        %1189 = vmatprep.subr.mxu0 %v1061
        %1190 = vmatpush1.msra.mxu0 %v1060
        %1191 = vmatprep.subr.mxu0 %v1065
        %1192 = vmatpush1.msra.mxu0 %v1064
        %1193 = vmatprep.subr.mxu0 %v1069
        %1194 = vmatpush1.msra.mxu0 %v1068
        %1195 = vmatprep.subr.mxu0 %v1073
        %1196 = vmatpush1.msra.mxu0 %v1072
        %1197 = vmatprep.subr.mxu0 %v1077
        %1198 = vmatpush1.msra.mxu0 %v1076
        %1199 = vmatprep.subr.mxu0 %v1081
        %1200 = vmatpush1.msra.mxu0 %v1080
        %1201 = vmatprep.subr.mxu0 %v1085
        %1202 = vmatpush1.msra.mxu0 %v1084
        %1203 = vmatprep.subr.mxu0 %v1089
        %1204 = vmatpush1.msra.mxu0 %v1088
        %1205 = vmatprep.subr.mxu0 %v1093
        %1206 = vmatpush1.msra.mxu0 %v1092
        %1207 = vmatprep.subr.mxu0 0.0
        %1208 = vmatpush1.msra.mxu0 0.0
        %1209 = vmatprep.subr.mxu0 0.0
        %1210 = vmatpush1.msra.mxu0 0.0
        %1211 = vmatprep.subr.mxu0 0.0
        %1212 = vmatpush1.msra.mxu0 0.0
        %1213 = vmatprep.subr.mxu0 0.0
        %1214 = vmatpush1.msra.mxu0 0.0
        %1215 = vmatprep.subr.mxu0 0.0
        %1216 = vmatpush1.msra.mxu0 0.0
        %1217 = vmatprep.subr.mxu0 0.0
        %1218 = vmatpush1.msra.mxu0 0.0
        %1219 = vmatprep.subr.mxu0 0.0
        %1220 = vmatpush1.msra.mxu0 0.0
        %1221 = vmatprep.subr.mxu0 0.0
        %1222 = vmatpush1.msra.mxu0 0.0
        %1223 = vmatprep.subr.mxu0 0.0
        %1224 = vmatpush1.msra.mxu0 0.0
        %1225 = vmatprep.subr.mxu0 0.0
        %1226 = vmatpush1.msra.mxu0 0.0
        %1227 = vmatprep.subr.mxu0 0.0
        %1228 = vmatpush1.msra.mxu0 0.0
        %1229 = vmatprep.subr.mxu0 0.0
        %1230 = vmatpush1.msra.mxu0 0.0
        %1231 = vmatprep.subr.mxu0 0.0
        %1232 = vmatpush1.msra.mxu0 0.0
        %1233 = vmatprep.subr.mxu0 0.0
        %1234 = vmatpush1.msra.mxu0 0.0
        %1235 = vmatprep.subr.mxu0 0.0
        %1236 = vmatpush1.msra.mxu0 0.0
        %1237 = vmatprep.subr.mxu0 0.0
        %1238 = vmatpush1.msra.mxu0 0.0
        %1239 = vmatprep.mubr.f32.mxu0 0.0
        %1240 = vmatmul.mubr.f32.gmra.mrb[0].mxu0 %v1102
        %v1241 = vpop.f32.mrb[0].mxu0
        %v1242 = vadd.f32 0.0, %v1241
        %v1243 = vpop.f32.mrb[0].mxu0
        %v1244 = vadd.f32 0.0, %v1243
        %1245 = vdwg.mxu0
        %v1250 = vcombine.low %v1171, %v1173
        %v1251 = vcombine.low %v1242, %v1244
        %v1253 = vunpack.c.l.s4 1983009808
        %v1254 = vunpack.c.0.s8 %v1253
        %v1255 = vlaneseq
        %v1256 = vshrl.u32 %v1255, 7
        %v1257 = vsub.s32 %v1254, %v1256
        %v1258 = vrot.slane %v1250, %v1257
        %v1260 = vunpack.c.l.s4 1983009808
        %v1261 = vunpack.c.0.s8 %v1260
        %v1262 = vlaneseq
        %v1263 = vshrl.u32 %v1262, 7
        %v1264 = vsub.s32 %v1261, %v1263
        %v1265 = vrot.slane %v1251, %v1264
        %v1266 = vcombine.low %v1258, %v1265
        %v1268 = vadd.f32 %v1028, %v1266
        %1269 = vst [vmem:[#allocation2] sm:$0xff] %v1268
        %v1270 = vld [vmem:[#allocation2] sm:$0xff]
        %1271 = vst [vmem:[%s214] sm:$0xff] %v1270
        %s1272 = sand.u32 %s97, 1
        %s1273 = scalar_lea.sflag [#allocation5], %s1272
        %s1274 = sand.u32 %s97, 1
        %s1275 = smul.addr %s1274, 8
        %s1276 = scalar_lea.vmem [#allocation9], %s1275
        // Predicated region
        $region45: #{tpu_custom_call.1} parent=31 // pred_check
          %p1277 = pneg %p107
        $region46: #{tpu_custom_call.1} parent=31 // pred_check_branch
          %1279 = sbr.rel (%p1277) target = $region48
        $region47: #{tpu_custom_call.1} parent=31 // pred_region
          %s1281 = ssub.s32 128, 128
          %1282 = vsyncadd %s1273, %s1281
          %s1283 = smul.addr %s21, 4
          %s1284 = smul.addr %s1283, 32
          %s1285 = scalar_lea.hbm %s3, %s1284
          %s1287 = sshll.u32 %s1276, 4
          %s1288 = int_to_ptr.vmem [resolvable:$true] %s1287
          %1290 = dma.vmem_to_hbm [thread:$0]  %s1288, 128, %s1285, %s1273
        $region48: #{tpu_custom_call.1} parent=31 // pred_fallthru
          _
      $region32: #{tpu_custom_call.1} parent=5 // pred_fallthru
        _
      %p1291 = scmp.le.s32.totalorder 2, %s16
      // Predicated region
      $region49: #{tpu_custom_call.1} parent=5 // pred_check
        %p1292 = pneg %p1291
      $region50: #{tpu_custom_call.1} parent=5 // pred_check_branch
        %1294 = sbr.rel (%p1292) target = $region52
      $region51: #{tpu_custom_call.1} parent=5 // pred_region
        %s1295 = ssub.s32 %s16, 2
        // Predicated region
        $region53: #{tpu_custom_call.1} parent=51 // pred_check
          %p1296 = pneg %p113
        $region54: #{tpu_custom_call.1} parent=51 // pred_check_branch
          %1298 = sbr.rel (%p1296) target = $region56
        $region55: #{tpu_custom_call.1} parent=51 // pred_region
          %s1299 = sand.u32 %s98, 1
          %s1300 = scalar_lea.sflag [#allocation5], %s1299
          %s1301 = sand.u32 %s98, 1
          %s1302 = smul.addr %s1301, 8
          %s1303 = scalar_lea.vmem [#allocation9], %s1302
          %1304 = dma.done %s1300, 128
        $region56: #{tpu_custom_call.1} parent=51 // pred_fallthru
          _
      $region52: #{tpu_custom_call.1} parent=5 // pred_fallthru
        _
    $region6: #{tpu_custom_call.1} parent=1 // loop_footer
      %s20 = sadd.s32 1, %s16
    $region7: #{tpu_custom_call.1} parent=1 // loop_footer_branch
      %15 = sbr.rel target = $region3
    $region8: #{tpu_custom_call.1} parent=1 // loop_exit
      _
    %1305 = vsyncpa [#allocation4], 1
    %s1306 = scalar_lea.sflag [#allocation4], 1
    %1307 = vsyncpa %s1306, 1
    %1308 = vsyncpa [#allocation7], 1
    %1309 = vsyncpa [#allocation5], 1
    %s1310 = scalar_lea.sflag [#allocation5], 1
    %1311 = vsyncpa %s1310, 1

// kernel: tpu_custom_call.1
$region0: #{tpu_custom_call.1}
  #allocation0 [shape = 'u32[]', space=smem, size = 0x4, offset = 0x4, fixed_abs, tag = 'smem constant byte address 0x4 - core index']
  #allocation1 [shape = 'u32[144,128]{1,0:T(1,128)}', space=vmem, size = 0x12000, scoped, tag = 'internal scratch']
  #allocation2 [shape = 'f32[2,512]{1,0:T(2,128)}', space=vmem, size = 0x1000, scoped, tag = 'scratch operand']
  %s0 = inlined_call_operand.hbm [shape: f32[16,128], index: 0, kind: input, shape index: {}]
  %s1 = inlined_call_operand.hbm [shape: f32[128,128], index: 1, kind: input, shape index: {}]
  %s2 = inlined_call_operand.hbm [shape: f32[4,128,512], index: 2, kind: input, shape index: {}]
  %s3 = inlined_call_operand.hbm [shape: f32[2,2,512], index: 3, kind: output, shape index: {}]
  %s4 = sld [smem:[#allocation0]]
  $region57: #{tpu_custom_call.1} parent=0
    _
  %s6 = ssub.s32 1, %s4
  %s7 = scalar_select 0, %s6, %s4
  $region1: #{tpu_custom_call.1} parent=0
    #allocation3 [shape = 'u8[8192]{0}', space=vmem, size = 0x2000, scoped, tag = 'input window, operand 0']
    #allocation4 [shape = 's32[2]{0}', space=sflag, size = 0x8, scoped, tag = 'scoped memory for tpu_custom_call.1']
    #allocation5 [shape = 's32[2]{0}', space=sflag, size = 0x8, scoped, tag = 'scoped memory for tpu_custom_call.1']
    #allocation6 [shape = 'u8[65536]{0}', space=vmem, size = 0x10000, scoped, tag = 'input window, operand 1, single buffered']
    #allocation7 [shape = 's32[1]{0}', space=sflag, size = 0x4, scoped, tag = 'scoped memory for tpu_custom_call.1']
    #allocation8 [shape = 'u8[1048576]{0}', space=vmem, size = 0x100000, scoped, tag = 'input window, operand 2, single buffered']
    #allocation9 [shape = 'u8[8192]{0}', space=vmem, size = 0x2000, scoped, tag = 'output window, operand 0']
    %8 = vsyncpa [#allocation4], 0
    %s9 = scalar_lea.sflag [#allocation4], 1
    %10 = vsyncpa %s9, 0
    %11 = vsyncpa [#allocation7], 0
    %12 = vsyncpa [#allocation5], 0
    %s13 = scalar_lea.sflag [#allocation5], 1
    %14 = vsyncpa %s13, 0
    loop: start=0, step=1, limit=4
    $region2: #{tpu_custom_call.1} parent=1 // loop_pre_header
      _
    $region3: #{tpu_custom_call.1} parent=1 // loop_header
      %s16 = sphi 0, %s20
      %p17 = scmp.ge.s32.totalorder %s16, 4
      %s26 = sphi 0, %s28
      %s29 = sphi 0, %s26
      %s30 = sphi 0, %s29
      %s46 = sphi 0, %s30
      %s50 = sphi 0, %s50
      %s52 = sphi 0, %s50
      %s53 = sphi 0, %s52
      %s67 = sphi 0, %s53
      %s71 = sphi 0, %s71
      %s73 = sphi 0, %s71
      %s74 = sphi 0, %s73
      %s88 = sphi 0, %s74
      %s94 = sphi 0, %s96
      %s97 = sphi 0, %s94
      %s98 = sphi 0, %s97
      %s114 = sphi 0, %s98
    $region4: #{tpu_custom_call.1} parent=1 // loop_header_branch
      %19 = sbr.rel (%p17) target = $region8
    $region5: #{tpu_custom_call.1} parent=1 // loop_body
      %s21 = ssub.s32 %s16, 1
      %s22 = ssub.s32 %s16, 2
      %s23 = sadd.s32 %s16, 1
      %s24 = ssub.s32 %s16, %s23
      %p25 = scmp.eq.s32.totalorder %s24, 0
      %s27 = sadd.s32 %s26, 1
      %s28 = scalar_select %p25, %s26, %s27
      %p31 = pneg %p25
      %p32 = scmp.eq.s32.totalorder %s16, 1
      %p33 = por %p31, %p32
      %p34 = scmp.ne.s32.totalorder %s26, %s29
      %p35 = scmp.eq.s32.totalorder %s16, 0
      %p36 = por %p34, %p35
      %p37 = scmp.ne.s32.totalorder %s26, %s29
      %p38 = scmp.eq.s32.totalorder %s21, 1
      %p39 = por %p37, %p38
      %p40 = scmp.ne.s32.totalorder %s29, %s30
      %p41 = scmp.eq.s32.totalorder %s21, 0
      %p42 = por %p40, %p41
      %p43 = scmp.ne.s32.totalorder %s29, %s30
      %p44 = scmp.eq.s32.totalorder %s22, 1
      %p45 = por %p43, %p44
      %p47 = scmp.ne.s32.totalorder %s30, %s46
      %p48 = scmp.eq.s32.totalorder %s22, 0
      %p49 = por %p47, %p48
      %s51 = sadd.s32 %s50, 1
      %p54 = scmp.eq.s32.totalorder %s16, 1
      %p55 = scmp.ne.s32.totalorder %s50, %s52
      %p56 = scmp.eq.s32.totalorder %s16, 0
      %p57 = por %p55, %p56
      %p58 = scmp.ne.s32.totalorder %s50, %s52
      %p59 = scmp.eq.s32.totalorder %s21, 1
      %p60 = por %p58, %p59
      %p61 = scmp.ne.s32.totalorder %s52, %s53
      %p62 = scmp.eq.s32.totalorder %s21, 0
      %p63 = por %p61, %p62
      %p64 = scmp.ne.s32.totalorder %s52, %s53
      %p65 = scmp.eq.s32.totalorder %s22, 1
      %p66 = por %p64, %p65
      %p68 = scmp.ne.s32.totalorder %s53, %s67
      %p69 = scmp.eq.s32.totalorder %s22, 0
      %p70 = por %p68, %p69
      %s72 = sadd.s32 %s71, 1
      %p75 = scmp.eq.s32.totalorder %s16, 1
      %p76 = scmp.ne.s32.totalorder %s71, %s73
      %p77 = scmp.eq.s32.totalorder %s16, 0
      %p78 = por %p76, %p77
      %p79 = scmp.ne.s32.totalorder %s71, %s73
      %p80 = scmp.eq.s32.totalorder %s21, 1
      %p81 = por %p79, %p80
      %p82 = scmp.ne.s32.totalorder %s73, %s74
      %p83 = scmp.eq.s32.totalorder %s21, 0
      %p84 = por %p82, %p83
      %p85 = scmp.ne.s32.totalorder %s73, %s74
      %p86 = scmp.eq.s32.totalorder %s22, 1
      %p87 = por %p85, %p86
      %p89 = scmp.ne.s32.totalorder %s74, %s88
      %p90 = scmp.eq.s32.totalorder %s22, 0
      %p91 = por %p89, %p90
      %s92 = ssub.s32 %s16, %s23
      %p93 = scmp.eq.s32.totalorder %s92, 0
      %s95 = sadd.s32 %s94, 1
      %s96 = scalar_select %p93, %s94, %s95
      %p99 = pneg %p93
      %p100 = scmp.eq.s32.totalorder %s16, 1
      %p101 = por %p99, %p100
      %p102 = scmp.ne.s32.totalorder %s94, %s97
      %p103 = scmp.eq.s32.totalorder %s16, 0
      %p104 = por %p102, %p103
      %p105 = scmp.ne.s32.totalorder %s94, %s97
      %p106 = scmp.eq.s32.totalorder %s21, 1
      %p107 = por %p105, %p106
      %p108 = scmp.ne.s32.totalorder %s97, %s98
      %p109 = scmp.eq.s32.totalorder %s21, 0
      %p110 = por %p108, %p109
      %p111 = scmp.ne.s32.totalorder %s97, %s98
      %p112 = scmp.eq.s32.totalorder %s22, 1
      %p113 = por %p111, %p112
      %p115 = scmp.ne.s32.totalorder %s98, %s114
      %p116 = scmp.eq.s32.totalorder %s22, 0
      %p117 = por %p115, %p116
      %p118 = scmp.le.s32.totalorder 1, %s16
      %p119 = scmp.lt.s32.totalorder %s16, 3
      %p120 = pnand %p118, %p119
      %p121 = pneg %p120
      // Predicated region
      $region9: #{tpu_custom_call.1} parent=5 // pred_check
        _
      $region10: #{tpu_custom_call.1} parent=5 // pred_check_branch
        %123 = sbr.rel (%p120) target = $region12
      $region11: #{tpu_custom_call.1} parent=5 // pred_region
        %s124 = ssub.s32 %s16, 1
        // Predicated region
        $region13: #{tpu_custom_call.1} parent=11 // pred_check
          %p125 = pneg %p63
        $region14: #{tpu_custom_call.1} parent=11 // pred_check_branch
          %127 = sbr.rel (%p125) target = $region16
        $region15: #{tpu_custom_call.1} parent=11 // pred_region
          %s129 = ssub.s32 2048, 2048
          %130 = vsyncadd [#allocation7], %s129
          %s131 = sshll.u32 [#allocation6], 4
          %s132 = int_to_ptr.vmem [resolvable:$true] %s131
          %137 = dma.hbm_to_vmem [thread:$0]  %s1, 2048, %s132, [#allocation7], 128, 128, 8
        $region16: #{tpu_custom_call.1} parent=11 // pred_fallthru
          _
        // Predicated region
        $region17: #{tpu_custom_call.1} parent=11 // pred_check
          %p138 = pneg %p84
        $region18: #{tpu_custom_call.1} parent=11 // pred_check_branch
          %140 = sbr.rel (%p138) target = $region20
        $region19: #{tpu_custom_call.1} parent=11 // pred_region
          %s142 = ssub.s32 32768, 32768
          %143 = vsyncadd [#allocation7], %s142
          %s144 = sshll.u32 [#allocation8], 4
          %s145 = int_to_ptr.vmem [resolvable:$true] %s144
          %150 = dma.hbm_to_vmem [thread:$0]  %s2, 32768, %s145, [#allocation7], 512, 512, 32
        $region20: #{tpu_custom_call.1} parent=11 // pred_fallthru
          _
      $region12: #{tpu_custom_call.1} parent=5 // pred_fallthru
        _
      %p151 = scmp.lt.s32.totalorder %s16, 2
      // Predicated region
      $region21: #{tpu_custom_call.1} parent=5 // pred_check
        %p152 = pneg %p151
      $region22: #{tpu_custom_call.1} parent=5 // pred_check_branch
        %154 = sbr.rel (%p152) target = $region24
      $region23: #{tpu_custom_call.1} parent=5 // pred_region
        // Predicated region
        $region25: #{tpu_custom_call.1} parent=23 // pred_check
          %p155 = pneg %p36
        $region26: #{tpu_custom_call.1} parent=23 // pred_check_branch
          %157 = sbr.rel (%p155) target = $region28
        $region27: #{tpu_custom_call.1} parent=23 // pred_region
          %s158 = sand.u32 %s26, 1
          %s159 = scalar_lea.sflag [#allocation4], %s158
          %s160 = sand.u32 %s26, 1
          %s161 = smul.addr %s160, 8
          %s162 = scalar_lea.vmem [#allocation3], %s161
          %s164 = ssub.s32 128, 128
          %165 = vsyncadd %s159, %s164
          %s166 = smul.addr %s16, 128
          %s167 = scalar_lea.hbm %s0, %s166
          %s169 = sshll.u32 %s162, 4
          %s170 = int_to_ptr.vmem [resolvable:$true] %s169
          %172 = dma.hbm_to_vmem [thread:$0]  %s167, 128, %s170, %s159
        $region28: #{tpu_custom_call.1} parent=23 // pred_fallthru
          _
      $region24: #{tpu_custom_call.1} parent=5 // pred_fallthru
        _
      %p173 = scmp.le.s32.totalorder 1, %s16
      %p174 = scmp.lt.s32.totalorder %s16, 3
      %p175 = pnand %p173, %p174
      %p176 = pneg %p175
      // Predicated region
      $region29: #{tpu_custom_call.1} parent=5 // pred_check
        _
      $region30: #{tpu_custom_call.1} parent=5 // pred_check_branch
        %178 = sbr.rel (%p175) target = $region32
      $region31: #{tpu_custom_call.1} parent=5 // pred_region
        %s179 = ssub.s32 %s16, 1
        %s180 = sand.u32 %s29, 1
        %s181 = scalar_lea.sflag [#allocation4], %s180
        %s182 = sand.u32 %s29, 1
        %s183 = smul.addr %s182, 8
        %s184 = scalar_lea.vmem [#allocation3], %s183
        // Predicated region
        $region33: #{tpu_custom_call.1} parent=31 // pred_check
          %p185 = pneg %p42
        $region34: #{tpu_custom_call.1} parent=31 // pred_check_branch
          %187 = sbr.rel (%p185) target = $region36
        $region35: #{tpu_custom_call.1} parent=31 // pred_region
          %188 = dma.done %s181, 128
        $region36: #{tpu_custom_call.1} parent=31 // pred_fallthru
          _
        // Predicated region
        $region37: #{tpu_custom_call.1} parent=31 // pred_check
          %p189 = pneg %p63
        $region38: #{tpu_custom_call.1} parent=31 // pred_check_branch
          %191 = sbr.rel (%p189) target = $region40
        $region39: #{tpu_custom_call.1} parent=31 // pred_region
          %192 = dma.done [#allocation7], 2048
        $region40: #{tpu_custom_call.1} parent=31 // pred_fallthru
          _
        // Predicated region
        $region41: #{tpu_custom_call.1} parent=31 // pred_check
          %p193 = pneg %p84
        $region42: #{tpu_custom_call.1} parent=31 // pred_check_branch
          %195 = sbr.rel (%p193) target = $region44
        $region43: #{tpu_custom_call.1} parent=31 // pred_region
          %196 = dma.done [#allocation7], 32768
        $region44: #{tpu_custom_call.1} parent=31 // pred_fallthru
          _
        %s197 = sand.u32 %s29, 1
        %s198 = scalar_lea.sflag [#allocation4], %s197
        %s199 = sand.u32 %s29, 1
        %s200 = smul.addr %s199, 8
        %s201 = scalar_lea.vmem [#allocation3], %s200
        %p202 = pneg %p42
        %p203 = pneg %p39
        %p204 = pneg %p63
        %p205 = pneg %p60
        %p206 = pneg %p84
        %p207 = pneg %p81
        %p208 = pneg %p110
        %p209 = pneg %p107
        %s210 = sand.u32 %s97, 1
        %s211 = scalar_lea.sflag [#allocation5], %s210
        %s212 = sand.u32 %s97, 1
        %s213 = smul.addr %s212, 8
        %s214 = scalar_lea.vmem [#allocation9], %s213
        %v215 = vld [vmem:[%s184] sm:$0xff]
        %v216 = vld [vmem:[#allocation6] sm:$0xff]
        %v217 = vld [vmem:[#allocation6 + $0x8] sm:$0xff]
        %v218 = vld [vmem:[#allocation6 + $0x10] sm:$0xff]
        %v219 = vld [vmem:[#allocation6 + $0x18] sm:$0xff]
        %v220 = vld [vmem:[#allocation6 + $0x20] sm:$0xff]
        %v221 = vld [vmem:[#allocation6 + $0x28] sm:$0xff]
        %v222 = vld [vmem:[#allocation6 + $0x30] sm:$0xff]
        %v223 = vld [vmem:[#allocation6 + $0x38] sm:$0xff]
        %v224 = vld [vmem:[#allocation6 + $0x40] sm:$0xff]
        %v225 = vld [vmem:[#allocation6 + $0x48] sm:$0xff]
        %v226 = vld [vmem:[#allocation6 + $0x50] sm:$0xff]
        %v227 = vld [vmem:[#allocation6 + $0x58] sm:$0xff]
        %v228 = vld [vmem:[#allocation6 + $0x60] sm:$0xff]
        %v229 = vld [vmem:[#allocation6 + $0x68] sm:$0xff]
        %v230 = vld [vmem:[#allocation6 + $0x70] sm:$0xff]
        %v231 = vld [vmem:[#allocation6 + $0x78] sm:$0xff]
        %232 = vmatprep.subr.mxu0 0.0
        %233 = vmatpush1.msra.mxu0 %v216
        %234 = vmatprep.subr.mxu0 0.0
        %235 = vmatpush1.msra.mxu0 %v217
        %236 = vmatprep.subr.mxu0 0.0
        %237 = vmatpush1.msra.mxu0 %v218
        %238 = vmatprep.subr.mxu0 0.0
        %239 = vmatpush1.msra.mxu0 %v219
        %240 = vmatprep.subr.mxu0 0.0
        %241 = vmatpush1.msra.mxu0 %v220
        %242 = vmatprep.subr.mxu0 0.0
        %243 = vmatpush1.msra.mxu0 %v221
        %244 = vmatprep.subr.mxu0 0.0
        %245 = vmatpush1.msra.mxu0 %v222
        %246 = vmatprep.subr.mxu0 0.0
        %247 = vmatpush1.msra.mxu0 %v223
        %248 = vmatprep.subr.mxu0 0.0
        %249 = vmatpush1.msra.mxu0 %v224
        %250 = vmatprep.subr.mxu0 0.0
        %251 = vmatpush1.msra.mxu0 %v225
        %252 = vmatprep.subr.mxu0 0.0
        %253 = vmatpush1.msra.mxu0 %v226
        %254 = vmatprep.subr.mxu0 0.0
        %255 = vmatpush1.msra.mxu0 %v227
        %256 = vmatprep.subr.mxu0 0.0
        %257 = vmatpush1.msra.mxu0 %v228
        %258 = vmatprep.subr.mxu0 0.0
        %259 = vmatpush1.msra.mxu0 %v229
        %260 = vmatprep.subr.mxu0 0.0
        %261 = vmatpush1.msra.mxu0 %v230
        %262 = vmatprep.subr.mxu0 0.0
        %263 = vmatpush1.msra.mxu0 %v231
        %264 = vmatprep.subr.mxu0 0.0
        %265 = vmatpush1.msra.mxu0 0.0
        %266 = vmatprep.subr.mxu0 0.0
        %267 = vmatpush1.msra.mxu0 0.0
        %268 = vmatprep.subr.mxu0 0.0
        %269 = vmatpush1.msra.mxu0 0.0
        %270 = vmatprep.subr.mxu0 0.0
        %271 = vmatpush1.msra.mxu0 0.0
        %272 = vmatprep.subr.mxu0 0.0
        %273 = vmatpush1.msra.mxu0 0.0
        %274 = vmatprep.subr.mxu0 0.0
        %275 = vmatpush1.msra.mxu0 0.0
        %276 = vmatprep.subr.mxu0 0.0
        %277 = vmatpush1.msra.mxu0 0.0
        %278 = vmatprep.subr.mxu0 0.0
        %279 = vmatpush1.msra.mxu0 0.0
        %280 = vmatprep.subr.mxu0 0.0
        %281 = vmatpush1.msra.mxu0 0.0
        %282 = vmatprep.subr.mxu0 0.0
        %283 = vmatpush1.msra.mxu0 0.0
        %284 = vmatprep.subr.mxu0 0.0
        %285 = vmatpush1.msra.mxu0 0.0
        %286 = vmatprep.subr.mxu0 0.0
        %287 = vmatpush1.msra.mxu0 0.0
        %288 = vmatprep.subr.mxu0 0.0
        %289 = vmatpush1.msra.mxu0 0.0
        %290 = vmatprep.subr.mxu0 0.0
        %291 = vmatpush1.msra.mxu0 0.0
        %292 = vmatprep.subr.mxu0 0.0
        %293 = vmatpush1.msra.mxu0 0.0
        %294 = vmatprep.subr.mxu0 0.0
        %295 = vmatpush1.msra.mxu0 0.0
        %296 = vmatprep.mubr.f32.mxu0 0.0
        %297 = vmatmul.mubr.f32.gmra.mrb[0].mxu0 %v215
        %v298 = vpop.f32.mrb[0].mxu0
        %v299 = vadd.f32 0.0, %v298
        %v300 = vpop.f32.mrb[0].mxu0
        %301 = vdwg.mxu0
        %v303 = vcombine.high %v299, %v299
        %v304 = vld [vmem:[#allocation8] sm:$0xff]
        %v305 = vld [vmem:[#allocation8 + $0x8] sm:$0xff]
        %v306 = vld [vmem:[#allocation8 + $0x10] sm:$0xff]
        %v307 = vld [vmem:[#allocation8 + $0x18] sm:$0xff]
        %v308 = vld [vmem:[#allocation8 + $0x20] sm:$0xff]
        %v309 = vld [vmem:[#allocation8 + $0x28] sm:$0xff]
        %v310 = vld [vmem:[#allocation8 + $0x30] sm:$0xff]
        %v311 = vld [vmem:[#allocation8 + $0x38] sm:$0xff]
        %v312 = vld [vmem:[#allocation8 + $0x40] sm:$0xff]
        %v313 = vld [vmem:[#allocation8 + $0x48] sm:$0xff]
        %v314 = vld [vmem:[#allocation8 + $0x50] sm:$0xff]
        %v315 = vld [vmem:[#allocation8 + $0x58] sm:$0xff]
        %v316 = vld [vmem:[#allocation8 + $0x60] sm:$0xff]
        %v317 = vld [vmem:[#allocation8 + $0x68] sm:$0xff]
        %v318 = vld [vmem:[#allocation8 + $0x70] sm:$0xff]
        %v319 = vld [vmem:[#allocation8 + $0x78] sm:$0xff]
        %v320 = vld [vmem:[#allocation8 + $0x80] sm:$0xff]
        %v321 = vld [vmem:[#allocation8 + $0x88] sm:$0xff]
        %v322 = vld [vmem:[#allocation8 + $0x90] sm:$0xff]
        %v323 = vld [vmem:[#allocation8 + $0x98] sm:$0xff]
        %v324 = vld [vmem:[#allocation8 + $0xa0] sm:$0xff]
        %v325 = vld [vmem:[#allocation8 + $0xa8] sm:$0xff]
        %v326 = vld [vmem:[#allocation8 + $0xb0] sm:$0xff]
        %v327 = vld [vmem:[#allocation8 + $0xb8] sm:$0xff]
        %v328 = vld [vmem:[#allocation8 + $0xc0] sm:$0xff]
        %v329 = vld [vmem:[#allocation8 + $0xc8] sm:$0xff]
        %v330 = vld [vmem:[#allocation8 + $0xd0] sm:$0xff]
        %v331 = vld [vmem:[#allocation8 + $0xd8] sm:$0xff]
        %v332 = vld [vmem:[#allocation8 + $0xe0] sm:$0xff]
        %v333 = vld [vmem:[#allocation8 + $0xe8] sm:$0xff]
        %v334 = vld [vmem:[#allocation8 + $0xf0] sm:$0xff]
        %v335 = vld [vmem:[#allocation8 + $0xf8] sm:$0xff]
        %v336 = vld [vmem:[#allocation8 + $0x100] sm:$0xff]
        %v337 = vld [vmem:[#allocation8 + $0x108] sm:$0xff]
        %v338 = vld [vmem:[#allocation8 + $0x110] sm:$0xff]
        %v339 = vld [vmem:[#allocation8 + $0x118] sm:$0xff]
        %v340 = vld [vmem:[#allocation8 + $0x120] sm:$0xff]
        %v341 = vld [vmem:[#allocation8 + $0x128] sm:$0xff]
        %v342 = vld [vmem:[#allocation8 + $0x130] sm:$0xff]
        %v343 = vld [vmem:[#allocation8 + $0x138] sm:$0xff]
        %v344 = vld [vmem:[#allocation8 + $0x140] sm:$0xff]
        %v345 = vld [vmem:[#allocation8 + $0x148] sm:$0xff]
        %v346 = vld [vmem:[#allocation8 + $0x150] sm:$0xff]
        %v347 = vld [vmem:[#allocation8 + $0x158] sm:$0xff]
        %v348 = vld [vmem:[#allocation8 + $0x160] sm:$0xff]
        %v349 = vld [vmem:[#allocation8 + $0x168] sm:$0xff]
        %v350 = vld [vmem:[#allocation8 + $0x170] sm:$0xff]
        %v351 = vld [vmem:[#allocation8 + $0x178] sm:$0xff]
        %v352 = vld [vmem:[#allocation8 + $0x180] sm:$0xff]
        %v353 = vld [vmem:[#allocation8 + $0x188] sm:$0xff]
        %v354 = vld [vmem:[#allocation8 + $0x190] sm:$0xff]
        %v355 = vld [vmem:[#allocation8 + $0x198] sm:$0xff]
        %v356 = vld [vmem:[#allocation8 + $0x1a0] sm:$0xff]
        %v357 = vld [vmem:[#allocation8 + $0x1a8] sm:$0xff]
        %v358 = vld [vmem:[#allocation8 + $0x1b0] sm:$0xff]
        %v359 = vld [vmem:[#allocation8 + $0x1b8] sm:$0xff]
        %v360 = vld [vmem:[#allocation8 + $0x1c0] sm:$0xff]
        %v361 = vld [vmem:[#allocation8 + $0x1c8] sm:$0xff]
        %v362 = vld [vmem:[#allocation8 + $0x1d0] sm:$0xff]
        %v363 = vld [vmem:[#allocation8 + $0x1d8] sm:$0xff]
        %v364 = vld [vmem:[#allocation8 + $0x1e0] sm:$0xff]
        %v365 = vld [vmem:[#allocation8 + $0x1e8] sm:$0xff]
        %v366 = vld [vmem:[#allocation8 + $0x1f0] sm:$0xff]
        %v367 = vld [vmem:[#allocation8 + $0x1f8] sm:$0xff]
        %v368 = vlaneseq
        %v369 = vshrl.u32 %v368, 7
        %v370 = vsub.s32 0, %v369
        %v371 = vrot.slane %v299, %v370
        %v372 = vlaneseq
        %v373 = vshrl.u32 %v372, 7
        %v374 = vsub.s32 0, %v373
        %v375 = vrot.slane %v303, %v374
        %vm376 = vcmask 1041409
        %v377 = vsel %vm376, %v375, %v371
        %379 = vmatprep.subr.mxu0 %v305
        %380 = vmatpush1.msra.mxu0 %v304
        %381 = vmatprep.subr.mxu0 %v309
        %382 = vmatpush1.msra.mxu0 %v308
        %383 = vmatprep.subr.mxu0 %v313
        %384 = vmatpush1.msra.mxu0 %v312
        %385 = vmatprep.subr.mxu0 %v317
        %386 = vmatpush1.msra.mxu0 %v316
        %387 = vmatprep.subr.mxu0 %v321
        %388 = vmatpush1.msra.mxu0 %v320
        %389 = vmatprep.subr.mxu0 %v325
        %390 = vmatpush1.msra.mxu0 %v324
        %391 = vmatprep.subr.mxu0 %v329
        %392 = vmatpush1.msra.mxu0 %v328
        %393 = vmatprep.subr.mxu0 %v333
        %394 = vmatpush1.msra.mxu0 %v332
        %395 = vmatprep.subr.mxu0 %v337
        %396 = vmatpush1.msra.mxu0 %v336
        %397 = vmatprep.subr.mxu0 %v341
        %398 = vmatpush1.msra.mxu0 %v340
        %399 = vmatprep.subr.mxu0 %v345
        %400 = vmatpush1.msra.mxu0 %v344
        %401 = vmatprep.subr.mxu0 %v349
        %402 = vmatpush1.msra.mxu0 %v348
        %403 = vmatprep.subr.mxu0 %v353
        %404 = vmatpush1.msra.mxu0 %v352
        %405 = vmatprep.subr.mxu0 %v357
        %406 = vmatpush1.msra.mxu0 %v356
        %407 = vmatprep.subr.mxu0 %v361
        %408 = vmatpush1.msra.mxu0 %v360
        %409 = vmatprep.subr.mxu0 %v365
        %410 = vmatpush1.msra.mxu0 %v364
        %411 = vmatprep.subr.mxu0 0.0
        %412 = vmatpush1.msra.mxu0 0.0
        %413 = vmatprep.subr.mxu0 0.0
        %414 = vmatpush1.msra.mxu0 0.0
        %415 = vmatprep.subr.mxu0 0.0
        %416 = vmatpush1.msra.mxu0 0.0
        %417 = vmatprep.subr.mxu0 0.0
        %418 = vmatpush1.msra.mxu0 0.0
        %419 = vmatprep.subr.mxu0 0.0
        %420 = vmatpush1.msra.mxu0 0.0
        %421 = vmatprep.subr.mxu0 0.0
        %422 = vmatpush1.msra.mxu0 0.0
        %423 = vmatprep.subr.mxu0 0.0
        %424 = vmatpush1.msra.mxu0 0.0
        %425 = vmatprep.subr.mxu0 0.0
        %426 = vmatpush1.msra.mxu0 0.0
        %427 = vmatprep.subr.mxu0 0.0
        %428 = vmatpush1.msra.mxu0 0.0
        %429 = vmatprep.subr.mxu0 0.0
        %430 = vmatpush1.msra.mxu0 0.0
        %431 = vmatprep.subr.mxu0 0.0
        %432 = vmatpush1.msra.mxu0 0.0
        %433 = vmatprep.subr.mxu0 0.0
        %434 = vmatpush1.msra.mxu0 0.0
        %435 = vmatprep.subr.mxu0 0.0
        %436 = vmatpush1.msra.mxu0 0.0
        %437 = vmatprep.subr.mxu0 0.0
        %438 = vmatpush1.msra.mxu0 0.0
        %439 = vmatprep.subr.mxu0 0.0
        %440 = vmatpush1.msra.mxu0 0.0
        %441 = vmatprep.subr.mxu0 0.0
        %442 = vmatpush1.msra.mxu0 0.0
        %443 = vmatprep.mubr.f32.mxu0 0.0
        %444 = vmatmul.mubr.f32.gmra.mrb[0].mxu0 %v377
        %v445 = vpop.f32.mrb[0].mxu0
        %v446 = vadd.f32 0.0, %v445
        %v447 = vpop.f32.mrb[0].mxu0
        %v448 = vadd.f32 0.0, %v447
        %449 = vdwg.mxu0
        %450 = vmatprep.subr.mxu0 %v307
        %451 = vmatpush1.msra.mxu0 %v306
        %452 = vmatprep.subr.mxu0 %v311
        %453 = vmatpush1.msra.mxu0 %v310
        %454 = vmatprep.subr.mxu0 %v315
        %455 = vmatpush1.msra.mxu0 %v314
        %456 = vmatprep.subr.mxu0 %v319
        %457 = vmatpush1.msra.mxu0 %v318
        %458 = vmatprep.subr.mxu0 %v323
        %459 = vmatpush1.msra.mxu0 %v322
        %460 = vmatprep.subr.mxu0 %v327
        %461 = vmatpush1.msra.mxu0 %v326
        %462 = vmatprep.subr.mxu0 %v331
        %463 = vmatpush1.msra.mxu0 %v330
        %464 = vmatprep.subr.mxu0 %v335
        %465 = vmatpush1.msra.mxu0 %v334
        %466 = vmatprep.subr.mxu0 %v339
        %467 = vmatpush1.msra.mxu0 %v338
        %468 = vmatprep.subr.mxu0 %v343
        %469 = vmatpush1.msra.mxu0 %v342
        %470 = vmatprep.subr.mxu0 %v347
        %471 = vmatpush1.msra.mxu0 %v346
        %472 = vmatprep.subr.mxu0 %v351
        %473 = vmatpush1.msra.mxu0 %v350
        %474 = vmatprep.subr.mxu0 %v355
        %475 = vmatpush1.msra.mxu0 %v354
        %476 = vmatprep.subr.mxu0 %v359
        %477 = vmatpush1.msra.mxu0 %v358
        %478 = vmatprep.subr.mxu0 %v363
        %479 = vmatpush1.msra.mxu0 %v362
        %480 = vmatprep.subr.mxu0 %v367
        %481 = vmatpush1.msra.mxu0 %v366
        %482 = vmatprep.subr.mxu0 0.0
        %483 = vmatpush1.msra.mxu0 0.0
        %484 = vmatprep.subr.mxu0 0.0
        %485 = vmatpush1.msra.mxu0 0.0
        %486 = vmatprep.subr.mxu0 0.0
        %487 = vmatpush1.msra.mxu0 0.0
        %488 = vmatprep.subr.mxu0 0.0
        %489 = vmatpush1.msra.mxu0 0.0
        %490 = vmatprep.subr.mxu0 0.0
        %491 = vmatpush1.msra.mxu0 0.0
        %492 = vmatprep.subr.mxu0 0.0
        %493 = vmatpush1.msra.mxu0 0.0
        %494 = vmatprep.subr.mxu0 0.0
        %495 = vmatpush1.msra.mxu0 0.0
        %496 = vmatprep.subr.mxu0 0.0
        %497 = vmatpush1.msra.mxu0 0.0
        %498 = vmatprep.subr.mxu0 0.0
        %499 = vmatpush1.msra.mxu0 0.0
        %500 = vmatprep.subr.mxu0 0.0
        %501 = vmatpush1.msra.mxu0 0.0
        %502 = vmatprep.subr.mxu0 0.0
        %503 = vmatpush1.msra.mxu0 0.0
        %504 = vmatprep.subr.mxu0 0.0
        %505 = vmatpush1.msra.mxu0 0.0
        %506 = vmatprep.subr.mxu0 0.0
        %507 = vmatpush1.msra.mxu0 0.0
        %508 = vmatprep.subr.mxu0 0.0
        %509 = vmatpush1.msra.mxu0 0.0
        %510 = vmatprep.subr.mxu0 0.0
        %511 = vmatpush1.msra.mxu0 0.0
        %512 = vmatprep.subr.mxu0 0.0
        %513 = vmatpush1.msra.mxu0 0.0
        %514 = vmatprep.mubr.f32.mxu0 0.0
        %515 = vmatmul.mubr.f32.gmra.mrb[0].mxu0 %v377
        %v516 = vpop.f32.mrb[0].mxu0
        %v517 = vadd.f32 0.0, %v516
        %v518 = vpop.f32.mrb[0].mxu0
        %v519 = vadd.f32 0.0, %v518
        %520 = vdwg.mxu0
        %v525 = vcombine.low %v446, %v448
        %v526 = vcombine.low %v517, %v519
        %v528 = vunpack.c.l.s4 1983009808
        %v529 = vunpack.c.0.s8 %v528
        %v530 = vlaneseq
        %v531 = vshrl.u32 %v530, 7
        %v532 = vsub.s32 %v529, %v531
        %v533 = vrot.slane %v525, %v532
        %v535 = vunpack.c.l.s4 1983009808
        %v536 = vunpack.c.0.s8 %v535
        %v537 = vlaneseq
        %v538 = vshrl.u32 %v537, 7
        %v539 = vsub.s32 %v536, %v538
        %v540 = vrot.slane %v526, %v539
        %v541 = vcombine.low %v533, %v540
        %543 = vst [vmem:[#allocation2] sm:$0xff] %v541
        %v544 = vld [vmem:[#allocation2] sm:$0xff]
        %s545 = scalar_lea.vmem [#allocation8], 512
        %v546 = vld [vmem:[%s545] sm:$0xff]
        %v547 = vld [vmem:[%s545 + $0x8] sm:$0xff]
        %v548 = vld [vmem:[%s545 + $0x10] sm:$0xff]
        %v549 = vld [vmem:[%s545 + $0x18] sm:$0xff]
        %v550 = vld [vmem:[%s545 + $0x20] sm:$0xff]
        %v551 = vld [vmem:[%s545 + $0x28] sm:$0xff]
        %v552 = vld [vmem:[%s545 + $0x30] sm:$0xff]
        %v553 = vld [vmem:[%s545 + $0x38] sm:$0xff]
        %v554 = vld [vmem:[%s545 + $0x40] sm:$0xff]
        %v555 = vld [vmem:[%s545 + $0x48] sm:$0xff]
        %v556 = vld [vmem:[%s545 + $0x50] sm:$0xff]
        %v557 = vld [vmem:[%s545 + $0x58] sm:$0xff]
        %v558 = vld [vmem:[%s545 + $0x60] sm:$0xff]
        %v559 = vld [vmem:[%s545 + $0x68] sm:$0xff]
        %v560 = vld [vmem:[%s545 + $0x70] sm:$0xff]
        %v561 = vld [vmem:[%s545 + $0x78] sm:$0xff]
        %v562 = vld [vmem:[%s545 + $0x80] sm:$0xff]
        %v563 = vld [vmem:[%s545 + $0x88] sm:$0xff]
        %v564 = vld [vmem:[%s545 + $0x90] sm:$0xff]
        %v565 = vld [vmem:[%s545 + $0x98] sm:$0xff]
        %v566 = vld [vmem:[%s545 + $0xa0] sm:$0xff]
        %v567 = vld [vmem:[%s545 + $0xa8] sm:$0xff]
        %v568 = vld [vmem:[%s545 + $0xb0] sm:$0xff]
        %v569 = vld [vmem:[%s545 + $0xb8] sm:$0xff]
        %v570 = vld [vmem:[%s545 + $0xc0] sm:$0xff]
        %v571 = vld [vmem:[%s545 + $0xc8] sm:$0xff]
        %v572 = vld [vmem:[%s545 + $0xd0] sm:$0xff]
        %v573 = vld [vmem:[%s545 + $0xd8] sm:$0xff]
        %v574 = vld [vmem:[%s545 + $0xe0] sm:$0xff]
        %v575 = vld [vmem:[%s545 + $0xe8] sm:$0xff]
        %v576 = vld [vmem:[%s545 + $0xf0] sm:$0xff]
        %v577 = vld [vmem:[%s545 + $0xf8] sm:$0xff]
        %v578 = vld [vmem:[%s545 + $0x100] sm:$0xff]
        %v579 = vld [vmem:[%s545 + $0x108] sm:$0xff]
        %v580 = vld [vmem:[%s545 + $0x110] sm:$0xff]
        %v581 = vld [vmem:[%s545 + $0x118] sm:$0xff]
        %v582 = vld [vmem:[%s545 + $0x120] sm:$0xff]
        %v583 = vld [vmem:[%s545 + $0x128] sm:$0xff]
        %v584 = vld [vmem:[%s545 + $0x130] sm:$0xff]
        %v585 = vld [vmem:[%s545 + $0x138] sm:$0xff]
        %v586 = vld [vmem:[%s545 + $0x140] sm:$0xff]
        %v587 = vld [vmem:[%s545 + $0x148] sm:$0xff]
        %v588 = vld [vmem:[%s545 + $0x150] sm:$0xff]
        %v589 = vld [vmem:[%s545 + $0x158] sm:$0xff]
        %v590 = vld [vmem:[%s545 + $0x160] sm:$0xff]
        %v591 = vld [vmem:[%s545 + $0x168] sm:$0xff]
        %v592 = vld [vmem:[%s545 + $0x170] sm:$0xff]
        %v593 = vld [vmem:[%s545 + $0x178] sm:$0xff]
        %v594 = vld [vmem:[%s545 + $0x180] sm:$0xff]
        %v595 = vld [vmem:[%s545 + $0x188] sm:$0xff]
        %v596 = vld [vmem:[%s545 + $0x190] sm:$0xff]
        %v597 = vld [vmem:[%s545 + $0x198] sm:$0xff]
        %v598 = vld [vmem:[%s545 + $0x1a0] sm:$0xff]
        %v599 = vld [vmem:[%s545 + $0x1a8] sm:$0xff]
        %v600 = vld [vmem:[%s545 + $0x1b0] sm:$0xff]
        %v601 = vld [vmem:[%s545 + $0x1b8] sm:$0xff]
        %v602 = vld [vmem:[%s545 + $0x1c0] sm:$0xff]
        %v603 = vld [vmem:[%s545 + $0x1c8] sm:$0xff]
        %v604 = vld [vmem:[%s545 + $0x1d0] sm:$0xff]
        %v605 = vld [vmem:[%s545 + $0x1d8] sm:$0xff]
        %v606 = vld [vmem:[%s545 + $0x1e0] sm:$0xff]
        %v607 = vld [vmem:[%s545 + $0x1e8] sm:$0xff]
        %v608 = vld [vmem:[%s545 + $0x1f0] sm:$0xff]
        %v609 = vld [vmem:[%s545 + $0x1f8] sm:$0xff]
        %v610 = vlaneseq
        %v611 = vshrl.u32 %v610, 7
        %v612 = vsub.s32 1, %v611
        %v613 = vrot.slane %v299, %v612
        %v614 = vlaneseq
        %v615 = vshrl.u32 %v614, 7
        %v616 = vsub.s32 1, %v615
        %v617 = vrot.slane %v303, %v616
        %v618 = vsel %vm376, %v617, %v613
        %620 = vmatprep.subr.mxu0 %v547
        %621 = vmatpush1.msra.mxu0 %v546
        %622 = vmatprep.subr.mxu0 %v551
        %623 = vmatpush1.msra.mxu0 %v550
        %624 = vmatprep.subr.mxu0 %v555
        %625 = vmatpush1.msra.mxu0 %v554
        %626 = vmatprep.subr.mxu0 %v559
        %627 = vmatpush1.msra.mxu0 %v558
        %628 = vmatprep.subr.mxu0 %v563
        %629 = vmatpush1.msra.mxu0 %v562
        %630 = vmatprep.subr.mxu0 %v567
        %631 = vmatpush1.msra.mxu0 %v566
        %632 = vmatprep.subr.mxu0 %v571
        %633 = vmatpush1.msra.mxu0 %v570
        %634 = vmatprep.subr.mxu0 %v575
        %635 = vmatpush1.msra.mxu0 %v574
        %636 = vmatprep.subr.mxu0 %v579
        %637 = vmatpush1.msra.mxu0 %v578
        %638 = vmatprep.subr.mxu0 %v583
        %639 = vmatpush1.msra.mxu0 %v582
        %640 = vmatprep.subr.mxu0 %v587
        %641 = vmatpush1.msra.mxu0 %v586
        %642 = vmatprep.subr.mxu0 %v591
        %643 = vmatpush1.msra.mxu0 %v590
        %644 = vmatprep.subr.mxu0 %v595
        %645 = vmatpush1.msra.mxu0 %v594
        %646 = vmatprep.subr.mxu0 %v599
        %647 = vmatpush1.msra.mxu0 %v598
        %648 = vmatprep.subr.mxu0 %v603
        %649 = vmatpush1.msra.mxu0 %v602
        %650 = vmatprep.subr.mxu0 %v607
        %651 = vmatpush1.msra.mxu0 %v606
        %652 = vmatprep.subr.mxu0 0.0
        %653 = vmatpush1.msra.mxu0 0.0
        %654 = vmatprep.subr.mxu0 0.0
        %655 = vmatpush1.msra.mxu0 0.0
        %656 = vmatprep.subr.mxu0 0.0
        %657 = vmatpush1.msra.mxu0 0.0
        %658 = vmatprep.subr.mxu0 0.0
        %659 = vmatpush1.msra.mxu0 0.0
        %660 = vmatprep.subr.mxu0 0.0
        %661 = vmatpush1.msra.mxu0 0.0
        %662 = vmatprep.subr.mxu0 0.0
        %663 = vmatpush1.msra.mxu0 0.0
        %664 = vmatprep.subr.mxu0 0.0
        %665 = vmatpush1.msra.mxu0 0.0
        %666 = vmatprep.subr.mxu0 0.0
        %667 = vmatpush1.msra.mxu0 0.0
        %668 = vmatprep.subr.mxu0 0.0
        %669 = vmatpush1.msra.mxu0 0.0
        %670 = vmatprep.subr.mxu0 0.0
        %671 = vmatpush1.msra.mxu0 0.0
        %672 = vmatprep.subr.mxu0 0.0
        %673 = vmatpush1.msra.mxu0 0.0
        %674 = vmatprep.subr.mxu0 0.0
        %675 = vmatpush1.msra.mxu0 0.0
        %676 = vmatprep.subr.mxu0 0.0
        %677 = vmatpush1.msra.mxu0 0.0
        %678 = vmatprep.subr.mxu0 0.0
        %679 = vmatpush1.msra.mxu0 0.0
        %680 = vmatprep.subr.mxu0 0.0
        %681 = vmatpush1.msra.mxu0 0.0
        %682 = vmatprep.subr.mxu0 0.0
        %683 = vmatpush1.msra.mxu0 0.0
        %684 = vmatprep.mubr.f32.mxu0 0.0
        %685 = vmatmul.mubr.f32.gmra.mrb[0].mxu0 %v618
        %v686 = vpop.f32.mrb[0].mxu0
        %v687 = vadd.f32 0.0, %v686
        %v688 = vpop.f32.mrb[0].mxu0
        %v689 = vadd.f32 0.0, %v688
        %690 = vdwg.mxu0
        %691 = vmatprep.subr.mxu0 %v549
        %692 = vmatpush1.msra.mxu0 %v548
        %693 = vmatprep.subr.mxu0 %v553
        %694 = vmatpush1.msra.mxu0 %v552
        %695 = vmatprep.subr.mxu0 %v557
        %696 = vmatpush1.msra.mxu0 %v556
        %697 = vmatprep.subr.mxu0 %v561
        %698 = vmatpush1.msra.mxu0 %v560
        %699 = vmatprep.subr.mxu0 %v565
        %700 = vmatpush1.msra.mxu0 %v564
        %701 = vmatprep.subr.mxu0 %v569
        %702 = vmatpush1.msra.mxu0 %v568
        %703 = vmatprep.subr.mxu0 %v573
        %704 = vmatpush1.msra.mxu0 %v572
        %705 = vmatprep.subr.mxu0 %v577
        %706 = vmatpush1.msra.mxu0 %v576
        %707 = vmatprep.subr.mxu0 %v581
        %708 = vmatpush1.msra.mxu0 %v580
        %709 = vmatprep.subr.mxu0 %v585
        %710 = vmatpush1.msra.mxu0 %v584
        %711 = vmatprep.subr.mxu0 %v589
        %712 = vmatpush1.msra.mxu0 %v588
        %713 = vmatprep.subr.mxu0 %v593
        %714 = vmatpush1.msra.mxu0 %v592
        %715 = vmatprep.subr.mxu0 %v597
        %716 = vmatpush1.msra.mxu0 %v596
        %717 = vmatprep.subr.mxu0 %v601
        %718 = vmatpush1.msra.mxu0 %v600
        %719 = vmatprep.subr.mxu0 %v605
        %720 = vmatpush1.msra.mxu0 %v604
        %721 = vmatprep.subr.mxu0 %v609
        %722 = vmatpush1.msra.mxu0 %v608
        %723 = vmatprep.subr.mxu0 0.0
        %724 = vmatpush1.msra.mxu0 0.0
        %725 = vmatprep.subr.mxu0 0.0
        %726 = vmatpush1.msra.mxu0 0.0
        %727 = vmatprep.subr.mxu0 0.0
        %728 = vmatpush1.msra.mxu0 0.0
        %729 = vmatprep.subr.mxu0 0.0
        %730 = vmatpush1.msra.mxu0 0.0
        %731 = vmatprep.subr.mxu0 0.0
        %732 = vmatpush1.msra.mxu0 0.0
        %733 = vmatprep.subr.mxu0 0.0
        %734 = vmatpush1.msra.mxu0 0.0
        %735 = vmatprep.subr.mxu0 0.0
        %736 = vmatpush1.msra.mxu0 0.0
        %737 = vmatprep.subr.mxu0 0.0
        %738 = vmatpush1.msra.mxu0 0.0
        %739 = vmatprep.subr.mxu0 0.0
        %740 = vmatpush1.msra.mxu0 0.0
        %741 = vmatprep.subr.mxu0 0.0
        %742 = vmatpush1.msra.mxu0 0.0
        %743 = vmatprep.subr.mxu0 0.0
        %744 = vmatpush1.msra.mxu0 0.0
        %745 = vmatprep.subr.mxu0 0.0
        %746 = vmatpush1.msra.mxu0 0.0
        %747 = vmatprep.subr.mxu0 0.0
        %748 = vmatpush1.msra.mxu0 0.0
        %749 = vmatprep.subr.mxu0 0.0
        %750 = vmatpush1.msra.mxu0 0.0
        %751 = vmatprep.subr.mxu0 0.0
        %752 = vmatpush1.msra.mxu0 0.0
        %753 = vmatprep.subr.mxu0 0.0
        %754 = vmatpush1.msra.mxu0 0.0
        %755 = vmatprep.mubr.f32.mxu0 0.0
        %756 = vmatmul.mubr.f32.gmra.mrb[0].mxu0 %v618
        %v757 = vpop.f32.mrb[0].mxu0
        %v758 = vadd.f32 0.0, %v757
        %v759 = vpop.f32.mrb[0].mxu0
        %v760 = vadd.f32 0.0, %v759
        %761 = vdwg.mxu0
        %v766 = vcombine.low %v687, %v689
        %v767 = vcombine.low %v758, %v760
        %v769 = vunpack.c.l.s4 1983009808
        %v770 = vunpack.c.0.s8 %v769
        %v771 = vlaneseq
        %v772 = vshrl.u32 %v771, 7
        %v773 = vsub.s32 %v770, %v772
        %v774 = vrot.slane %v766, %v773
        %v776 = vunpack.c.l.s4 1983009808
        %v777 = vunpack.c.0.s8 %v776
        %v778 = vlaneseq
        %v779 = vshrl.u32 %v778, 7
        %v780 = vsub.s32 %v777, %v779
        %v781 = vrot.slane %v767, %v780
        %v782 = vcombine.low %v774, %v781
        %v784 = vadd.f32 %v544, %v782
        %785 = vst [vmem:[#allocation2] sm:$0xff] %v784
        %v786 = vld [vmem:[#allocation2] sm:$0xff]
        %s787 = scalar_lea.vmem [#allocation8], 1024
        %v788 = vld [vmem:[%s787] sm:$0xff]
        %v789 = vld [vmem:[%s787 + $0x8] sm:$0xff]
        %v790 = vld [vmem:[%s787 + $0x10] sm:$0xff]
        %v791 = vld [vmem:[%s787 + $0x18] sm:$0xff]
        %v792 = vld [vmem:[%s787 + $0x20] sm:$0xff]
        %v793 = vld [vmem:[%s787 + $0x28] sm:$0xff]
        %v794 = vld [vmem:[%s787 + $0x30] sm:$0xff]
        %v795 = vld [vmem:[%s787 + $0x38] sm:$0xff]
        %v796 = vld [vmem:[%s787 + $0x40] sm:$0xff]
        %v797 = vld [vmem:[%s787 + $0x48] sm:$0xff]
        %v798 = vld [vmem:[%s787 + $0x50] sm:$0xff]
        %v799 = vld [vmem:[%s787 + $0x58] sm:$0xff]
        %v800 = vld [vmem:[%s787 + $0x60] sm:$0xff]
        %v801 = vld [vmem:[%s787 + $0x68] sm:$0xff]
        %v802 = vld [vmem:[%s787 + $0x70] sm:$0xff]
        %v803 = vld [vmem:[%s787 + $0x78] sm:$0xff]
        %v804 = vld [vmem:[%s787 + $0x80] sm:$0xff]
        %v805 = vld [vmem:[%s787 + $0x88] sm:$0xff]
        %v806 = vld [vmem:[%s787 + $0x90] sm:$0xff]
        %v807 = vld [vmem:[%s787 + $0x98] sm:$0xff]
        %v808 = vld [vmem:[%s787 + $0xa0] sm:$0xff]
        %v809 = vld [vmem:[%s787 + $0xa8] sm:$0xff]
        %v810 = vld [vmem:[%s787 + $0xb0] sm:$0xff]
        %v811 = vld [vmem:[%s787 + $0xb8] sm:$0xff]
        %v812 = vld [vmem:[%s787 + $0xc0] sm:$0xff]
        %v813 = vld [vmem:[%s787 + $0xc8] sm:$0xff]
        %v814 = vld [vmem:[%s787 + $0xd0] sm:$0xff]
        %v815 = vld [vmem:[%s787 + $0xd8] sm:$0xff]
        %v816 = vld [vmem:[%s787 + $0xe0] sm:$0xff]
        %v817 = vld [vmem:[%s787 + $0xe8] sm:$0xff]
        %v818 = vld [vmem:[%s787 + $0xf0] sm:$0xff]
        %v819 = vld [vmem:[%s787 + $0xf8] sm:$0xff]
        %v820 = vld [vmem:[%s787 + $0x100] sm:$0xff]
        %v821 = vld [vmem:[%s787 + $0x108] sm:$0xff]
        %v822 = vld [vmem:[%s787 + $0x110] sm:$0xff]
        %v823 = vld [vmem:[%s787 + $0x118] sm:$0xff]
        %v824 = vld [vmem:[%s787 + $0x120] sm:$0xff]
        %v825 = vld [vmem:[%s787 + $0x128] sm:$0xff]
        %v826 = vld [vmem:[%s787 + $0x130] sm:$0xff]
        %v827 = vld [vmem:[%s787 + $0x138] sm:$0xff]
        %v828 = vld [vmem:[%s787 + $0x140] sm:$0xff]
        %v829 = vld [vmem:[%s787 + $0x148] sm:$0xff]
        %v830 = vld [vmem:[%s787 + $0x150] sm:$0xff]
        %v831 = vld [vmem:[%s787 + $0x158] sm:$0xff]
        %v832 = vld [vmem:[%s787 + $0x160] sm:$0xff]
        %v833 = vld [vmem:[%s787 + $0x168] sm:$0xff]
        %v834 = vld [vmem:[%s787 + $0x170] sm:$0xff]
        %v835 = vld [vmem:[%s787 + $0x178] sm:$0xff]
        %v836 = vld [vmem:[%s787 + $0x180] sm:$0xff]
        %v837 = vld [vmem:[%s787 + $0x188] sm:$0xff]
        %v838 = vld [vmem:[%s787 + $0x190] sm:$0xff]
        %v839 = vld [vmem:[%s787 + $0x198] sm:$0xff]
        %v840 = vld [vmem:[%s787 + $0x1a0] sm:$0xff]
        %v841 = vld [vmem:[%s787 + $0x1a8] sm:$0xff]
        %v842 = vld [vmem:[%s787 + $0x1b0] sm:$0xff]
        %v843 = vld [vmem:[%s787 + $0x1b8] sm:$0xff]
        %v844 = vld [vmem:[%s787 + $0x1c0] sm:$0xff]
        %v845 = vld [vmem:[%s787 + $0x1c8] sm:$0xff]
        %v846 = vld [vmem:[%s787 + $0x1d0] sm:$0xff]
        %v847 = vld [vmem:[%s787 + $0x1d8] sm:$0xff]
        %v848 = vld [vmem:[%s787 + $0x1e0] sm:$0xff]
        %v849 = vld [vmem:[%s787 + $0x1e8] sm:$0xff]
        %v850 = vld [vmem:[%s787 + $0x1f0] sm:$0xff]
        %v851 = vld [vmem:[%s787 + $0x1f8] sm:$0xff]
        %v852 = vlaneseq
        %v853 = vshrl.u32 %v852, 7
        %v854 = vsub.s32 2, %v853
        %v855 = vrot.slane %v299, %v854
        %v856 = vlaneseq
        %v857 = vshrl.u32 %v856, 7
        %v858 = vsub.s32 2, %v857
        %v859 = vrot.slane %v303, %v858
        %v860 = vsel %vm376, %v859, %v855
        %862 = vmatprep.subr.mxu0 %v789
        %863 = vmatpush1.msra.mxu0 %v788
        %864 = vmatprep.subr.mxu0 %v793
        %865 = vmatpush1.msra.mxu0 %v792
        %866 = vmatprep.subr.mxu0 %v797
        %867 = vmatpush1.msra.mxu0 %v796
        %868 = vmatprep.subr.mxu0 %v801
        %869 = vmatpush1.msra.mxu0 %v800
        %870 = vmatprep.subr.mxu0 %v805
        %871 = vmatpush1.msra.mxu0 %v804
        %872 = vmatprep.subr.mxu0 %v809
        %873 = vmatpush1.msra.mxu0 %v808
        %874 = vmatprep.subr.mxu0 %v813
        %875 = vmatpush1.msra.mxu0 %v812
        %876 = vmatprep.subr.mxu0 %v817
        %877 = vmatpush1.msra.mxu0 %v816
        %878 = vmatprep.subr.mxu0 %v821
        %879 = vmatpush1.msra.mxu0 %v820
        %880 = vmatprep.subr.mxu0 %v825
        %881 = vmatpush1.msra.mxu0 %v824
        %882 = vmatprep.subr.mxu0 %v829
        %883 = vmatpush1.msra.mxu0 %v828
        %884 = vmatprep.subr.mxu0 %v833
        %885 = vmatpush1.msra.mxu0 %v832
        %886 = vmatprep.subr.mxu0 %v837
        %887 = vmatpush1.msra.mxu0 %v836
        %888 = vmatprep.subr.mxu0 %v841
        %889 = vmatpush1.msra.mxu0 %v840
        %890 = vmatprep.subr.mxu0 %v845
        %891 = vmatpush1.msra.mxu0 %v844
        %892 = vmatprep.subr.mxu0 %v849
        %893 = vmatpush1.msra.mxu0 %v848
        %894 = vmatprep.subr.mxu0 0.0
        %895 = vmatpush1.msra.mxu0 0.0
        %896 = vmatprep.subr.mxu0 0.0
        %897 = vmatpush1.msra.mxu0 0.0
        %898 = vmatprep.subr.mxu0 0.0
        %899 = vmatpush1.msra.mxu0 0.0
        %900 = vmatprep.subr.mxu0 0.0
        %901 = vmatpush1.msra.mxu0 0.0
        %902 = vmatprep.subr.mxu0 0.0
        %903 = vmatpush1.msra.mxu0 0.0
        %904 = vmatprep.subr.mxu0 0.0
        %905 = vmatpush1.msra.mxu0 0.0
        %906 = vmatprep.subr.mxu0 0.0
        %907 = vmatpush1.msra.mxu0 0.0
        %908 = vmatprep.subr.mxu0 0.0
        %909 = vmatpush1.msra.mxu0 0.0
        %910 = vmatprep.subr.mxu0 0.0
        %911 = vmatpush1.msra.mxu0 0.0
        %912 = vmatprep.subr.mxu0 0.0
        %913 = vmatpush1.msra.mxu0 0.0
        %914 = vmatprep.subr.mxu0 0.0
        %915 = vmatpush1.msra.mxu0 0.0
        %916 = vmatprep.subr.mxu0 0.0
        %917 = vmatpush1.msra.mxu0 0.0
        %918 = vmatprep.subr.mxu0 0.0
        %919 = vmatpush1.msra.mxu0 0.0
        %920 = vmatprep.subr.mxu0 0.0
        %921 = vmatpush1.msra.mxu0 0.0
        %922 = vmatprep.subr.mxu0 0.0
        %923 = vmatpush1.msra.mxu0 0.0
        %924 = vmatprep.subr.mxu0 0.0
        %925 = vmatpush1.msra.mxu0 0.0
        %926 = vmatprep.mubr.f32.mxu0 0.0
        %927 = vmatmul.mubr.f32.gmra.mrb[0].mxu0 %v860
        %v928 = vpop.f32.mrb[0].mxu0
        %v929 = vadd.f32 0.0, %v928
        %v930 = vpop.f32.mrb[0].mxu0
        %v931 = vadd.f32 0.0, %v930
        %932 = vdwg.mxu0
        %933 = vmatprep.subr.mxu0 %v791
        %934 = vmatpush1.msra.mxu0 %v790
        %935 = vmatprep.subr.mxu0 %v795
        %936 = vmatpush1.msra.mxu0 %v794
        %937 = vmatprep.subr.mxu0 %v799
        %938 = vmatpush1.msra.mxu0 %v798
        %939 = vmatprep.subr.mxu0 %v803
        %940 = vmatpush1.msra.mxu0 %v802
        %941 = vmatprep.subr.mxu0 %v807
        %942 = vmatpush1.msra.mxu0 %v806
        %943 = vmatprep.subr.mxu0 %v811
        %944 = vmatpush1.msra.mxu0 %v810
        %945 = vmatprep.subr.mxu0 %v815
        %946 = vmatpush1.msra.mxu0 %v814
        %947 = vmatprep.subr.mxu0 %v819
        %948 = vmatpush1.msra.mxu0 %v818
        %949 = vmatprep.subr.mxu0 %v823
        %950 = vmatpush1.msra.mxu0 %v822
        %951 = vmatprep.subr.mxu0 %v827
        %952 = vmatpush1.msra.mxu0 %v826
        %953 = vmatprep.subr.mxu0 %v831
        %954 = vmatpush1.msra.mxu0 %v830
        %955 = vmatprep.subr.mxu0 %v835
        %956 = vmatpush1.msra.mxu0 %v834
        %957 = vmatprep.subr.mxu0 %v839
        %958 = vmatpush1.msra.mxu0 %v838
        %959 = vmatprep.subr.mxu0 %v843
        %960 = vmatpush1.msra.mxu0 %v842
        %961 = vmatprep.subr.mxu0 %v847
        %962 = vmatpush1.msra.mxu0 %v846
        %963 = vmatprep.subr.mxu0 %v851
        %964 = vmatpush1.msra.mxu0 %v850
        %965 = vmatprep.subr.mxu0 0.0
        %966 = vmatpush1.msra.mxu0 0.0
        %967 = vmatprep.subr.mxu0 0.0
        %968 = vmatpush1.msra.mxu0 0.0
        %969 = vmatprep.subr.mxu0 0.0
        %970 = vmatpush1.msra.mxu0 0.0
        %971 = vmatprep.subr.mxu0 0.0
        %972 = vmatpush1.msra.mxu0 0.0
        %973 = vmatprep.subr.mxu0 0.0
        %974 = vmatpush1.msra.mxu0 0.0
        %975 = vmatprep.subr.mxu0 0.0
        %976 = vmatpush1.msra.mxu0 0.0
        %977 = vmatprep.subr.mxu0 0.0
        %978 = vmatpush1.msra.mxu0 0.0
        %979 = vmatprep.subr.mxu0 0.0
        %980 = vmatpush1.msra.mxu0 0.0
        %981 = vmatprep.subr.mxu0 0.0
        %982 = vmatpush1.msra.mxu0 0.0
        %983 = vmatprep.subr.mxu0 0.0
        %984 = vmatpush1.msra.mxu0 0.0
        %985 = vmatprep.subr.mxu0 0.0
        %986 = vmatpush1.msra.mxu0 0.0
        %987 = vmatprep.subr.mxu0 0.0
        %988 = vmatpush1.msra.mxu0 0.0
        %989 = vmatprep.subr.mxu0 0.0
        %990 = vmatpush1.msra.mxu0 0.0
        %991 = vmatprep.subr.mxu0 0.0
        %992 = vmatpush1.msra.mxu0 0.0
        %993 = vmatprep.subr.mxu0 0.0
        %994 = vmatpush1.msra.mxu0 0.0
        %995 = vmatprep.subr.mxu0 0.0
        %996 = vmatpush1.msra.mxu0 0.0
        %997 = vmatprep.mubr.f32.mxu0 0.0
        %998 = vmatmul.mubr.f32.gmra.mrb[0].mxu0 %v860
        %v999 = vpop.f32.mrb[0].mxu0
        %v1000 = vadd.f32 0.0, %v999
        %v1001 = vpop.f32.mrb[0].mxu0
        %v1002 = vadd.f32 0.0, %v1001
        %1003 = vdwg.mxu0
        %v1008 = vcombine.low %v929, %v931
        %v1009 = vcombine.low %v1000, %v1002
        %v1011 = vunpack.c.l.s4 1983009808
        %v1012 = vunpack.c.0.s8 %v1011
        %v1013 = vlaneseq
        %v1014 = vshrl.u32 %v1013, 7
        %v1015 = vsub.s32 %v1012, %v1014
        %v1016 = vrot.slane %v1008, %v1015
        %v1018 = vunpack.c.l.s4 1983009808
        %v1019 = vunpack.c.0.s8 %v1018
        %v1020 = vlaneseq
        %v1021 = vshrl.u32 %v1020, 7
        %v1022 = vsub.s32 %v1019, %v1021
        %v1023 = vrot.slane %v1009, %v1022
        %v1024 = vcombine.low %v1016, %v1023
        %v1026 = vadd.f32 %v786, %v1024
        %1027 = vst [vmem:[#allocation2] sm:$0xff] %v1026
        %v1028 = vld [vmem:[#allocation2] sm:$0xff]
        %s1029 = scalar_lea.vmem [#allocation8], 1536
        %v1030 = vld [vmem:[%s1029] sm:$0xff]
        %v1031 = vld [vmem:[%s1029 + $0x8] sm:$0xff]
        %v1032 = vld [vmem:[%s1029 + $0x10] sm:$0xff]
        %v1033 = vld [vmem:[%s1029 + $0x18] sm:$0xff]
        %v1034 = vld [vmem:[%s1029 + $0x20] sm:$0xff]
        %v1035 = vld [vmem:[%s1029 + $0x28] sm:$0xff]
        %v1036 = vld [vmem:[%s1029 + $0x30] sm:$0xff]
        %v1037 = vld [vmem:[%s1029 + $0x38] sm:$0xff]
        %v1038 = vld [vmem:[%s1029 + $0x40] sm:$0xff]
        %v1039 = vld [vmem:[%s1029 + $0x48] sm:$0xff]
        %v1040 = vld [vmem:[%s1029 + $0x50] sm:$0xff]
        %v1041 = vld [vmem:[%s1029 + $0x58] sm:$0xff]
        %v1042 = vld [vmem:[%s1029 + $0x60] sm:$0xff]
        %v1043 = vld [vmem:[%s1029 + $0x68] sm:$0xff]
        %v1044 = vld [vmem:[%s1029 + $0x70] sm:$0xff]
        %v1045 = vld [vmem:[%s1029 + $0x78] sm:$0xff]
        %v1046 = vld [vmem:[%s1029 + $0x80] sm:$0xff]
        %v1047 = vld [vmem:[%s1029 + $0x88] sm:$0xff]
        %v1048 = vld [vmem:[%s1029 + $0x90] sm:$0xff]
        %v1049 = vld [vmem:[%s1029 + $0x98] sm:$0xff]
        %v1050 = vld [vmem:[%s1029 + $0xa0] sm:$0xff]
        %v1051 = vld [vmem:[%s1029 + $0xa8] sm:$0xff]
        %v1052 = vld [vmem:[%s1029 + $0xb0] sm:$0xff]
        %v1053 = vld [vmem:[%s1029 + $0xb8] sm:$0xff]
        %v1054 = vld [vmem:[%s1029 + $0xc0] sm:$0xff]
        %v1055 = vld [vmem:[%s1029 + $0xc8] sm:$0xff]
        %v1056 = vld [vmem:[%s1029 + $0xd0] sm:$0xff]
        %v1057 = vld [vmem:[%s1029 + $0xd8] sm:$0xff]
        %v1058 = vld [vmem:[%s1029 + $0xe0] sm:$0xff]
        %v1059 = vld [vmem:[%s1029 + $0xe8] sm:$0xff]
        %v1060 = vld [vmem:[%s1029 + $0xf0] sm:$0xff]
        %v1061 = vld [vmem:[%s1029 + $0xf8] sm:$0xff]
        %v1062 = vld [vmem:[%s1029 + $0x100] sm:$0xff]
        %v1063 = vld [vmem:[%s1029 + $0x108] sm:$0xff]
        %v1064 = vld [vmem:[%s1029 + $0x110] sm:$0xff]
        %v1065 = vld [vmem:[%s1029 + $0x118] sm:$0xff]
        %v1066 = vld [vmem:[%s1029 + $0x120] sm:$0xff]
        %v1067 = vld [vmem:[%s1029 + $0x128] sm:$0xff]
        %v1068 = vld [vmem:[%s1029 + $0x130] sm:$0xff]
        %v1069 = vld [vmem:[%s1029 + $0x138] sm:$0xff]
        %v1070 = vld [vmem:[%s1029 + $0x140] sm:$0xff]
        %v1071 = vld [vmem:[%s1029 + $0x148] sm:$0xff]
        %v1072 = vld [vmem:[%s1029 + $0x150] sm:$0xff]
        %v1073 = vld [vmem:[%s1029 + $0x158] sm:$0xff]
        %v1074 = vld [vmem:[%s1029 + $0x160] sm:$0xff]
        %v1075 = vld [vmem:[%s1029 + $0x168] sm:$0xff]
        %v1076 = vld [vmem:[%s1029 + $0x170] sm:$0xff]
        %v1077 = vld [vmem:[%s1029 + $0x178] sm:$0xff]
        %v1078 = vld [vmem:[%s1029 + $0x180] sm:$0xff]
        %v1079 = vld [vmem:[%s1029 + $0x188] sm:$0xff]
        %v1080 = vld [vmem:[%s1029 + $0x190] sm:$0xff]
        %v1081 = vld [vmem:[%s1029 + $0x198] sm:$0xff]
        %v1082 = vld [vmem:[%s1029 + $0x1a0] sm:$0xff]
        %v1083 = vld [vmem:[%s1029 + $0x1a8] sm:$0xff]
        %v1084 = vld [vmem:[%s1029 + $0x1b0] sm:$0xff]
        %v1085 = vld [vmem:[%s1029 + $0x1b8] sm:$0xff]
        %v1086 = vld [vmem:[%s1029 + $0x1c0] sm:$0xff]
        %v1087 = vld [vmem:[%s1029 + $0x1c8] sm:$0xff]
        %v1088 = vld [vmem:[%s1029 + $0x1d0] sm:$0xff]
        %v1089 = vld [vmem:[%s1029 + $0x1d8] sm:$0xff]
        %v1090 = vld [vmem:[%s1029 + $0x1e0] sm:$0xff]
        %v1091 = vld [vmem:[%s1029 + $0x1e8] sm:$0xff]
        %v1092 = vld [vmem:[%s1029 + $0x1f0] sm:$0xff]
        %v1093 = vld [vmem:[%s1029 + $0x1f8] sm:$0xff]
        %v1094 = vlaneseq
        %v1095 = vshrl.u32 %v1094, 7
        %v1096 = vsub.s32 3, %v1095
        %v1097 = vrot.slane %v299, %v1096
        %v1098 = vlaneseq
        %v1099 = vshrl.u32 %v1098, 7
        %v1100 = vsub.s32 3, %v1099
        %v1101 = vrot.slane %v303, %v1100
        %v1102 = vsel %vm376, %v1101, %v1097
        %1104 = vmatprep.subr.mxu0 %v1031
        %1105 = vmatpush1.msra.mxu0 %v1030
        %1106 = vmatprep.subr.mxu0 %v1035
        %1107 = vmatpush1.msra.mxu0 %v1034
        %1108 = vmatprep.subr.mxu0 %v1039
        %1109 = vmatpush1.msra.mxu0 %v1038
        %1110 = vmatprep.subr.mxu0 %v1043
        %1111 = vmatpush1.msra.mxu0 %v1042
        %1112 = vmatprep.subr.mxu0 %v1047
        %1113 = vmatpush1.msra.mxu0 %v1046
        %1114 = vmatprep.subr.mxu0 %v1051
        %1115 = vmatpush1.msra.mxu0 %v1050
        %1116 = vmatprep.subr.mxu0 %v1055
        %1117 = vmatpush1.msra.mxu0 %v1054
        %1118 = vmatprep.subr.mxu0 %v1059
        %1119 = vmatpush1.msra.mxu0 %v1058
        %1120 = vmatprep.subr.mxu0 %v1063
        %1121 = vmatpush1.msra.mxu0 %v1062
        %1122 = vmatprep.subr.mxu0 %v1067
        %1123 = vmatpush1.msra.mxu0 %v1066
        %1124 = vmatprep.subr.mxu0 %v1071
        %1125 = vmatpush1.msra.mxu0 %v1070
        %1126 = vmatprep.subr.mxu0 %v1075
        %1127 = vmatpush1.msra.mxu0 %v1074
        %1128 = vmatprep.subr.mxu0 %v1079
        %1129 = vmatpush1.msra.mxu0 %v1078
        %1130 = vmatprep.subr.mxu0 %v1083
        %1131 = vmatpush1.msra.mxu0 %v1082
        %1132 = vmatprep.subr.mxu0 %v1087
        %1133 = vmatpush1.msra.mxu0 %v1086
        %1134 = vmatprep.subr.mxu0 %v1091
        %1135 = vmatpush1.msra.mxu0 %v1090
        %1136 = vmatprep.subr.mxu0 0.0
        %1137 = vmatpush1.msra.mxu0 0.0
        %1138 = vmatprep.subr.mxu0 0.0
        %1139 = vmatpush1.msra.mxu0 0.0
        %1140 = vmatprep.subr.mxu0 0.0
        %1141 = vmatpush1.msra.mxu0 0.0
        %1142 = vmatprep.subr.mxu0 0.0
        %1143 = vmatpush1.msra.mxu0 0.0
        %1144 = vmatprep.subr.mxu0 0.0
        %1145 = vmatpush1.msra.mxu0 0.0
        %1146 = vmatprep.subr.mxu0 0.0
        %1147 = vmatpush1.msra.mxu0 0.0
        %1148 = vmatprep.subr.mxu0 0.0
        %1149 = vmatpush1.msra.mxu0 0.0
        %1150 = vmatprep.subr.mxu0 0.0
        %1151 = vmatpush1.msra.mxu0 0.0
        %1152 = vmatprep.subr.mxu0 0.0
        %1153 = vmatpush1.msra.mxu0 0.0
        %1154 = vmatprep.subr.mxu0 0.0
        %1155 = vmatpush1.msra.mxu0 0.0
        %1156 = vmatprep.subr.mxu0 0.0
        %1157 = vmatpush1.msra.mxu0 0.0
        %1158 = vmatprep.subr.mxu0 0.0
        %1159 = vmatpush1.msra.mxu0 0.0
        %1160 = vmatprep.subr.mxu0 0.0
        %1161 = vmatpush1.msra.mxu0 0.0
        %1162 = vmatprep.subr.mxu0 0.0
        %1163 = vmatpush1.msra.mxu0 0.0
        %1164 = vmatprep.subr.mxu0 0.0
        %1165 = vmatpush1.msra.mxu0 0.0
        %1166 = vmatprep.subr.mxu0 0.0
        %1167 = vmatpush1.msra.mxu0 0.0
        %1168 = vmatprep.mubr.f32.mxu0 0.0
        %1169 = vmatmul.mubr.f32.gmra.mrb[0].mxu0 %v1102
        %v1170 = vpop.f32.mrb[0].mxu0
        %v1171 = vadd.f32 0.0, %v1170
        %v1172 = vpop.f32.mrb[0].mxu0
        %v1173 = vadd.f32 0.0, %v1172
        %1174 = vdwg.mxu0
        %1175 = vmatprep.subr.mxu0 %v1033
        %1176 = vmatpush1.msra.mxu0 %v1032
        %1177 = vmatprep.subr.mxu0 %v1037
        %1178 = vmatpush1.msra.mxu0 %v1036
        %1179 = vmatprep.subr.mxu0 %v1041
        %1180 = vmatpush1.msra.mxu0 %v1040
        %1181 = vmatprep.subr.mxu0 %v1045
        %1182 = vmatpush1.msra.mxu0 %v1044
        %1183 = vmatprep.subr.mxu0 %v1049
        %1184 = vmatpush1.msra.mxu0 %v1048
        %1185 = vmatprep.subr.mxu0 %v1053
        %1186 = vmatpush1.msra.mxu0 %v1052
        %1187 = vmatprep.subr.mxu0 %v1057
        %1188 = vmatpush1.msra.mxu0 %v1056
        %1189 = vmatprep.subr.mxu0 %v1061
        %1190 = vmatpush1.msra.mxu0 %v1060
        %1191 = vmatprep.subr.mxu0 %v1065
        %1192 = vmatpush1.msra.mxu0 %v1064
        %1193 = vmatprep.subr.mxu0 %v1069
        %1194 = vmatpush1.msra.mxu0 %v1068
        %1195 = vmatprep.subr.mxu0 %v1073
        %1196 = vmatpush1.msra.mxu0 %v1072
        %1197 = vmatprep.subr.mxu0 %v1077
        %1198 = vmatpush1.msra.mxu0 %v1076
        %1199 = vmatprep.subr.mxu0 %v1081
        %1200 = vmatpush1.msra.mxu0 %v1080
        %1201 = vmatprep.subr.mxu0 %v1085
        %1202 = vmatpush1.msra.mxu0 %v1084
        %1203 = vmatprep.subr.mxu0 %v1089
        %1204 = vmatpush1.msra.mxu0 %v1088
        %1205 = vmatprep.subr.mxu0 %v1093
        %1206 = vmatpush1.msra.mxu0 %v1092
        %1207 = vmatprep.subr.mxu0 0.0
        %1208 = vmatpush1.msra.mxu0 0.0
        %1209 = vmatprep.subr.mxu0 0.0
        %1210 = vmatpush1.msra.mxu0 0.0
        %1211 = vmatprep.subr.mxu0 0.0
        %1212 = vmatpush1.msra.mxu0 0.0
        %1213 = vmatprep.subr.mxu0 0.0
        %1214 = vmatpush1.msra.mxu0 0.0
        %1215 = vmatprep.subr.mxu0 0.0
        %1216 = vmatpush1.msra.mxu0 0.0
        %1217 = vmatprep.subr.mxu0 0.0
        %1218 = vmatpush1.msra.mxu0 0.0
        %1219 = vmatprep.subr.mxu0 0.0
        %1220 = vmatpush1.msra.mxu0 0.0
        %1221 = vmatprep.subr.mxu0 0.0
        %1222 = vmatpush1.msra.mxu0 0.0
        %1223 = vmatprep.subr.mxu0 0.0
        %1224 = vmatpush1.msra.mxu0 0.0
        %1225 = vmatprep.subr.mxu0 0.0
        %1226 = vmatpush1.msra.mxu0 0.0
        %1227 = vmatprep.subr.mxu0 0.0
        %1228 = vmatpush1.msra.mxu0 0.0
        %1229 = vmatprep.subr.mxu0 0.0
        %1230 = vmatpush1.msra.mxu0 0.0
        %1231 = vmatprep.subr.mxu0 0.0
        %1232 = vmatpush1.msra.mxu0 0.0
        %1233 = vmatprep.subr.mxu0 0.0
        %1234 = vmatpush1.msra.mxu0 0.0
        %1235 = vmatprep.subr.mxu0 0.0
        %1236 = vmatpush1.msra.mxu0 0.0
        %1237 = vmatprep.subr.mxu0 0.0
        %1238 = vmatpush1.msra.mxu0 0.0
        %1239 = vmatprep.mubr.f32.mxu0 0.0
        %1240 = vmatmul.mubr.f32.gmra.mrb[0].mxu0 %v1102
        %v1241 = vpop.f32.mrb[0].mxu0
        %v1242 = vadd.f32 0.0, %v1241
        %v1243 = vpop.f32.mrb[0].mxu0
        %v1244 = vadd.f32 0.0, %v1243
        %1245 = vdwg.mxu0
        %v1250 = vcombine.low %v1171, %v1173
        %v1251 = vcombine.low %v1242, %v1244
        %v1253 = vunpack.c.l.s4 1983009808
        %v1254 = vunpack.c.0.s8 %v1253
        %v1255 = vlaneseq
        %v1256 = vshrl.u32 %v1255, 7
        %v1257 = vsub.s32 %v1254, %v1256
        %v1258 = vrot.slane %v1250, %v1257
        %v1260 = vunpack.c.l.s4 1983009808
        %v1261 = vunpack.c.0.s8 %v1260
        %v1262 = vlaneseq
        %v1263 = vshrl.u32 %v1262, 7
        %v1264 = vsub.s32 %v1261, %v1263
        %v1265 = vrot.slane %v1251, %v1264
        %v1266 = vcombine.low %v1258, %v1265
        %v1268 = vadd.f32 %v1028, %v1266
        %1269 = vst [vmem:[#allocation2] sm:$0xff] %v1268
        %v1270 = vld [vmem:[#allocation2] sm:$0xff]
        %1271 = vst [vmem:[%s214] sm:$0xff] %v1270
        %s1272 = sand.u32 %s97, 1
        %s1273 = scalar_lea.sflag [#allocation5], %s1272
        %s1274 = sand.u32 %s97, 1
        %s1275 = smul.addr %s1274, 8
        %s1276 = scalar_lea.vmem [#allocation9], %s1275
        // Predicated region
        $region45: #{tpu_custom_call.1} parent=31 // pred_check
          %p1277 = pneg %p107
        $region46: #{tpu_custom_call.1} parent=31 // pred_check_branch
          %1279 = sbr.rel (%p1277) target = $region48
        $region47: #{tpu_custom_call.1} parent=31 // pred_region
          %s1281 = ssub.s32 128, 128
          %1282 = vsyncadd %s1273, %s1281
          %s1283 = smul.addr %s21, 4
          %s1284 = smul.addr %s1283, 32
          %s1285 = scalar_lea.hbm %s3, %s1284
          %s1287 = sshll.u32 %s1276, 4
          %s1288 = int_to_ptr.vmem [resolvable:$true] %s1287
          %1290 = dma.vmem_to_hbm [thread:$0]  %s1288, 128, %s1285, %s1273
        $region48: #{tpu_custom_call.1} parent=31 // pred_fallthru
          _
      $region32: #{tpu_custom_call.1} parent=5 // pred_fallthru
        _
      %p1291 = scmp.le.s32.totalorder 2, %s16
      // Predicated region
      $region49: #{tpu_custom_call.1} parent=5 // pred_check
        %p1292 = pneg %p1291
      $region50: #{tpu_custom_call.1} parent=5 // pred_check_branch
        %1294 = sbr.rel (%p1292) target = $region52
      $region51: #{tpu_custom_call.1} parent=5 // pred_region
        %s1295 = ssub.s32 %s16, 2
        // Predicated region
        $region53: #{tpu_custom_call.1} parent=51 // pred_check
          %p1296 = pneg %p113
        $region54: #{tpu_custom_call.1} parent=51 // pred_check_branch
          %1298 = sbr.rel (%p1296) target = $region56
        $region55: #{tpu_custom_call.1} parent=51 // pred_region
          %s1299 = sand.u32 %s98, 1
          %s1300 = scalar_lea.sflag [#allocation5], %s1299
          %s1301 = sand.u32 %s98, 1
          %s1302 = smul.addr %s1301, 8
          %s1303 = scalar_lea.vmem [#allocation9], %s1302
          %1304 = dma.done %s1300, 128
        $region56: #{tpu_custom_call.1} parent=51 // pred_fallthru
          _
      $region52: #{tpu_custom_call.1} parent=5 // pred_fallthru
        _
    $region6: #{tpu_custom_call.1} parent=1 // loop_footer
      %s20 = sadd.s32 1, %s16
    $region7: #{tpu_custom_call.1} parent=1 // loop_footer_branch
      %15 = sbr.rel target = $region3
    $region8: #{tpu_custom_call.1} parent=1 // loop_exit
      _
    %1305 = vsyncpa [#allocation4], 1
    %s1306 = scalar_lea.sflag [#allocation4], 1
    %1307 = vsyncpa %s1306, 1
    %1308 = vsyncpa [#allocation7], 1
    %1309 = vsyncpa [#allocation5], 1
    %s1310 = scalar_lea.sflag [#allocation5], 1
    %1311 = vsyncpa %s1310, 1

</llo_original>
